<compile_context>
chip_gen: v7x
topology: tpu7x:2x2x1
jax: 0.10.0
libtpu: 0.0.40
codegen_flags: <defaults>
</compile_context>

<pallas_src>
import numpy as np
import jax
import jax.numpy as jnp
from jax.experimental import pallas as pl
from jax.experimental.pallas import tpu as pltpu


# ----------------------- host-side constant / weight folding -----------------

def _col_shift_mats(w):
    """s[kx][w_in, w_out] = 1 iff w_in == w_out + kx - 1 (zero padding)."""
    s = np.zeros((3, w, w), np.float32)
    for kx in range(3):
        for wo in range(w):
            wi = wo + kx - 1
            if 0 <= wi < w:
                s[kx, wi, wo] = 1.0
    return s


def _pack_conv_dw(lp, w, c):
    """Fold one conv_dw block (dw3x3 + BN + ReLU6 + pw1x1 + BN + ReLU6) into
    packed-layout matrices.  BN scales folded into columns; biases tiled."""
    shifts = _col_shift_mats(w)
    dw_scale = np.tile(lp['dw_s'], w)
    pw_scale = np.tile(lp['pw_s'], w)
    dwm = []
    for ky in range(3):
        m = np.zeros((w * c, w * c), np.float32)
        for kx in range(3):
            m += np.kron(shifts[kx], np.diag(lp['dw_w'][ky, kx]))
        dwm.append(m * dw_scale[None, :])
    dwm_cat = np.concatenate(dwm, axis=0)                         # (3WC, WC)
    bd = np.kron(np.eye(w, dtype=np.float32), lp['pw_w']) * pw_scale[None, :]
    return dwm_cat, bd, np.tile(lp['dw_b'], w), np.tile(lp['pw_b'], w)


def _pool_row_mat(h):
    """Stacked row-selection for MaxPool2d(3, s=2, p=1): (3*h/2, h)."""
    ho = h // 2
    m = np.zeros((3 * ho, h), np.float32)
    for k in range(3):
        for i in range(ho):
            j = 2 * i + k - 1
            if 0 <= j < h:
                m[k * ho + i, j] = 1.0
    return m


def _pool_col_mat(w, c):
    """Stacked column-selection for the pool: (W*C, 3*(W/2)*C)."""
    wo = w // 2
    colw = np.zeros((3, w, wo), np.float32)
    for k in range(3):
        for jo in range(wo):
            ji = 2 * jo + k - 1
            if 0 <= ji < w:
                colw[k, ji, jo] = 1.0
    eye_c = np.eye(c, dtype=np.float32)
    return np.concatenate([np.kron(colw[k], eye_c) for k in range(3)], axis=1)


def _bilinear_matrix(out_size, in_size):
    """UpsamplingBilinear2d (align_corners=True) interpolation matrix."""
    m = np.zeros((out_size, in_size), np.float32)
    if in_size == 1 or out_size == 1:
        m[:, 0] = 1.0
        return m
    src = np.arange(out_size, dtype=np.float64) * (in_size - 1) / (out_size - 1)
    lo = np.clip(np.floor(src).astype(np.int64), 0, in_size - 1)
    hi = np.minimum(lo + 1, in_size - 1)
    frac = (src - lo).astype(np.float32)
    for i in range(out_size):
        m[i, lo[i]] += 1.0 - frac[i]
        m[i, hi[i]] += frac[i]
    return m


def _pad2(a, rows, cols):
    out = np.zeros((rows, cols), np.float32)
    out[:a.shape[0], :a.shape[1]] = a
    return out


def _pad_row(v, width):
    out = np.zeros((width,), np.float32)
    out[:v.shape[0]] = np.asarray(v, np.float32)
    return out


_LAYER_GROUPS = (
    ('first', 'trunk0', 'trunk1', 'last'),          # full resolution
    ('softmax1', 'skip1', 'softmax5'),              # 1/2 resolution
    ('softmax2', 'skip2', 'softmax4'),              # 1/4 resolution
    ('softmax3_0', 'softmax3_1'),                   # 1/8 resolution
)


def pack_params(params, h, w, c):
    """Fold everything into packed matrices.  Pure numpy; runs ONCE on host."""
    wc = w * c
    npp = {k: {kk: np.asarray(vv, np.float32) for kk, vv in v.items()}
           for k, v in params.items()}
    bf16 = lambda a: jnp.asarray(a, dtype=jnp.bfloat16)

    level_ops, bias_rows = [], []
    for lvl, names in enumerate(_LAYER_GROUPS):
        gw = w >> lvl
        dwms, bds = [], []
        for name in names:
            dwm_cat, bd, dwb, pwb = _pack_conv_dw(npp[name], gw, c)
            dwms.append(dwm_cat)
            bds.append(bd)
            bias_rows.append(_pad_row(dwb, wc))
            bias_rows.append(_pad_row(pwb, wc))
        level_ops += [bf16(np.stack(dwms)), bf16(np.stack(bds))]

    p6 = npp['softmax6']
    eye_w = np.eye(w, dtype=np.float32)
    bd6 = np.stack([np.kron(eye_w, p6['w1']) * np.tile(p6['bn2_s'], w)[None, :],
                    np.kron(eye_w, p6['w2'])])
    bias_rows += [np.tile(p6['bn1_s'], w), np.tile(p6['bn1_b'], w),
                  np.tile(p6['bn2_b'], w)]
    bias_slab = jnp.asarray(np.stack(bias_rows), jnp.float32)

    # pool matrices (levels 0->1, 1->2, 2->3), stacked + zero padded
    prow = np.stack([_pad2(_pool_row_mat(h >> l), 3 * (h // 2), h)
                     for l in range(3)])
    pcol = np.stack([_pad2(_pool_col_mat(w >> l, c), wc, 3 * (wc // 2))
                     for l in range(3)])

    # bilinear upsample matrices (levels 3->2, 2->1, 1->0), stacked + padded
    uh, uc = [], []
    for l in (3, 2, 1):
        hi, ho = h >> l, h >> (l - 1)
        wi, wo = w >> l, w >> (l - 1)
        uh.append(_pad2(_bilinear_matrix(ho, hi), h, h // 2))
        uc.append(_pad2(np.kron(_bilinear_matrix(wo, wi).T,
                                np.eye(c, dtype=np.float32)), wc // 2, wc))
    return tuple(level_ops) + (bf16(bd6), bias_slab, bf16(prow), bf16(pcol),
                               bf16(np.stack(uh)), bf16(np.stack(uc)))


# ------------------------------ fused kernel ---------------------------------

def _make_kernel(h, w, c):
    wc = w * c
    lvl_h = (h, h // 2, h // 4, h // 8)
    lvl_wc = (wc, wc // 2, wc // 4, wc // 8)
    n_layers = (4, 3, 3, 2)
    bias_off, off = [], 0
    for nl in n_layers:
        bias_off.append(off)
        off += 2 * nl
    sb6 = off                                            # softmax6 bias rows

    def mm(a, b):
        return jnp.dot(a.astype(jnp.bfloat16), b.astype(jnp.bfloat16),
                       preferred_element_type=jnp.float32)

    def kernel(x_ref,
               dwm16, bd16, dwm8, bd8, dwm4, bd4, dwm2, bd2,
               bd6, bias, prow, pcol, uh, uc,
               out_ref):
        dwm_refs = (dwm16, dwm8, dwm4, dwm2)
        bd_refs = (bd16, bd8, bd4, bd2)

        def conv_dw(v, lvl, layer):
            """dw3x3+BN+ReLU6 + pw1x1+BN+ReLU6 (BN scale pre-folded)."""
            hh, wcl = lvl_h[lvl], lvl_wc[lvl]
            zr = jnp.zeros((1, wcl), jnp.float32)
            up = jnp.concatenate([zr, v[:hh - 1, :]], axis=0)   # v[i-1]
            dn = jnp.concatenate([v[1:, :], zr], axis=0)        # v[i+1]
            stacked = jnp.concatenate([up, v, dn], axis=1)      # (hh, 3*wcl)
            b0 = bias_off[lvl] + 2 * layer
            acc = mm(stacked, dwm_refs[lvl][layer])             # one K=3*wcl dot
            hact = jnp.clip(acc + bias[b0:b0 + 1, :wcl], 0.0, 6.0)
            out = mm(hact, bd_refs[lvl][layer])                 # pointwise 1x1
            return jnp.clip(out + bias[b0 + 1:b0 + 2, :wcl], 0.0, 6.0)

        def maxpool(v, lvl):
            """MaxPool2d(3, stride=2, pad=1).  Exact as 0/1 selection matmuls
            because v >= 0 (ReLU6 output), so zero padding == -inf padding."""
            hh, ho = lvl_h[lvl], lvl_h[lvl + 1]
            wci, wco = lvl_wc[lvl], lvl_wc[lvl + 1]
            rr = mm(prow[lvl, :3 * ho, :hh], v)                 # (3ho, wci)
            r = jnp.maximum(jnp.maximum(rr[0:ho], rr[ho:2 * ho]),
                            rr[2 * ho:3 * ho])
            cc = mm(r, pcol[lvl, :wci, :3 * wco])               # (ho, 3wco)
            return jnp.maximum(jnp.maximum(cc[:, 0:wco], cc[:, wco:2 * wco]),
                               cc[:, 2 * wco:3 * wco])

        def upsample_add(v, skip, ui):
            """Bilinear (align_corners=True) upsample one level + residual."""
            src, dst = 3 - ui, 2 - ui
            hi, ho = lvl_h[src], lvl_h[dst]
            wci, wco = lvl_wc[src], lvl_wc[dst]
            return mm(mm(uh[ui, :ho, :hi], v), uc[ui, :wci, :wco]) + skip

        a = x_ref[0].astype(jnp.float32)                        # (h, w*c)

        x1 = conv_dw(a, 0, 0)                                   # first_residual
        trunk = conv_dw(conv_dw(x1, 0, 1), 0, 2)                # trunk_branches

        p1 = maxpool(x1, 0)                                     # (h/2, wc/2)
        s1 = conv_dw(p1, 1, 0)                                  # softmax1
        k1 = conv_dw(s1, 1, 1)                                  # skip1

        p2 = maxpool(s1, 1)                                     # (h/4, wc/4)
        s2 = conv_dw(p2, 2, 0)                                  # softmax2
        k2 = conv_dw(s2, 2, 1)                                  # skip2

        p3 = maxpool(s2, 2)                                     # (h/8, wc/8)
        s3 = conv_dw(conv_dw(p3, 3, 0), 3, 1)                   # softmax3

        o = upsample_add(s3, s2, 0) + k2
        s4 = conv_dw(o, 2, 2)                                   # softmax4
        o = upsample_add(s4, s1, 1) + k1
        s5 = conv_dw(o, 1, 2)                                   # softmax5
        i1 = upsample_add(s5, trunk, 2)

        # softmax6: BN-ReLU-1x1-BN-ReLU-1x1-Sigmoid, then (1 + mask) * trunk
        t6 = jnp.maximum(i1 * bias[sb6:sb6 + 1, :]
                         + bias[sb6 + 1:sb6 + 2, :], 0.0)
        t6 = mm(t6, bd6[0])                                     # bn2 scale folded
        t6 = jnp.maximum(t6 + bias[sb6 + 2:sb6 + 3, :], 0.0)
        t6 = mm(t6, bd6[1])
        sig = pl.reciprocal(1.0 + jnp.exp(-t6), approx=True)    # sigmoid (EUP)
        m = (1.0 + sig) * trunk

        out = conv_dw(m, 0, 3)                                  # last_blocks
        out_ref[0] = out.astype(out_ref.dtype)

    return kernel


# -------------------------------- forward ------------------------------------

def attention_module_stage1(x_nchw, ops):
    n, c, h, w = x_nchw.shape
    wc = w * c
    # lane-dense packing: NCHW -> NHWC -> (N, H, W*C)  (last dim = 128 here)
    x_packed = jnp.transpose(x_nchw, (0, 2, 3, 1)).reshape(n, h, wc)

    in_specs = [pl.BlockSpec((1, h, wc), lambda i: (i, 0, 0))]
    for op in ops:
        in_specs.append(
            pl.BlockSpec(op.shape, lambda i, _nd=op.ndim: (0,) * _nd))

    out_packed = pl.pallas_call(
        _make_kernel(h, w, c),
        out_shape=jax.ShapeDtypeStruct((n, h, wc), x_nchw.dtype),
        grid=(n,),
        in_specs=in_specs,
        out_specs=pl.BlockSpec((1, h, wc), lambda i: (i, 0, 0)),
        compiler_params=pltpu.CompilerParams(
            dimension_semantics=("parallel",)),
    )(x_packed, *ops)

    return jnp.transpose(out_packed.reshape(n, h, w, c), (0, 3, 1, 2))


# ------------------------------ parameters ------------------------------------

def _fold_bn(gamma, beta, mean, var, eps=1e-5):
    scale = gamma / jnp.sqrt(var + eps)
    return scale, beta - mean * scale


def init_params(key, c):
    keys = iter(jax.random.split(key, 160))

    def bn(n):
        g = 1.0 + 0.1 * jax.random.normal(next(keys), (n,), jnp.float32)
        b = 0.1 * jax.random.normal(next(keys), (n,), jnp.float32)
        m = 0.1 * jax.random.normal(next(keys), (n,), jnp.float32)
        v = jax.random.uniform(next(keys), (n,), jnp.float32, 0.5, 1.5)
        return _fold_bn(g, b, m, v)

    def conv_dw_p():
        dw_w = 0.3 * jax.random.normal(next(keys), (3, 3, c), jnp.float32)
        dw_s, dw_b = bn(c)
        pw_w = jax.random.normal(next(keys), (c, c), jnp.float32) / np.sqrt(c)
        pw_s, pw_b = bn(c)
        return dict(dw_w=dw_w, dw_s=dw_s, dw_b=dw_b,
                    pw_w=pw_w, pw_s=pw_s, pw_b=pw_b)

    names = ['first', 'trunk0', 'trunk1', 'softmax1', 'skip1', 'softmax2',
             'skip2', 'softmax3_0', 'softmax3_1', 'softmax4', 'softmax5', 'last']
    params = {n: conv_dw_p() for n in names}

    bn1_s, bn1_b = bn(c)
    w1 = jax.random.normal(next(keys), (c, c), jnp.float32) / np.sqrt(c)
    bn2_s, bn2_b = bn(c)
    w2 = jax.random.normal(next(keys), (c, c), jnp.float32) / np.sqrt(c)
    params['softmax6'] = dict(bn1_s=bn1_s, bn1_b=bn1_b, w1=w1,
                              bn2_s=bn2_s, bn2_b=bn2_b, w2=w2)
    return params


# ---------------------------------- main --------------------------------------

if __name__ == "__main__":
    # 3 max-pools halve 16 -> 8 -> 4 -> 2, i.e. size1=(16,16), size2=(8,8),
    # size3=(4,4); in_channels = out_channels = 8 so W*C = 128 (lane dense).
    N, C, H, W = 2, 8, 16, 16
    x = jax.random.normal(jax.random.PRNGKey(0), (N, C, H, W), jnp.float32)
    params = init_params(jax.random.PRNGKey(42), C)

    # weight folding runs once on the host; only the kernel is jitted/executed
    ops = pack_params(params, H, W, C)

    fwd = jax.jit(attention_module_stage1)
    out = fwd(x, ops)
    jax.block_until_ready(out)
    assert out.shape == (N, C, H, W) and out.dtype == jnp.float32
    assert bool(jnp.all(jnp.isfinite(out)))
    print("KERNEL_OK")
</pallas_src>

<mosaic_0001>
module attributes {stable_mosaic.version = 11 : i64} {
  func.func @kernel(%arg0: i32, %arg1: memref<1x16x128xf32, #tpu.memory_space<vmem>>, %arg2: memref<4x384x128xbf16, #tpu.memory_space<vmem>>, %arg3: memref<4x128x128xbf16, #tpu.memory_space<vmem>>, %arg4: memref<3x192x64xbf16, #tpu.memory_space<vmem>>, %arg5: memref<3x64x64xbf16, #tpu.memory_space<vmem>>, %arg6: memref<3x96x32xbf16, #tpu.memory_space<vmem>>, %arg7: memref<3x32x32xbf16, #tpu.memory_space<vmem>>, %arg8: memref<2x48x16xbf16, #tpu.memory_space<vmem>>, %arg9: memref<2x16x16xbf16, #tpu.memory_space<vmem>>, %arg10: memref<2x128x128xbf16, #tpu.memory_space<vmem>>, %arg11: memref<27x128xf32, #tpu.memory_space<vmem>>, %arg12: memref<3x24x16xbf16, #tpu.memory_space<vmem>>, %arg13: memref<3x128x192xbf16, #tpu.memory_space<vmem>>, %arg14: memref<3x16x8xbf16, #tpu.memory_space<vmem>>, %arg15: memref<3x64x128xbf16, #tpu.memory_space<vmem>>, %arg16: memref<1x16x128xf32, #tpu.memory_space<vmem>>) attributes {dimension_semantics = [#tpu.dimension_semantics<parallel>], iteration_bounds = array<i64: 2>, scalar_prefetch = 0 : i64, scratch_operands = 0 : i64, tpu.core_type = #tpu.core_type<tc>, window_params = [{transform_indices = @transform_0, window_bounds = array<i64: 1, 16, 128>}, {pipeline_mode = #tpu.pipeline_mode<synchronous>, transform_indices = @transform_1, window_bounds = array<i64: 4, 384, 128>}, {pipeline_mode = #tpu.pipeline_mode<synchronous>, transform_indices = @transform_2, window_bounds = array<i64: 4, 128, 128>}, {pipeline_mode = #tpu.pipeline_mode<synchronous>, transform_indices = @transform_3, window_bounds = array<i64: 3, 192, 64>}, {pipeline_mode = #tpu.pipeline_mode<synchronous>, transform_indices = @transform_4, window_bounds = array<i64: 3, 64, 64>}, {pipeline_mode = #tpu.pipeline_mode<synchronous>, transform_indices = @transform_5, window_bounds = array<i64: 3, 96, 32>}, {pipeline_mode = #tpu.pipeline_mode<synchronous>, transform_indices = @transform_6, window_bounds = array<i64: 3, 32, 32>}, {pipeline_mode = #tpu.pipeline_mode<synchronous>, transform_indices = @transform_7, window_bounds = array<i64: 2, 48, 16>}, {pipeline_mode = #tpu.pipeline_mode<synchronous>, transform_indices = @transform_8, window_bounds = array<i64: 2, 16, 16>}, {pipeline_mode = #tpu.pipeline_mode<synchronous>, transform_indices = @transform_9, window_bounds = array<i64: 2, 128, 128>}, {pipeline_mode = #tpu.pipeline_mode<synchronous>, transform_indices = @transform_10, window_bounds = array<i64: 27, 128>}, {pipeline_mode = #tpu.pipeline_mode<synchronous>, transform_indices = @transform_11, window_bounds = array<i64: 3, 24, 16>}, {pipeline_mode = #tpu.pipeline_mode<synchronous>, transform_indices = @transform_12, window_bounds = array<i64: 3, 128, 192>}, {pipeline_mode = #tpu.pipeline_mode<synchronous>, transform_indices = @transform_13, window_bounds = array<i64: 3, 16, 8>}, {pipeline_mode = #tpu.pipeline_mode<synchronous>, transform_indices = @transform_14, window_bounds = array<i64: 3, 64, 128>}, {transform_indices = @transform_15, window_bounds = array<i64: 1, 16, 128>}]} {
    %c0 = arith.constant 0 : index
    %c0_0 = arith.constant 0 : index
    %c0_1 = arith.constant 0 : index
    %0 = vector.load %arg1[%c0, %c0_0, %c0_1] : memref<1x16x128xf32, #tpu.memory_space<vmem>>, vector<1x16x128xf32>
    %1 = vector.shape_cast %0 : vector<1x16x128xf32> to vector<16x128xf32>
    %cst = arith.constant 0.000000e+00 : f32
    %2 = vector.broadcast %cst : f32 to vector<1x128xf32>
    %3 = vector.extract_strided_slice %1 {offsets = [0, 0], sizes = [15, 128], strides = [1, 1]} : vector<16x128xf32> to vector<15x128xf32>
    %4 = tpu.concatenate %2, %3 in 0 : vector<1x128xf32>, vector<15x128xf32> -> vector<16x128xf32>
    %5 = vector.extract_strided_slice %1 {offsets = [1, 0], sizes = [15, 128], strides = [1, 1]} : vector<16x128xf32> to vector<15x128xf32>
    %6 = tpu.concatenate %5, %2 in 0 : vector<15x128xf32>, vector<1x128xf32> -> vector<16x128xf32>
    %7 = tpu.concatenate %4, %1, %6 in 1 : vector<16x128xf32>, vector<16x128xf32>, vector<16x128xf32> -> vector<16x384xf32>
    %c0_2 = arith.constant 0 : index
    %c0_3 = arith.constant 0 : index
    %c0_4 = arith.constant 0 : index
    %8 = vector.load %arg2[%c0_2, %c0_3, %c0_4] : memref<4x384x128xbf16, #tpu.memory_space<vmem>>, vector<1x384x128xbf16>
    %9 = vector.shape_cast %8 : vector<1x384x128xbf16> to vector<384x128xbf16>
    %10 = arith.truncf %7 : vector<16x384xf32> to vector<16x384xbf16>
    %cst_5 = arith.constant dense<0.000000e+00> : vector<16x128xf32>
    %11 = tpu.matmul %10, %9, %cst_5 {dimension_numbers = #tpu.dot_dimension_numbers<[1], [0], [0], [1], [0, 0, 1, 1], [], []>} : vector<16x384xbf16>, vector<384x128xbf16>, vector<16x128xf32> -> vector<16x128xf32>
    %c0_6 = arith.constant 0 : index
    %c0_7 = arith.constant 0 : index
    %12 = vector.load %arg11[%c0_6, %c0_7] : memref<27x128xf32, #tpu.memory_space<vmem>>, vector<1x128xf32>
    %13 = vector.broadcast %12 : vector<1x128xf32> to vector<16x128xf32>
    %14 = arith.addf %11, %13 : vector<16x128xf32>
    %cst_8 = arith.constant 0.000000e+00 : f32
    %cst_9 = arith.constant 6.000000e+00 : f32
    %15 = vector.broadcast %cst_8 : f32 to vector<16x128xf32>
    %16 = arith.maximumf %15, %14 : vector<16x128xf32>
    %17 = vector.broadcast %cst_9 : f32 to vector<16x128xf32>
    %18 = arith.minimumf %17, %16 : vector<16x128xf32>
    %c0_10 = arith.constant 0 : index
    %c0_11 = arith.constant 0 : index
    %c0_12 = arith.constant 0 : index
    %19 = vector.load %arg3[%c0_10, %c0_11, %c0_12] : memref<4x128x128xbf16, #tpu.memory_space<vmem>>, vector<1x128x128xbf16>
    %20 = vector.shape_cast %19 : vector<1x128x128xbf16> to vector<128x128xbf16>
    %21 = arith.truncf %18 : vector<16x128xf32> to vector<16x128xbf16>
    %cst_13 = arith.constant dense<0.000000e+00> : vector<16x128xf32>
    %22 = tpu.matmul %21, %20, %cst_13 {dimension_numbers = #tpu.dot_dimension_numbers<[1], [0], [0], [1], [0, 0, 1, 1], [], []>} : vector<16x128xbf16>, vector<128x128xbf16>, vector<16x128xf32> -> vector<16x128xf32>
    %c1 = arith.constant 1 : index
    %c0_14 = arith.constant 0 : index
    %23 = vector.load %arg11[%c1, %c0_14] : memref<27x128xf32, #tpu.memory_space<vmem>>, vector<1x128xf32>
    %24 = vector.broadcast %23 : vector<1x128xf32> to vector<16x128xf32>
    %25 = arith.addf %22, %24 : vector<16x128xf32>
    %cst_15 = arith.constant 0.000000e+00 : f32
    %cst_16 = arith.constant 6.000000e+00 : f32
    %26 = vector.broadcast %cst_15 : f32 to vector<16x128xf32>
    %27 = arith.maximumf %26, %25 : vector<16x128xf32>
    %28 = vector.broadcast %cst_16 : f32 to vector<16x128xf32>
    %29 = arith.minimumf %28, %27 : vector<16x128xf32>
    %cst_17 = arith.constant 0.000000e+00 : f32
    %30 = vector.broadcast %cst_17 : f32 to vector<1x128xf32>
    %31 = vector.extract_strided_slice %29 {offsets = [0, 0], sizes = [15, 128], strides = [1, 1]} : vector<16x128xf32> to vector<15x128xf32>
    %32 = tpu.concatenate %30, %31 in 0 : vector<1x128xf32>, vector<15x128xf32> -> vector<16x128xf32>
    %33 = vector.extract_strided_slice %29 {offsets = [1, 0], sizes = [15, 128], strides = [1, 1]} : vector<16x128xf32> to vector<15x128xf32>
    %34 = tpu.concatenate %33, %30 in 0 : vector<15x128xf32>, vector<1x128xf32> -> vector<16x128xf32>
    %35 = tpu.concatenate %32, %29, %34 in 1 : vector<16x128xf32>, vector<16x128xf32>, vector<16x128xf32> -> vector<16x384xf32>
    %c1_18 = arith.constant 1 : index
    %c0_19 = arith.constant 0 : index
    %c0_20 = arith.constant 0 : index
    %36 = vector.load %arg2[%c1_18, %c0_19, %c0_20] : memref<4x384x128xbf16, #tpu.memory_space<vmem>>, vector<1x384x128xbf16>
    %37 = vector.shape_cast %36 : vector<1x384x128xbf16> to vector<384x128xbf16>
    %38 = arith.truncf %35 : vector<16x384xf32> to vector<16x384xbf16>
    %cst_21 = arith.constant dense<0.000000e+00> : vector<16x128xf32>
    %39 = tpu.matmul %38, %37, %cst_21 {dimension_numbers = #tpu.dot_dimension_numbers<[1], [0], [0], [1], [0, 0, 1, 1], [], []>} : vector<16x384xbf16>, vector<384x128xbf16>, vector<16x128xf32> -> vector<16x128xf32>
    %c2 = arith.constant 2 : index
    %c0_22 = arith.constant 0 : index
    %40 = vector.load %arg11[%c2, %c0_22] : memref<27x128xf32, #tpu.memory_space<vmem>>, vector<1x128xf32>
    %41 = vector.broadcast %40 : vector<1x128xf32> to vector<16x128xf32>
    %42 = arith.addf %39, %41 : vector<16x128xf32>
    %cst_23 = arith.constant 0.000000e+00 : f32
    %cst_24 = arith.constant 6.000000e+00 : f32
    %43 = vector.broadcast %cst_23 : f32 to vector<16x128xf32>
    %44 = arith.maximumf %43, %42 : vector<16x128xf32>
    %45 = vector.broadcast %cst_24 : f32 to vector<16x128xf32>
    %46 = arith.minimumf %45, %44 : vector<16x128xf32>
    %c1_25 = arith.constant 1 : index
    %c0_26 = arith.constant 0 : index
    %c0_27 = arith.constant 0 : index
    %47 = vector.load %arg3[%c1_25, %c0_26, %c0_27] : memref<4x128x128xbf16, #tpu.memory_space<vmem>>, vector<1x128x128xbf16>
    %48 = vector.shape_cast %47 : vector<1x128x128xbf16> to vector<128x128xbf16>
    %49 = arith.truncf %46 : vector<16x128xf32> to vector<16x128xbf16>
    %cst_28 = arith.constant dense<0.000000e+00> : vector<16x128xf32>
    %50 = tpu.matmul %49, %48, %cst_28 {dimension_numbers = #tpu.dot_dimension_numbers<[1], [0], [0], [1], [0, 0, 1, 1], [], []>} : vector<16x128xbf16>, vector<128x128xbf16>, vector<16x128xf32> -> vector<16x128xf32>
    %c3 = arith.constant 3 : index
    %c0_29 = arith.constant 0 : index
    %51 = vector.load %arg11[%c3, %c0_29] : memref<27x128xf32, #tpu.memory_space<vmem>>, vector<1x128xf32>
    %52 = vector.broadcast %51 : vector<1x128xf32> to vector<16x128xf32>
    %53 = arith.addf %50, %52 : vector<16x128xf32>
    %cst_30 = arith.constant 0.000000e+00 : f32
    %cst_31 = arith.constant 6.000000e+00 : f32
    %54 = vector.broadcast %cst_30 : f32 to vector<16x128xf32>
    %55 = arith.maximumf %54, %53 : vector<16x128xf32>
    %56 = vector.broadcast %cst_31 : f32 to vector<16x128xf32>
    %57 = arith.minimumf %56, %55 : vector<16x128xf32>
    %cst_32 = arith.constant 0.000000e+00 : f32
    %58 = vector.broadcast %cst_32 : f32 to vector<1x128xf32>
    %59 = vector.extract_strided_slice %57 {offsets = [0, 0], sizes = [15, 128], strides = [1, 1]} : vector<16x128xf32> to vector<15x128xf32>
    %60 = tpu.concatenate %58, %59 in 0 : vector<1x128xf32>, vector<15x128xf32> -> vector<16x128xf32>
    %61 = vector.extract_strided_slice %57 {offsets = [1, 0], sizes = [15, 128], strides = [1, 1]} : vector<16x128xf32> to vector<15x128xf32>
    %62 = tpu.concatenate %61, %58 in 0 : vector<15x128xf32>, vector<1x128xf32> -> vector<16x128xf32>
    %63 = tpu.concatenate %60, %57, %62 in 1 : vector<16x128xf32>, vector<16x128xf32>, vector<16x128xf32> -> vector<16x384xf32>
    %c2_33 = arith.constant 2 : index
    %c0_34 = arith.constant 0 : index
    %c0_35 = arith.constant 0 : index
    %64 = vector.load %arg2[%c2_33, %c0_34, %c0_35] : memref<4x384x128xbf16, #tpu.memory_space<vmem>>, vector<1x384x128xbf16>
    %65 = vector.shape_cast %64 : vector<1x384x128xbf16> to vector<384x128xbf16>
    %66 = arith.truncf %63 : vector<16x384xf32> to vector<16x384xbf16>
    %cst_36 = arith.constant dense<0.000000e+00> : vector<16x128xf32>
    %67 = tpu.matmul %66, %65, %cst_36 {dimension_numbers = #tpu.dot_dimension_numbers<[1], [0], [0], [1], [0, 0, 1, 1], [], []>} : vector<16x384xbf16>, vector<384x128xbf16>, vector<16x128xf32> -> vector<16x128xf32>
    %c4 = arith.constant 4 : index
    %c0_37 = arith.constant 0 : index
    %68 = vector.load %arg11[%c4, %c0_37] : memref<27x128xf32, #tpu.memory_space<vmem>>, vector<1x128xf32>
    %69 = vector.broadcast %68 : vector<1x128xf32> to vector<16x128xf32>
    %70 = arith.addf %67, %69 : vector<16x128xf32>
    %cst_38 = arith.constant 0.000000e+00 : f32
    %cst_39 = arith.constant 6.000000e+00 : f32
    %71 = vector.broadcast %cst_38 : f32 to vector<16x128xf32>
    %72 = arith.maximumf %71, %70 : vector<16x128xf32>
    %73 = vector.broadcast %cst_39 : f32 to vector<16x128xf32>
    %74 = arith.minimumf %73, %72 : vector<16x128xf32>
    %c2_40 = arith.constant 2 : index
    %c0_41 = arith.constant 0 : index
    %c0_42 = arith.constant 0 : index
    %75 = vector.load %arg3[%c2_40, %c0_41, %c0_42] : memref<4x128x128xbf16, #tpu.memory_space<vmem>>, vector<1x128x128xbf16>
    %76 = vector.shape_cast %75 : vector<1x128x128xbf16> to vector<128x128xbf16>
    %77 = arith.truncf %74 : vector<16x128xf32> to vector<16x128xbf16>
    %cst_43 = arith.constant dense<0.000000e+00> : vector<16x128xf32>
    %78 = tpu.matmul %77, %76, %cst_43 {dimension_numbers = #tpu.dot_dimension_numbers<[1], [0], [0], [1], [0, 0, 1, 1], [], []>} : vector<16x128xbf16>, vector<128x128xbf16>, vector<16x128xf32> -> vector<16x128xf32>
    %c5 = arith.constant 5 : index
    %c0_44 = arith.constant 0 : index
    %79 = vector.load %arg11[%c5, %c0_44] : memref<27x128xf32, #tpu.memory_space<vmem>>, vector<1x128xf32>
    %80 = vector.broadcast %79 : vector<1x128xf32> to vector<16x128xf32>
    %81 = arith.addf %78, %80 : vector<16x128xf32>
    %cst_45 = arith.constant 0.000000e+00 : f32
    %cst_46 = arith.constant 6.000000e+00 : f32
    %82 = vector.broadcast %cst_45 : f32 to vector<16x128xf32>
    %83 = arith.maximumf %82, %81 : vector<16x128xf32>
    %84 = vector.broadcast %cst_46 : f32 to vector<16x128xf32>
    %85 = arith.minimumf %84, %83 : vector<16x128xf32>
    %c0_47 = arith.constant 0 : index
    %c0_48 = arith.constant 0 : index
    %c0_49 = arith.constant 0 : index
    %86 = vector.load %arg12[%c0_47, %c0_48, %c0_49] : memref<3x24x16xbf16, #tpu.memory_space<vmem>>, vector<1x24x16xbf16>
    %87 = vector.shape_cast %86 : vector<1x24x16xbf16> to vector<24x16xbf16>
    %88 = arith.truncf %29 : vector<16x128xf32> to vector<16x128xbf16>
    %cst_50 = arith.constant dense<0.000000e+00> : vector<24x128xf32>
    %89 = tpu.matmul %87, %88, %cst_50 {dimension_numbers = #tpu.dot_dimension_numbers<[1], [0], [0], [1], [0, 0, 1, 1], [], []>} : vector<24x16xbf16>, vector<16x128xbf16>, vector<24x128xf32> -> vector<24x128xf32>
    %90 = vector.extract_strided_slice %89 {offsets = [0, 0], sizes = [8, 128], strides = [1, 1]} : vector<24x128xf32> to vector<8x128xf32>
    %91 = vector.extract_strided_slice %89 {offsets = [8, 0], sizes = [8, 128], strides = [1, 1]} : vector<24x128xf32> to vector<8x128xf32>
    %92 = arith.maximumf %90, %91 : vector<8x128xf32>
    %93 = vector.extract_strided_slice %89 {offsets = [16, 0], sizes = [8, 128], strides = [1, 1]} : vector<24x128xf32> to vector<8x128xf32>
    %94 = arith.maximumf %92, %93 : vector<8x128xf32>
    %c0_51 = arith.constant 0 : index
    %c0_52 = arith.constant 0 : index
    %c0_53 = arith.constant 0 : index
    %95 = vector.load %arg13[%c0_51, %c0_52, %c0_53] : memref<3x128x192xbf16, #tpu.memory_space<vmem>>, vector<1x128x192xbf16>
    %96 = vector.shape_cast %95 : vector<1x128x192xbf16> to vector<128x192xbf16>
    %97 = arith.truncf %94 : vector<8x128xf32> to vector<8x128xbf16>
    %cst_54 = arith.constant dense<0.000000e+00> : vector<8x192xf32>
    %98 = tpu.matmul %97, %96, %cst_54 {dimension_numbers = #tpu.dot_dimension_numbers<[1], [0], [0], [1], [0, 0, 1, 1], [], []>} : vector<8x128xbf16>, vector<128x192xbf16>, vector<8x192xf32> -> vector<8x192xf32>
    %99 = vector.extract_strided_slice %98 {offsets = [0, 0], sizes = [8, 64], strides = [1, 1]} : vector<8x192xf32> to vector<8x64xf32>
    %100 = vector.extract_strided_slice %98 {offsets = [0, 64], sizes = [8, 64], strides = [1, 1]} : vector<8x192xf32> to vector<8x64xf32>
    %101 = arith.maximumf %99, %100 : vector<8x64xf32>
    %102 = vector.extract_strided_slice %98 {offsets = [0, 128], sizes = [8, 64], strides = [1, 1]} : vector<8x192xf32> to vector<8x64xf32>
    %103 = arith.maximumf %101, %102 : vector<8x64xf32>
    %cst_55 = arith.constant 0.000000e+00 : f32
    %104 = vector.broadcast %cst_55 : f32 to vector<1x64xf32>
    %105 = vector.extract_strided_slice %103 {offsets = [0, 0], sizes = [7, 64], strides = [1, 1]} : vector<8x64xf32> to vector<7x64xf32>
    %106 = tpu.concatenate %104, %105 in 0 : vector<1x64xf32>, vector<7x64xf32> -> vector<8x64xf32>
    %107 = vector.extract_strided_slice %103 {offsets = [1, 0], sizes = [7, 64], strides = [1, 1]} : vector<8x64xf32> to vector<7x64xf32>
    %108 = tpu.concatenate %107, %104 in 0 : vector<7x64xf32>, vector<1x64xf32> -> vector<8x64xf32>
    %109 = tpu.concatenate %106, %103, %108 in 1 : vector<8x64xf32>, vector<8x64xf32>, vector<8x64xf32> -> vector<8x192xf32>
    %c0_56 = arith.constant 0 : index
    %c0_57 = arith.constant 0 : index
    %c0_58 = arith.constant 0 : index
    %110 = vector.load %arg4[%c0_56, %c0_57, %c0_58] : memref<3x192x64xbf16, #tpu.memory_space<vmem>>, vector<1x192x64xbf16>
    %111 = vector.shape_cast %110 : vector<1x192x64xbf16> to vector<192x64xbf16>
    %112 = arith.truncf %109 : vector<8x192xf32> to vector<8x192xbf16>
    %cst_59 = arith.constant dense<0.000000e+00> : vector<8x64xf32>
    %113 = tpu.matmul %112, %111, %cst_59 {dimension_numbers = #tpu.dot_dimension_numbers<[1], [0], [0], [1], [0, 0, 1, 1], [], []>} : vector<8x192xbf16>, vector<192x64xbf16>, vector<8x64xf32> -> vector<8x64xf32>
    %c8 = arith.constant 8 : index
    %c0_60 = arith.constant 0 : index
    %114 = vector.load %arg11[%c8, %c0_60] : memref<27x128xf32, #tpu.memory_space<vmem>>, vector<1x64xf32>
    %115 = vector.broadcast %114 : vector<1x64xf32> to vector<8x64xf32>
    %116 = arith.addf %113, %115 : vector<8x64xf32>
    %cst_61 = arith.constant 0.000000e+00 : f32
    %cst_62 = arith.constant 6.000000e+00 : f32
    %117 = vector.broadcast %cst_61 : f32 to vector<8x64xf32>
    %118 = arith.maximumf %117, %116 : vector<8x64xf32>
    %119 = vector.broadcast %cst_62 : f32 to vector<8x64xf32>
    %120 = arith.minimumf %119, %118 : vector<8x64xf32>
    %c0_63 = arith.constant 0 : index
    %c0_64 = arith.constant 0 : index
    %c0_65 = arith.constant 0 : index
    %121 = vector.load %arg5[%c0_63, %c0_64, %c0_65] : memref<3x64x64xbf16, #tpu.memory_space<vmem>>, vector<1x64x64xbf16>
    %122 = vector.shape_cast %121 : vector<1x64x64xbf16> to vector<64x64xbf16>
    %123 = arith.truncf %120 : vector<8x64xf32> to vector<8x64xbf16>
    %cst_66 = arith.constant dense<0.000000e+00> : vector<8x64xf32>
    %124 = tpu.matmul %123, %122, %cst_66 {dimension_numbers = #tpu.dot_dimension_numbers<[1], [0], [0], [1], [0, 0, 1, 1], [], []>} : vector<8x64xbf16>, vector<64x64xbf16>, vector<8x64xf32> -> vector<8x64xf32>
    %c9 = arith.constant 9 : index
    %c0_67 = arith.constant 0 : index
    %125 = vector.load %arg11[%c9, %c0_67] : memref<27x128xf32, #tpu.memory_space<vmem>>, vector<1x64xf32>
    %126 = vector.broadcast %125 : vector<1x64xf32> to vector<8x64xf32>
    %127 = arith.addf %124, %126 : vector<8x64xf32>
    %cst_68 = arith.constant 0.000000e+00 : f32
    %cst_69 = arith.constant 6.000000e+00 : f32
    %128 = vector.broadcast %cst_68 : f32 to vector<8x64xf32>
    %129 = arith.maximumf %128, %127 : vector<8x64xf32>
    %130 = vector.broadcast %cst_69 : f32 to vector<8x64xf32>
    %131 = arith.minimumf %130, %129 : vector<8x64xf32>
    %cst_70 = arith.constant 0.000000e+00 : f32
    %132 = vector.broadcast %cst_70 : f32 to vector<1x64xf32>
    %133 = vector.extract_strided_slice %131 {offsets = [0, 0], sizes = [7, 64], strides = [1, 1]} : vector<8x64xf32> to vector<7x64xf32>
    %134 = tpu.concatenate %132, %133 in 0 : vector<1x64xf32>, vector<7x64xf32> -> vector<8x64xf32>
    %135 = vector.extract_strided_slice %131 {offsets = [1, 0], sizes = [7, 64], strides = [1, 1]} : vector<8x64xf32> to vector<7x64xf32>
    %136 = tpu.concatenate %135, %132 in 0 : vector<7x64xf32>, vector<1x64xf32> -> vector<8x64xf32>
    %137 = tpu.concatenate %134, %131, %136 in 1 : vector<8x64xf32>, vector<8x64xf32>, vector<8x64xf32> -> vector<8x192xf32>
    %c1_71 = arith.constant 1 : index
    %c0_72 = arith.constant 0 : index
    %c0_73 = arith.constant 0 : index
    %138 = vector.load %arg4[%c1_71, %c0_72, %c0_73] : memref<3x192x64xbf16, #tpu.memory_space<vmem>>, vector<1x192x64xbf16>
    %139 = vector.shape_cast %138 : vector<1x192x64xbf16> to vector<192x64xbf16>
    %140 = arith.truncf %137 : vector<8x192xf32> to vector<8x192xbf16>
    %cst_74 = arith.constant dense<0.000000e+00> : vector<8x64xf32>
    %141 = tpu.matmul %140, %139, %cst_74 {dimension_numbers = #tpu.dot_dimension_numbers<[1], [0], [0], [1], [0, 0, 1, 1], [], []>} : vector<8x192xbf16>, vector<192x64xbf16>, vector<8x64xf32> -> vector<8x64xf32>
    %c10 = arith.constant 10 : index
    %c0_75 = arith.constant 0 : index
    %142 = vector.load %arg11[%c10, %c0_75] : memref<27x128xf32, #tpu.memory_space<vmem>>, vector<1x64xf32>
    %143 = vector.broadcast %142 : vector<1x64xf32> to vector<8x64xf32>
    %144 = arith.addf %141, %143 : vector<8x64xf32>
    %cst_76 = arith.constant 0.000000e+00 : f32
    %cst_77 = arith.constant 6.000000e+00 : f32
    %145 = vector.broadcast %cst_76 : f32 to vector<8x64xf32>
    %146 = arith.maximumf %145, %144 : vector<8x64xf32>
    %147 = vector.broadcast %cst_77 : f32 to vector<8x64xf32>
    %148 = arith.minimumf %147, %146 : vector<8x64xf32>
    %c1_78 = arith.constant 1 : index
    %c0_79 = arith.constant 0 : index
    %c0_80 = arith.constant 0 : index
    %149 = vector.load %arg5[%c1_78, %c0_79, %c0_80] : memref<3x64x64xbf16, #tpu.memory_space<vmem>>, vector<1x64x64xbf16>
    %150 = vector.shape_cast %149 : vector<1x64x64xbf16> to vector<64x64xbf16>
    %151 = arith.truncf %148 : vector<8x64xf32> to vector<8x64xbf16>
    %cst_81 = arith.constant dense<0.000000e+00> : vector<8x64xf32>
    %152 = tpu.matmul %151, %150, %cst_81 {dimension_numbers = #tpu.dot_dimension_numbers<[1], [0], [0], [1], [0, 0, 1, 1], [], []>} : vector<8x64xbf16>, vector<64x64xbf16>, vector<8x64xf32> -> vector<8x64xf32>
    %c11 = arith.constant 11 : index
    %c0_82 = arith.constant 0 : index
    %153 = vector.load %arg11[%c11, %c0_82] : memref<27x128xf32, #tpu.memory_space<vmem>>, vector<1x64xf32>
    %154 = vector.broadcast %153 : vector<1x64xf32> to vector<8x64xf32>
    %155 = arith.addf %152, %154 : vector<8x64xf32>
    %cst_83 = arith.constant 0.000000e+00 : f32
    %cst_84 = arith.constant 6.000000e+00 : f32
    %156 = vector.broadcast %cst_83 : f32 to vector<8x64xf32>
    %157 = arith.maximumf %156, %155 : vector<8x64xf32>
    %158 = vector.broadcast %cst_84 : f32 to vector<8x64xf32>
    %159 = arith.minimumf %158, %157 : vector<8x64xf32>
    %c1_85 = arith.constant 1 : index
    %c0_86 = arith.constant 0 : index
    %c0_87 = arith.constant 0 : index
    %160 = vector.load %arg12[%c1_85, %c0_86, %c0_87] : memref<3x24x16xbf16, #tpu.memory_space<vmem>>, vector<1x12x8xbf16>
    %161 = vector.shape_cast %160 : vector<1x12x8xbf16> to vector<12x8xbf16>
    %162 = arith.truncf %131 : vector<8x64xf32> to vector<8x64xbf16>
    %cst_88 = arith.constant dense<0.000000e+00> : vector<12x64xf32>
    %163 = tpu.matmul %161, %162, %cst_88 {dimension_numbers = #tpu.dot_dimension_numbers<[1], [0], [0], [1], [0, 0, 1, 1], [], []>} : vector<12x8xbf16>, vector<8x64xbf16>, vector<12x64xf32> -> vector<12x64xf32>
    %164 = vector.extract_strided_slice %163 {offsets = [0, 0], sizes = [4, 64], strides = [1, 1]} : vector<12x64xf32> to vector<4x64xf32>
    %165 = vector.extract_strided_slice %163 {offsets = [4, 0], sizes = [4, 64], strides = [1, 1]} : vector<12x64xf32> to vector<4x64xf32>
    %166 = arith.maximumf %164, %165 : vector<4x64xf32>
    %167 = vector.extract_strided_slice %163 {offsets = [8, 0], sizes = [4, 64], strides = [1, 1]} : vector<12x64xf32> to vector<4x64xf32>
    %168 = arith.maximumf %166, %167 : vector<4x64xf32>
    %c1_89 = arith.constant 1 : index
    %c0_90 = arith.constant 0 : index
    %c0_91 = arith.constant 0 : index
    %169 = vector.load %arg13[%c1_89, %c0_90, %c0_91] : memref<3x128x192xbf16, #tpu.memory_space<vmem>>, vector<1x64x96xbf16>
    %170 = vector.shape_cast %169 : vector<1x64x96xbf16> to vector<64x96xbf16>
    %171 = arith.truncf %168 : vector<4x64xf32> to vector<4x64xbf16>
    %cst_92 = arith.constant dense<0.000000e+00> : vector<4x96xf32>
    %172 = tpu.matmul %171, %170, %cst_92 {dimension_numbers = #tpu.dot_dimension_numbers<[1], [0], [0], [1], [0, 0, 1, 1], [], []>} : vector<4x64xbf16>, vector<64x96xbf16>, vector<4x96xf32> -> vector<4x96xf32>
    %173 = vector.extract_strided_slice %172 {offsets = [0, 0], sizes = [4, 32], strides = [1, 1]} : vector<4x96xf32> to vector<4x32xf32>
    %174 = vector.extract_strided_slice %172 {offsets = [0, 32], sizes = [4, 32], strides = [1, 1]} : vector<4x96xf32> to vector<4x32xf32>
    %175 = arith.maximumf %173, %174 : vector<4x32xf32>
    %176 = vector.extract_strided_slice %172 {offsets = [0, 64], sizes = [4, 32], strides = [1, 1]} : vector<4x96xf32> to vector<4x32xf32>
    %177 = arith.maximumf %175, %176 : vector<4x32xf32>
    %cst_93 = arith.constant 0.000000e+00 : f32
    %178 = vector.broadcast %cst_93 : f32 to vector<1x32xf32>
    %179 = vector.extract_strided_slice %177 {offsets = [0, 0], sizes = [3, 32], strides = [1, 1]} : vector<4x32xf32> to vector<3x32xf32>
    %180 = tpu.concatenate %178, %179 in 0 : vector<1x32xf32>, vector<3x32xf32> -> vector<4x32xf32>
    %181 = vector.extract_strided_slice %177 {offsets = [1, 0], sizes = [3, 32], strides = [1, 1]} : vector<4x32xf32> to vector<3x32xf32>
    %182 = tpu.concatenate %181, %178 in 0 : vector<3x32xf32>, vector<1x32xf32> -> vector<4x32xf32>
    %183 = tpu.concatenate %180, %177, %182 in 1 : vector<4x32xf32>, vector<4x32xf32>, vector<4x32xf32> -> vector<4x96xf32>
    %c0_94 = arith.constant 0 : index
    %c0_95 = arith.constant 0 : index
    %c0_96 = arith.constant 0 : index
    %184 = vector.load %arg6[%c0_94, %c0_95, %c0_96] : memref<3x96x32xbf16, #tpu.memory_space<vmem>>, vector<1x96x32xbf16>
    %185 = vector.shape_cast %184 : vector<1x96x32xbf16> to vector<96x32xbf16>
    %186 = arith.truncf %183 : vector<4x96xf32> to vector<4x96xbf16>
    %cst_97 = arith.constant dense<0.000000e+00> : vector<4x32xf32>
    %187 = tpu.matmul %186, %185, %cst_97 {dimension_numbers = #tpu.dot_dimension_numbers<[1], [0], [0], [1], [0, 0, 1, 1], [], []>} : vector<4x96xbf16>, vector<96x32xbf16>, vector<4x32xf32> -> vector<4x32xf32>
    %c14 = arith.constant 14 : index
    %c0_98 = arith.constant 0 : index
    %188 = vector.load %arg11[%c14, %c0_98] : memref<27x128xf32, #tpu.memory_space<vmem>>, vector<1x32xf32>
    %189 = vector.broadcast %188 : vector<1x32xf32> to vector<4x32xf32>
    %190 = arith.addf %187, %189 : vector<4x32xf32>
    %cst_99 = arith.constant 0.000000e+00 : f32
    %cst_100 = arith.constant 6.000000e+00 : f32
    %191 = vector.broadcast %cst_99 : f32 to vector<4x32xf32>
    %192 = arith.maximumf %191, %190 : vector<4x32xf32>
    %193 = vector.broadcast %cst_100 : f32 to vector<4x32xf32>
    %194 = arith.minimumf %193, %192 : vector<4x32xf32>
    %c0_101 = arith.constant 0 : index
    %c0_102 = arith.constant 0 : index
    %c0_103 = arith.constant 0 : index
    %195 = vector.load %arg7[%c0_101, %c0_102, %c0_103] : memref<3x32x32xbf16, #tpu.memory_space<vmem>>, vector<1x32x32xbf16>
    %196 = vector.shape_cast %195 : vector<1x32x32xbf16> to vector<32x32xbf16>
    %197 = arith.truncf %194 : vector<4x32xf32> to vector<4x32xbf16>
    %cst_104 = arith.constant dense<0.000000e+00> : vector<4x32xf32>
    %198 = tpu.matmul %197, %196, %cst_104 {dimension_numbers = #tpu.dot_dimension_numbers<[1], [0], [0], [1], [0, 0, 1, 1], [], []>} : vector<4x32xbf16>, vector<32x32xbf16>, vector<4x32xf32> -> vector<4x32xf32>
    %c15 = arith.constant 15 : index
    %c0_105 = arith.constant 0 : index
    %199 = vector.load %arg11[%c15, %c0_105] : memref<27x128xf32, #tpu.memory_space<vmem>>, vector<1x32xf32>
    %200 = vector.broadcast %199 : vector<1x32xf32> to vector<4x32xf32>
    %201 = arith.addf %198, %200 : vector<4x32xf32>
    %cst_106 = arith.constant 0.000000e+00 : f32
    %cst_107 = arith.constant 6.000000e+00 : f32
    %202 = vector.broadcast %cst_106 : f32 to vector<4x32xf32>
    %203 = arith.maximumf %202, %201 : vector<4x32xf32>
    %204 = vector.broadcast %cst_107 : f32 to vector<4x32xf32>
    %205 = arith.minimumf %204, %203 : vector<4x32xf32>
    %cst_108 = arith.constant 0.000000e+00 : f32
    %206 = vector.broadcast %cst_108 : f32 to vector<1x32xf32>
    %207 = vector.extract_strided_slice %205 {offsets = [0, 0], sizes = [3, 32], strides = [1, 1]} : vector<4x32xf32> to vector<3x32xf32>
    %208 = tpu.concatenate %206, %207 in 0 : vector<1x32xf32>, vector<3x32xf32> -> vector<4x32xf32>
    %209 = vector.extract_strided_slice %205 {offsets = [1, 0], sizes = [3, 32], strides = [1, 1]} : vector<4x32xf32> to vector<3x32xf32>
    %210 = tpu.concatenate %209, %206 in 0 : vector<3x32xf32>, vector<1x32xf32> -> vector<4x32xf32>
    %211 = tpu.concatenate %208, %205, %210 in 1 : vector<4x32xf32>, vector<4x32xf32>, vector<4x32xf32> -> vector<4x96xf32>
    %c1_109 = arith.constant 1 : index
    %c0_110 = arith.constant 0 : index
    %c0_111 = arith.constant 0 : index
    %212 = vector.load %arg6[%c1_109, %c0_110, %c0_111] : memref<3x96x32xbf16, #tpu.memory_space<vmem>>, vector<1x96x32xbf16>
    %213 = vector.shape_cast %212 : vector<1x96x32xbf16> to vector<96x32xbf16>
    %214 = arith.truncf %211 : vector<4x96xf32> to vector<4x96xbf16>
    %cst_112 = arith.constant dense<0.000000e+00> : vector<4x32xf32>
    %215 = tpu.matmul %214, %213, %cst_112 {dimension_numbers = #tpu.dot_dimension_numbers<[1], [0], [0], [1], [0, 0, 1, 1], [], []>} : vector<4x96xbf16>, vector<96x32xbf16>, vector<4x32xf32> -> vector<4x32xf32>
    %c16 = arith.constant 16 : index
    %c0_113 = arith.constant 0 : index
    %216 = vector.load %arg11[%c16, %c0_113] : memref<27x128xf32, #tpu.memory_space<vmem>>, vector<1x32xf32>
    %217 = vector.broadcast %216 : vector<1x32xf32> to vector<4x32xf32>
    %218 = arith.addf %215, %217 : vector<4x32xf32>
    %cst_114 = arith.constant 0.000000e+00 : f32
    %cst_115 = arith.constant 6.000000e+00 : f32
    %219 = vector.broadcast %cst_114 : f32 to vector<4x32xf32>
    %220 = arith.maximumf %219, %218 : vector<4x32xf32>
    %221 = vector.broadcast %cst_115 : f32 to vector<4x32xf32>
    %222 = arith.minimumf %221, %220 : vector<4x32xf32>
    %c1_116 = arith.constant 1 : index
    %c0_117 = arith.constant 0 : index
    %c0_118 = arith.constant 0 : index
    %223 = vector.load %arg7[%c1_116, %c0_117, %c0_118] : memref<3x32x32xbf16, #tpu.memory_space<vmem>>, vector<1x32x32xbf16>
    %224 = vector.shape_cast %223 : vector<1x32x32xbf16> to vector<32x32xbf16>
    %225 = arith.truncf %222 : vector<4x32xf32> to vector<4x32xbf16>
    %cst_119 = arith.constant dense<0.000000e+00> : vector<4x32xf32>
    %226 = tpu.matmul %225, %224, %cst_119 {dimension_numbers = #tpu.dot_dimension_numbers<[1], [0], [0], [1], [0, 0, 1, 1], [], []>} : vector<4x32xbf16>, vector<32x32xbf16>, vector<4x32xf32> -> vector<4x32xf32>
    %c17 = arith.constant 17 : index
    %c0_120 = arith.constant 0 : index
    %227 = vector.load %arg11[%c17, %c0_120] : memref<27x128xf32, #tpu.memory_space<vmem>>, vector<1x32xf32>
    %228 = vector.broadcast %227 : vector<1x32xf32> to vector<4x32xf32>
    %229 = arith.addf %226, %228 : vector<4x32xf32>
    %cst_121 = arith.constant 0.000000e+00 : f32
    %cst_122 = arith.constant 6.000000e+00 : f32
    %230 = vector.broadcast %cst_121 : f32 to vector<4x32xf32>
    %231 = arith.maximumf %230, %229 : vector<4x32xf32>
    %232 = vector.broadcast %cst_122 : f32 to vector<4x32xf32>
    %233 = arith.minimumf %232, %231 : vector<4x32xf32>
    %c2_123 = arith.constant 2 : index
    %c0_124 = arith.constant 0 : index
    %c0_125 = arith.constant 0 : index
    %234 = vector.load %arg12[%c2_123, %c0_124, %c0_125] : memref<3x24x16xbf16, #tpu.memory_space<vmem>>, vector<1x6x4xbf16>
    %235 = vector.shape_cast %234 : vector<1x6x4xbf16> to vector<6x4xbf16>
    %236 = arith.truncf %205 : vector<4x32xf32> to vector<4x32xbf16>
    %cst_126 = arith.constant dense<0.000000e+00> : vector<6x32xf32>
    %237 = tpu.matmul %235, %236, %cst_126 {dimension_numbers = #tpu.dot_dimension_numbers<[1], [0], [0], [1], [0, 0, 1, 1], [], []>} : vector<6x4xbf16>, vector<4x32xbf16>, vector<6x32xf32> -> vector<6x32xf32>
    %238 = vector.extract_strided_slice %237 {offsets = [0, 0], sizes = [2, 32], strides = [1, 1]} : vector<6x32xf32> to vector<2x32xf32>
    %239 = vector.extract_strided_slice %237 {offsets = [2, 0], sizes = [2, 32], strides = [1, 1]} : vector<6x32xf32> to vector<2x32xf32>
    %240 = arith.maximumf %238, %239 : vector<2x32xf32>
    %241 = vector.extract_strided_slice %237 {offsets = [4, 0], sizes = [2, 32], strides = [1, 1]} : vector<6x32xf32> to vector<2x32xf32>
    %242 = arith.maximumf %240, %241 : vector<2x32xf32>
    %c2_127 = arith.constant 2 : index
    %c0_128 = arith.constant 0 : index
    %c0_129 = arith.constant 0 : index
    %243 = vector.load %arg13[%c2_127, %c0_128, %c0_129] : memref<3x128x192xbf16, #tpu.memory_space<vmem>>, vector<1x32x48xbf16>
    %244 = vector.shape_cast %243 : vector<1x32x48xbf16> to vector<32x48xbf16>
    %245 = arith.truncf %242 : vector<2x32xf32> to vector<2x32xbf16>
    %cst_130 = arith.constant dense<0.000000e+00> : vector<2x48xf32>
    %246 = tpu.matmul %245, %244, %cst_130 {dimension_numbers = #tpu.dot_dimension_numbers<[1], [0], [0], [1], [0, 0, 1, 1], [], []>} : vector<2x32xbf16>, vector<32x48xbf16>, vector<2x48xf32> -> vector<2x48xf32>
    %247 = vector.extract_strided_slice %246 {offsets = [0, 0], sizes = [2, 16], strides = [1, 1]} : vector<2x48xf32> to vector<2x16xf32>
    %248 = vector.extract_strided_slice %246 {offsets = [0, 16], sizes = [2, 16], strides = [1, 1]} : vector<2x48xf32> to vector<2x16xf32>
    %249 = arith.maximumf %247, %248 : vector<2x16xf32>
    %250 = vector.extract_strided_slice %246 {offsets = [0, 32], sizes = [2, 16], strides = [1, 1]} : vector<2x48xf32> to vector<2x16xf32>
    %251 = arith.maximumf %249, %250 : vector<2x16xf32>
    %cst_131 = arith.constant 0.000000e+00 : f32
    %252 = vector.broadcast %cst_131 : f32 to vector<1x16xf32>
    %253 = vector.extract_strided_slice %251 {offsets = [0, 0], sizes = [1, 16], strides = [1, 1]} : vector<2x16xf32> to vector<1x16xf32>
    %254 = tpu.concatenate %252, %253 in 0 : vector<1x16xf32>, vector<1x16xf32> -> vector<2x16xf32>
    %255 = vector.extract_strided_slice %251 {offsets = [1, 0], sizes = [1, 16], strides = [1, 1]} : vector<2x16xf32> to vector<1x16xf32>
    %256 = tpu.concatenate %255, %252 in 0 : vector<1x16xf32>, vector<1x16xf32> -> vector<2x16xf32>
    %257 = tpu.concatenate %254, %251, %256 in 1 : vector<2x16xf32>, vector<2x16xf32>, vector<2x16xf32> -> vector<2x48xf32>
    %c0_132 = arith.constant 0 : index
    %c0_133 = arith.constant 0 : index
    %c0_134 = arith.constant 0 : index
    %258 = vector.load %arg8[%c0_132, %c0_133, %c0_134] : memref<2x48x16xbf16, #tpu.memory_space<vmem>>, vector<1x48x16xbf16>
    %259 = vector.shape_cast %258 : vector<1x48x16xbf16> to vector<48x16xbf16>
    %260 = arith.truncf %257 : vector<2x48xf32> to vector<2x48xbf16>
    %cst_135 = arith.constant dense<0.000000e+00> : vector<2x16xf32>
    %261 = tpu.matmul %260, %259, %cst_135 {dimension_numbers = #tpu.dot_dimension_numbers<[1], [0], [0], [1], [0, 0, 1, 1], [], []>} : vector<2x48xbf16>, vector<48x16xbf16>, vector<2x16xf32> -> vector<2x16xf32>
    %c20 = arith.constant 20 : index
    %c0_136 = arith.constant 0 : index
    %262 = vector.load %arg11[%c20, %c0_136] : memref<27x128xf32, #tpu.memory_space<vmem>>, vector<1x16xf32>
    %263 = vector.broadcast %262 : vector<1x16xf32> to vector<2x16xf32>
    %264 = arith.addf %261, %263 : vector<2x16xf32>
    %cst_137 = arith.constant 0.000000e+00 : f32
    %cst_138 = arith.constant 6.000000e+00 : f32
    %265 = vector.broadcast %cst_137 : f32 to vector<2x16xf32>
    %266 = arith.maximumf %265, %264 : vector<2x16xf32>
    %267 = vector.broadcast %cst_138 : f32 to vector<2x16xf32>
    %268 = arith.minimumf %267, %266 : vector<2x16xf32>
    %c0_139 = arith.constant 0 : index
    %c0_140 = arith.constant 0 : index
    %c0_141 = arith.constant 0 : index
    %269 = vector.load %arg9[%c0_139, %c0_140, %c0_141] : memref<2x16x16xbf16, #tpu.memory_space<vmem>>, vector<1x16x16xbf16>
    %270 = vector.shape_cast %269 : vector<1x16x16xbf16> to vector<16x16xbf16>
    %271 = arith.truncf %268 : vector<2x16xf32> to vector<2x16xbf16>
    %cst_142 = arith.constant dense<0.000000e+00> : vector<2x16xf32>
    %272 = tpu.matmul %271, %270, %cst_142 {dimension_numbers = #tpu.dot_dimension_numbers<[1], [0], [0], [1], [0, 0, 1, 1], [], []>} : vector<2x16xbf16>, vector<16x16xbf16>, vector<2x16xf32> -> vector<2x16xf32>
    %c21 = arith.constant 21 : index
    %c0_143 = arith.constant 0 : index
    %273 = vector.load %arg11[%c21, %c0_143] : memref<27x128xf32, #tpu.memory_space<vmem>>, vector<1x16xf32>
    %274 = vector.broadcast %273 : vector<1x16xf32> to vector<2x16xf32>
    %275 = arith.addf %272, %274 : vector<2x16xf32>
    %cst_144 = arith.constant 0.000000e+00 : f32
    %cst_145 = arith.constant 6.000000e+00 : f32
    %276 = vector.broadcast %cst_144 : f32 to vector<2x16xf32>
    %277 = arith.maximumf %276, %275 : vector<2x16xf32>
    %278 = vector.broadcast %cst_145 : f32 to vector<2x16xf32>
    %279 = arith.minimumf %278, %277 : vector<2x16xf32>
    %cst_146 = arith.constant 0.000000e+00 : f32
    %280 = vector.broadcast %cst_146 : f32 to vector<1x16xf32>
    %281 = vector.extract_strided_slice %279 {offsets = [0, 0], sizes = [1, 16], strides = [1, 1]} : vector<2x16xf32> to vector<1x16xf32>
    %282 = tpu.concatenate %280, %281 in 0 : vector<1x16xf32>, vector<1x16xf32> -> vector<2x16xf32>
    %283 = vector.extract_strided_slice %279 {offsets = [1, 0], sizes = [1, 16], strides = [1, 1]} : vector<2x16xf32> to vector<1x16xf32>
    %284 = tpu.concatenate %283, %280 in 0 : vector<1x16xf32>, vector<1x16xf32> -> vector<2x16xf32>
    %285 = tpu.concatenate %282, %279, %284 in 1 : vector<2x16xf32>, vector<2x16xf32>, vector<2x16xf32> -> vector<2x48xf32>
    %c1_147 = arith.constant 1 : index
    %c0_148 = arith.constant 0 : index
    %c0_149 = arith.constant 0 : index
    %286 = vector.load %arg8[%c1_147, %c0_148, %c0_149] : memref<2x48x16xbf16, #tpu.memory_space<vmem>>, vector<1x48x16xbf16>
    %287 = vector.shape_cast %286 : vector<1x48x16xbf16> to vector<48x16xbf16>
    %288 = arith.truncf %285 : vector<2x48xf32> to vector<2x48xbf16>
    %cst_150 = arith.constant dense<0.000000e+00> : vector<2x16xf32>
    %289 = tpu.matmul %288, %287, %cst_150 {dimension_numbers = #tpu.dot_dimension_numbers<[1], [0], [0], [1], [0, 0, 1, 1], [], []>} : vector<2x48xbf16>, vector<48x16xbf16>, vector<2x16xf32> -> vector<2x16xf32>
    %c22 = arith.constant 22 : index
    %c0_151 = arith.constant 0 : index
    %290 = vector.load %arg11[%c22, %c0_151] : memref<27x128xf32, #tpu.memory_space<vmem>>, vector<1x16xf32>
    %291 = vector.broadcast %290 : vector<1x16xf32> to vector<2x16xf32>
    %292 = arith.addf %289, %291 : vector<2x16xf32>
    %cst_152 = arith.constant 0.000000e+00 : f32
    %cst_153 = arith.constant 6.000000e+00 : f32
    %293 = vector.broadcast %cst_152 : f32 to vector<2x16xf32>
    %294 = arith.maximumf %293, %292 : vector<2x16xf32>
    %295 = vector.broadcast %cst_153 : f32 to vector<2x16xf32>
    %296 = arith.minimumf %295, %294 : vector<2x16xf32>
    %c1_154 = arith.constant 1 : index
    %c0_155 = arith.constant 0 : index
    %c0_156 = arith.constant 0 : index
    %297 = vector.load %arg9[%c1_154, %c0_155, %c0_156] : memref<2x16x16xbf16, #tpu.memory_space<vmem>>, vector<1x16x16xbf16>
    %298 = vector.shape_cast %297 : vector<1x16x16xbf16> to vector<16x16xbf16>
    %299 = arith.truncf %296 : vector<2x16xf32> to vector<2x16xbf16>
    %cst_157 = arith.constant dense<0.000000e+00> : vector<2x16xf32>
    %300 = tpu.matmul %299, %298, %cst_157 {dimension_numbers = #tpu.dot_dimension_numbers<[1], [0], [0], [1], [0, 0, 1, 1], [], []>} : vector<2x16xbf16>, vector<16x16xbf16>, vector<2x16xf32> -> vector<2x16xf32>
    %c23 = arith.constant 23 : index
    %c0_158 = arith.constant 0 : index
    %301 = vector.load %arg11[%c23, %c0_158] : memref<27x128xf32, #tpu.memory_space<vmem>>, vector<1x16xf32>
    %302 = vector.broadcast %301 : vector<1x16xf32> to vector<2x16xf32>
    %303 = arith.addf %300, %302 : vector<2x16xf32>
    %cst_159 = arith.constant 0.000000e+00 : f32
    %cst_160 = arith.constant 6.000000e+00 : f32
    %304 = vector.broadcast %cst_159 : f32 to vector<2x16xf32>
    %305 = arith.maximumf %304, %303 : vector<2x16xf32>
    %306 = vector.broadcast %cst_160 : f32 to vector<2x16xf32>
    %307 = arith.minimumf %306, %305 : vector<2x16xf32>
    %c0_161 = arith.constant 0 : index
    %c0_162 = arith.constant 0 : index
    %c0_163 = arith.constant 0 : index
    %308 = vector.load %arg14[%c0_161, %c0_162, %c0_163] : memref<3x16x8xbf16, #tpu.memory_space<vmem>>, vector<1x4x2xbf16>
    %309 = vector.shape_cast %308 : vector<1x4x2xbf16> to vector<4x2xbf16>
    %310 = arith.truncf %307 : vector<2x16xf32> to vector<2x16xbf16>
    %cst_164 = arith.constant dense<0.000000e+00> : vector<4x16xf32>
    %311 = tpu.matmul %309, %310, %cst_164 {dimension_numbers = #tpu.dot_dimension_numbers<[1], [0], [0], [1], [0, 0, 1, 1], [], []>} : vector<4x2xbf16>, vector<2x16xbf16>, vector<4x16xf32> -> vector<4x16xf32>
    %c0_165 = arith.constant 0 : index
    %c0_166 = arith.constant 0 : index
    %c0_167 = arith.constant 0 : index
    %312 = vector.load %arg15[%c0_165, %c0_166, %c0_167] : memref<3x64x128xbf16, #tpu.memory_space<vmem>>, vector<1x16x32xbf16>
    %313 = vector.shape_cast %312 : vector<1x16x32xbf16> to vector<16x32xbf16>
    %314 = arith.truncf %311 : vector<4x16xf32> to vector<4x16xbf16>
    %cst_168 = arith.constant dense<0.000000e+00> : vector<4x32xf32>
    %315 = tpu.matmul %314, %313, %cst_168 {dimension_numbers = #tpu.dot_dimension_numbers<[1], [0], [0], [1], [0, 0, 1, 1], [], []>} : vector<4x16xbf16>, vector<16x32xbf16>, vector<4x32xf32> -> vector<4x32xf32>
    %316 = arith.addf %315, %205 : vector<4x32xf32>
    %317 = arith.addf %316, %233 : vector<4x32xf32>
    %cst_169 = arith.constant 0.000000e+00 : f32
    %318 = vector.broadcast %cst_169 : f32 to vector<1x32xf32>
    %319 = vector.extract_strided_slice %317 {offsets = [0, 0], sizes = [3, 32], strides = [1, 1]} : vector<4x32xf32> to vector<3x32xf32>
    %320 = tpu.concatenate %318, %319 in 0 : vector<1x32xf32>, vector<3x32xf32> -> vector<4x32xf32>
    %321 = vector.extract_strided_slice %317 {offsets = [1, 0], sizes = [3, 32], strides = [1, 1]} : vector<4x32xf32> to vector<3x32xf32>
    %322 = tpu.concatenate %321, %318 in 0 : vector<3x32xf32>, vector<1x32xf32> -> vector<4x32xf32>
    %323 = tpu.concatenate %320, %317, %322 in 1 : vector<4x32xf32>, vector<4x32xf32>, vector<4x32xf32> -> vector<4x96xf32>
    %c2_170 = arith.constant 2 : index
    %c0_171 = arith.constant 0 : index
    %c0_172 = arith.constant 0 : index
    %324 = vector.load %arg6[%c2_170, %c0_171, %c0_172] : memref<3x96x32xbf16, #tpu.memory_space<vmem>>, vector<1x96x32xbf16>
    %325 = vector.shape_cast %324 : vector<1x96x32xbf16> to vector<96x32xbf16>
    %326 = arith.truncf %323 : vector<4x96xf32> to vector<4x96xbf16>
    %cst_173 = arith.constant dense<0.000000e+00> : vector<4x32xf32>
    %327 = tpu.matmul %326, %325, %cst_173 {dimension_numbers = #tpu.dot_dimension_numbers<[1], [0], [0], [1], [0, 0, 1, 1], [], []>} : vector<4x96xbf16>, vector<96x32xbf16>, vector<4x32xf32> -> vector<4x32xf32>
    %c18 = arith.constant 18 : index
    %c0_174 = arith.constant 0 : index
    %328 = vector.load %arg11[%c18, %c0_174] : memref<27x128xf32, #tpu.memory_space<vmem>>, vector<1x32xf32>
    %329 = vector.broadcast %328 : vector<1x32xf32> to vector<4x32xf32>
    %330 = arith.addf %327, %329 : vector<4x32xf32>
    %cst_175 = arith.constant 0.000000e+00 : f32
    %cst_176 = arith.constant 6.000000e+00 : f32
    %331 = vector.broadcast %cst_175 : f32 to vector<4x32xf32>
    %332 = arith.maximumf %331, %330 : vector<4x32xf32>
    %333 = vector.broadcast %cst_176 : f32 to vector<4x32xf32>
    %334 = arith.minimumf %333, %332 : vector<4x32xf32>
    %c2_177 = arith.constant 2 : index
    %c0_178 = arith.constant 0 : index
    %c0_179 = arith.constant 0 : index
    %335 = vector.load %arg7[%c2_177, %c0_178, %c0_179] : memref<3x32x32xbf16, #tpu.memory_space<vmem>>, vector<1x32x32xbf16>
    %336 = vector.shape_cast %335 : vector<1x32x32xbf16> to vector<32x32xbf16>
    %337 = arith.truncf %334 : vector<4x32xf32> to vector<4x32xbf16>
    %cst_180 = arith.constant dense<0.000000e+00> : vector<4x32xf32>
    %338 = tpu.matmul %337, %336, %cst_180 {dimension_numbers = #tpu.dot_dimension_numbers<[1], [0], [0], [1], [0, 0, 1, 1], [], []>} : vector<4x32xbf16>, vector<32x32xbf16>, vector<4x32xf32> -> vector<4x32xf32>
    %c19 = arith.constant 19 : index
    %c0_181 = arith.constant 0 : index
    %339 = vector.load %arg11[%c19, %c0_181] : memref<27x128xf32, #tpu.memory_space<vmem>>, vector<1x32xf32>
    %340 = vector.broadcast %339 : vector<1x32xf32> to vector<4x32xf32>
    %341 = arith.addf %338, %340 : vector<4x32xf32>
    %cst_182 = arith.constant 0.000000e+00 : f32
    %cst_183 = arith.constant 6.000000e+00 : f32
    %342 = vector.broadcast %cst_182 : f32 to vector<4x32xf32>
    %343 = arith.maximumf %342, %341 : vector<4x32xf32>
    %344 = vector.broadcast %cst_183 : f32 to vector<4x32xf32>
    %345 = arith.minimumf %344, %343 : vector<4x32xf32>
    %c1_184 = arith.constant 1 : index
    %c0_185 = arith.constant 0 : index
    %c0_186 = arith.constant 0 : index
    %346 = vector.load %arg14[%c1_184, %c0_185, %c0_186] : memref<3x16x8xbf16, #tpu.memory_space<vmem>>, vector<1x8x4xbf16>
    %347 = vector.shape_cast %346 : vector<1x8x4xbf16> to vector<8x4xbf16>
    %348 = arith.truncf %345 : vector<4x32xf32> to vector<4x32xbf16>
    %cst_187 = arith.constant dense<0.000000e+00> : vector<8x32xf32>
    %349 = tpu.matmul %347, %348, %cst_187 {dimension_numbers = #tpu.dot_dimension_numbers<[1], [0], [0], [1], [0, 0, 1, 1], [], []>} : vector<8x4xbf16>, vector<4x32xbf16>, vector<8x32xf32> -> vector<8x32xf32>
    %c1_188 = arith.constant 1 : index
    %c0_189 = arith.constant 0 : index
    %c0_190 = arith.constant 0 : index
    %350 = vector.load %arg15[%c1_188, %c0_189, %c0_190] : memref<3x64x128xbf16, #tpu.memory_space<vmem>>, vector<1x32x64xbf16>
    %351 = vector.shape_cast %350 : vector<1x32x64xbf16> to vector<32x64xbf16>
    %352 = arith.truncf %349 : vector<8x32xf32> to vector<8x32xbf16>
    %cst_191 = arith.constant dense<0.000000e+00> : vector<8x64xf32>
    %353 = tpu.matmul %352, %351, %cst_191 {dimension_numbers = #tpu.dot_dimension_numbers<[1], [0], [0], [1], [0, 0, 1, 1], [], []>} : vector<8x32xbf16>, vector<32x64xbf16>, vector<8x64xf32> -> vector<8x64xf32>
    %354 = arith.addf %353, %131 : vector<8x64xf32>
    %355 = arith.addf %354, %159 : vector<8x64xf32>
    %cst_192 = arith.constant 0.000000e+00 : f32
    %356 = vector.broadcast %cst_192 : f32 to vector<1x64xf32>
    %357 = vector.extract_strided_slice %355 {offsets = [0, 0], sizes = [7, 64], strides = [1, 1]} : vector<8x64xf32> to vector<7x64xf32>
    %358 = tpu.concatenate %356, %357 in 0 : vector<1x64xf32>, vector<7x64xf32> -> vector<8x64xf32>
    %359 = vector.extract_strided_slice %355 {offsets = [1, 0], sizes = [7, 64], strides = [1, 1]} : vector<8x64xf32> to vector<7x64xf32>
    %360 = tpu.concatenate %359, %356 in 0 : vector<7x64xf32>, vector<1x64xf32> -> vector<8x64xf32>
    %361 = tpu.concatenate %358, %355, %360 in 1 : vector<8x64xf32>, vector<8x64xf32>, vector<8x64xf32> -> vector<8x192xf32>
    %c2_193 = arith.constant 2 : index
    %c0_194 = arith.constant 0 : index
    %c0_195 = arith.constant 0 : index
    %362 = vector.load %arg4[%c2_193, %c0_194, %c0_195] : memref<3x192x64xbf16, #tpu.memory_space<vmem>>, vector<1x192x64xbf16>
    %363 = vector.shape_cast %362 : vector<1x192x64xbf16> to vector<192x64xbf16>
    %364 = arith.truncf %361 : vector<8x192xf32> to vector<8x192xbf16>
    %cst_196 = arith.constant dense<0.000000e+00> : vector<8x64xf32>
    %365 = tpu.matmul %364, %363, %cst_196 {dimension_numbers = #tpu.dot_dimension_numbers<[1], [0], [0], [1], [0, 0, 1, 1], [], []>} : vector<8x192xbf16>, vector<192x64xbf16>, vector<8x64xf32> -> vector<8x64xf32>
    %c12 = arith.constant 12 : index
    %c0_197 = arith.constant 0 : index
    %366 = vector.load %arg11[%c12, %c0_197] : memref<27x128xf32, #tpu.memory_space<vmem>>, vector<1x64xf32>
    %367 = vector.broadcast %366 : vector<1x64xf32> to vector<8x64xf32>
    %368 = arith.addf %365, %367 : vector<8x64xf32>
    %cst_198 = arith.constant 0.000000e+00 : f32
    %cst_199 = arith.constant 6.000000e+00 : f32
    %369 = vector.broadcast %cst_198 : f32 to vector<8x64xf32>
    %370 = arith.maximumf %369, %368 : vector<8x64xf32>
    %371 = vector.broadcast %cst_199 : f32 to vector<8x64xf32>
    %372 = arith.minimumf %371, %370 : vector<8x64xf32>
    %c2_200 = arith.constant 2 : index
    %c0_201 = arith.constant 0 : index
    %c0_202 = arith.constant 0 : index
    %373 = vector.load %arg5[%c2_200, %c0_201, %c0_202] : memref<3x64x64xbf16, #tpu.memory_space<vmem>>, vector<1x64x64xbf16>
    %374 = vector.shape_cast %373 : vector<1x64x64xbf16> to vector<64x64xbf16>
    %375 = arith.truncf %372 : vector<8x64xf32> to vector<8x64xbf16>
    %cst_203 = arith.constant dense<0.000000e+00> : vector<8x64xf32>
    %376 = tpu.matmul %375, %374, %cst_203 {dimension_numbers = #tpu.dot_dimension_numbers<[1], [0], [0], [1], [0, 0, 1, 1], [], []>} : vector<8x64xbf16>, vector<64x64xbf16>, vector<8x64xf32> -> vector<8x64xf32>
    %c13 = arith.constant 13 : index
    %c0_204 = arith.constant 0 : index
    %377 = vector.load %arg11[%c13, %c0_204] : memref<27x128xf32, #tpu.memory_space<vmem>>, vector<1x64xf32>
    %378 = vector.broadcast %377 : vector<1x64xf32> to vector<8x64xf32>
    %379 = arith.addf %376, %378 : vector<8x64xf32>
    %cst_205 = arith.constant 0.000000e+00 : f32
    %cst_206 = arith.constant 6.000000e+00 : f32
    %380 = vector.broadcast %cst_205 : f32 to vector<8x64xf32>
    %381 = arith.maximumf %380, %379 : vector<8x64xf32>
    %382 = vector.broadcast %cst_206 : f32 to vector<8x64xf32>
    %383 = arith.minimumf %382, %381 : vector<8x64xf32>
    %c2_207 = arith.constant 2 : index
    %c0_208 = arith.constant 0 : index
    %c0_209 = arith.constant 0 : index
    %384 = vector.load %arg14[%c2_207, %c0_208, %c0_209] : memref<3x16x8xbf16, #tpu.memory_space<vmem>>, vector<1x16x8xbf16>
    %385 = vector.shape_cast %384 : vector<1x16x8xbf16> to vector<16x8xbf16>
    %386 = arith.truncf %383 : vector<8x64xf32> to vector<8x64xbf16>
    %cst_210 = arith.constant dense<0.000000e+00> : vector<16x64xf32>
    %387 = tpu.matmul %385, %386, %cst_210 {dimension_numbers = #tpu.dot_dimension_numbers<[1], [0], [0], [1], [0, 0, 1, 1], [], []>} : vector<16x8xbf16>, vector<8x64xbf16>, vector<16x64xf32> -> vector<16x64xf32>
    %c2_211 = arith.constant 2 : index
    %c0_212 = arith.constant 0 : index
    %c0_213 = arith.constant 0 : index
    %388 = vector.load %arg15[%c2_211, %c0_212, %c0_213] : memref<3x64x128xbf16, #tpu.memory_space<vmem>>, vector<1x64x128xbf16>
    %389 = vector.shape_cast %388 : vector<1x64x128xbf16> to vector<64x128xbf16>
    %390 = arith.truncf %387 : vector<16x64xf32> to vector<16x64xbf16>
    %cst_214 = arith.constant dense<0.000000e+00> : vector<16x128xf32>
    %391 = tpu.matmul %390, %389, %cst_214 {dimension_numbers = #tpu.dot_dimension_numbers<[1], [0], [0], [1], [0, 0, 1, 1], [], []>} : vector<16x64xbf16>, vector<64x128xbf16>, vector<16x128xf32> -> vector<16x128xf32>
    %392 = arith.addf %391, %85 : vector<16x128xf32>
    %c24 = arith.constant 24 : index
    %c0_215 = arith.constant 0 : index
    %393 = vector.load %arg11[%c24, %c0_215] : memref<27x128xf32, #tpu.memory_space<vmem>>, vector<1x128xf32>
    %394 = vector.broadcast %393 : vector<1x128xf32> to vector<16x128xf32>
    %395 = arith.mulf %392, %394 : vector<16x128xf32>
    %c25 = arith.constant 25 : index
    %c0_216 = arith.constant 0 : index
    %396 = vector.load %arg11[%c25, %c0_216] : memref<27x128xf32, #tpu.memory_space<vmem>>, vector<1x128xf32>
    %397 = vector.broadcast %396 : vector<1x128xf32> to vector<16x128xf32>
    %398 = arith.addf %395, %397 : vector<16x128xf32>
    %cst_217 = arith.constant 0.000000e+00 : f32
    %399 = vector.broadcast %cst_217 : f32 to vector<16x128xf32>
    %400 = arith.maximumf %398, %399 : vector<16x128xf32>
    %c0_218 = arith.constant 0 : index
    %c0_219 = arith.constant 0 : index
    %c0_220 = arith.constant 0 : index
    %401 = vector.load %arg10[%c0_218, %c0_219, %c0_220] : memref<2x128x128xbf16, #tpu.memory_space<vmem>>, vector<1x128x128xbf16>
    %402 = vector.shape_cast %401 : vector<1x128x128xbf16> to vector<128x128xbf16>
    %403 = arith.truncf %400 : vector<16x128xf32> to vector<16x128xbf16>
    %cst_221 = arith.constant dense<0.000000e+00> : vector<16x128xf32>
    %404 = tpu.matmul %403, %402, %cst_221 {dimension_numbers = #tpu.dot_dimension_numbers<[1], [0], [0], [1], [0, 0, 1, 1], [], []>} : vector<16x128xbf16>, vector<128x128xbf16>, vector<16x128xf32> -> vector<16x128xf32>
    %c26 = arith.constant 26 : index
    %c0_222 = arith.constant 0 : index
    %405 = vector.load %arg11[%c26, %c0_222] : memref<27x128xf32, #tpu.memory_space<vmem>>, vector<1x128xf32>
    %406 = vector.broadcast %405 : vector<1x128xf32> to vector<16x128xf32>
    %407 = arith.addf %404, %406 : vector<16x128xf32>
    %cst_223 = arith.constant 0.000000e+00 : f32
    %408 = vector.broadcast %cst_223 : f32 to vector<16x128xf32>
    %409 = arith.maximumf %407, %408 : vector<16x128xf32>
    %c1_224 = arith.constant 1 : index
    %c0_225 = arith.constant 0 : index
    %c0_226 = arith.constant 0 : index
    %410 = vector.load %arg10[%c1_224, %c0_225, %c0_226] : memref<2x128x128xbf16, #tpu.memory_space<vmem>>, vector<1x128x128xbf16>
    %411 = vector.shape_cast %410 : vector<1x128x128xbf16> to vector<128x128xbf16>
    %412 = arith.truncf %409 : vector<16x128xf32> to vector<16x128xbf16>
    %cst_227 = arith.constant dense<0.000000e+00> : vector<16x128xf32>
    %413 = tpu.matmul %412, %411, %cst_227 {dimension_numbers = #tpu.dot_dimension_numbers<[1], [0], [0], [1], [0, 0, 1, 1], [], []>} : vector<16x128xbf16>, vector<128x128xbf16>, vector<16x128xf32> -> vector<16x128xf32>
    %cst_228 = arith.constant 0.000000e+00 : f32
    %414 = vector.broadcast %cst_228 : f32 to vector<16x128xf32>
    %415 = arith.subf %414, %413 : vector<16x128xf32>
    %416 = math.exp %415 : vector<16x128xf32>
    %cst_229 = arith.constant 1.000000e+00 : f32
    %417 = vector.broadcast %cst_229 : f32 to vector<16x128xf32>
    %418 = arith.addf %417, %416 : vector<16x128xf32>
    %419 = tpu.reciprocal %418 {approx = true} : vector<16x128xf32> -> vector<16x128xf32>
    %cst_230 = arith.constant 1.000000e+00 : f32
    %420 = vector.broadcast %cst_230 : f32 to vector<16x128xf32>
    %421 = arith.addf %420, %419 : vector<16x128xf32>
    %422 = arith.mulf %421, %85 : vector<16x128xf32>
    %cst_231 = arith.constant 0.000000e+00 : f32
    %423 = vector.broadcast %cst_231 : f32 to vector<1x128xf32>
    %424 = vector.extract_strided_slice %422 {offsets = [0, 0], sizes = [15, 128], strides = [1, 1]} : vector<16x128xf32> to vector<15x128xf32>
    %425 = tpu.concatenate %423, %424 in 0 : vector<1x128xf32>, vector<15x128xf32> -> vector<16x128xf32>
    %426 = vector.extract_strided_slice %422 {offsets = [1, 0], sizes = [15, 128], strides = [1, 1]} : vector<16x128xf32> to vector<15x128xf32>
    %427 = tpu.concatenate %426, %423 in 0 : vector<15x128xf32>, vector<1x128xf32> -> vector<16x128xf32>
    %428 = tpu.concatenate %425, %422, %427 in 1 : vector<16x128xf32>, vector<16x128xf32>, vector<16x128xf32> -> vector<16x384xf32>
    %c3_232 = arith.constant 3 : index
    %c0_233 = arith.constant 0 : index
    %c0_234 = arith.constant 0 : index
    %429 = vector.load %arg2[%c3_232, %c0_233, %c0_234] : memref<4x384x128xbf16, #tpu.memory_space<vmem>>, vector<1x384x128xbf16>
    %430 = vector.shape_cast %429 : vector<1x384x128xbf16> to vector<384x128xbf16>
    %431 = arith.truncf %428 : vector<16x384xf32> to vector<16x384xbf16>
    %cst_235 = arith.constant dense<0.000000e+00> : vector<16x128xf32>
    %432 = tpu.matmul %431, %430, %cst_235 {dimension_numbers = #tpu.dot_dimension_numbers<[1], [0], [0], [1], [0, 0, 1, 1], [], []>} : vector<16x384xbf16>, vector<384x128xbf16>, vector<16x128xf32> -> vector<16x128xf32>
    %c6 = arith.constant 6 : index
    %c0_236 = arith.constant 0 : index
    %433 = vector.load %arg11[%c6, %c0_236] : memref<27x128xf32, #tpu.memory_space<vmem>>, vector<1x128xf32>
    %434 = vector.broadcast %433 : vector<1x128xf32> to vector<16x128xf32>
    %435 = arith.addf %432, %434 : vector<16x128xf32>
    %cst_237 = arith.constant 0.000000e+00 : f32
    %cst_238 = arith.constant 6.000000e+00 : f32
    %436 = vector.broadcast %cst_237 : f32 to vector<16x128xf32>
    %437 = arith.maximumf %436, %435 : vector<16x128xf32>
    %438 = vector.broadcast %cst_238 : f32 to vector<16x128xf32>
    %439 = arith.minimumf %438, %437 : vector<16x128xf32>
    %c3_239 = arith.constant 3 : index
    %c0_240 = arith.constant 0 : index
    %c0_241 = arith.constant 0 : index
    %440 = vector.load %arg3[%c3_239, %c0_240, %c0_241] : memref<4x128x128xbf16, #tpu.memory_space<vmem>>, vector<1x128x128xbf16>
    %441 = vector.shape_cast %440 : vector<1x128x128xbf16> to vector<128x128xbf16>
    %442 = arith.truncf %439 : vector<16x128xf32> to vector<16x128xbf16>
    %cst_242 = arith.constant dense<0.000000e+00> : vector<16x128xf32>
    %443 = tpu.matmul %442, %441, %cst_242 {dimension_numbers = #tpu.dot_dimension_numbers<[1], [0], [0], [1], [0, 0, 1, 1], [], []>} : vector<16x128xbf16>, vector<128x128xbf16>, vector<16x128xf32> -> vector<16x128xf32>
    %c7 = arith.constant 7 : index
    %c0_243 = arith.constant 0 : index
    %444 = vector.load %arg11[%c7, %c0_243] : memref<27x128xf32, #tpu.memory_space<vmem>>, vector<1x128xf32>
    %445 = vector.broadcast %444 : vector<1x128xf32> to vector<16x128xf32>
    %446 = arith.addf %443, %445 : vector<16x128xf32>
    %cst_244 = arith.constant 0.000000e+00 : f32
    %cst_245 = arith.constant 6.000000e+00 : f32
    %447 = vector.broadcast %cst_244 : f32 to vector<16x128xf32>
    %448 = arith.maximumf %447, %446 : vector<16x128xf32>
    %449 = vector.broadcast %cst_245 : f32 to vector<16x128xf32>
    %450 = arith.minimumf %449, %448 : vector<16x128xf32>
    %c0_246 = arith.constant 0 : index
    %c0_247 = arith.constant 0 : index
    %c0_248 = arith.constant 0 : index
    %451 = vector.load %arg16[%c0_246, %c0_247, %c0_248] : memref<1x16x128xf32, #tpu.memory_space<vmem>>, vector<1x16x128xf32>
    %452 = vector.shape_cast %451 : vector<1x16x128xf32> to vector<16x128xf32>
    %453 = vector.shape_cast %450 : vector<16x128xf32> to vector<1x16x128xf32>
    tpu.vector_store %arg16[%c0_246, %c0_247, %c0_248], %453 {strides = array<i32>} : memref<1x16x128xf32, #tpu.memory_space<vmem>>, vector<1x16x128xf32>,
    return
  }
  func.func @transform_0(%arg0: i32) -> (i32, i32, i32) {
    %c0_i32 = arith.constant 0 : i32
    %c0_i32_0 = arith.constant 0 : i32
    %c0_i32_1 = arith.constant 0 : i32
    return %arg0, %c0_i32, %c0_i32_0 : i32, i32, i32
  }
  func.func @transform_1(%arg0: i32) -> (i32, i32, i32) {
    %c0_i32 = arith.constant 0 : i32
    %c0_i32_0 = arith.constant 0 : i32
    %c0_i32_1 = arith.constant 0 : i32
    %c0_i32_2 = arith.constant 0 : i32
    return %c0_i32, %c0_i32_0, %c0_i32_1 : i32, i32, i32
  }
  func.func @transform_2(%arg0: i32) -> (i32, i32, i32) {
    %c0_i32 = arith.constant 0 : i32
    %c0_i32_0 = arith.constant 0 : i32
    %c0_i32_1 = arith.constant 0 : i32
    %c0_i32_2 = arith.constant 0 : i32
    return %c0_i32, %c0_i32_0, %c0_i32_1 : i32, i32, i32
  }
  func.func @transform_3(%arg0: i32) -> (i32, i32, i32) {
    %c0_i32 = arith.constant 0 : i32
    %c0_i32_0 = arith.constant 0 : i32
    %c0_i32_1 = arith.constant 0 : i32
    %c0_i32_2 = arith.constant 0 : i32
    return %c0_i32, %c0_i32_0, %c0_i32_1 : i32, i32, i32
  }
  func.func @transform_4(%arg0: i32) -> (i32, i32, i32) {
    %c0_i32 = arith.constant 0 : i32
    %c0_i32_0 = arith.constant 0 : i32
    %c0_i32_1 = arith.constant 0 : i32
    %c0_i32_2 = arith.constant 0 : i32
    return %c0_i32, %c0_i32_0, %c0_i32_1 : i32, i32, i32
  }
  func.func @transform_5(%arg0: i32) -> (i32, i32, i32) {
    %c0_i32 = arith.constant 0 : i32
    %c0_i32_0 = arith.constant 0 : i32
    %c0_i32_1 = arith.constant 0 : i32
    %c0_i32_2 = arith.constant 0 : i32
    return %c0_i32, %c0_i32_0, %c0_i32_1 : i32, i32, i32
  }
  func.func @transform_6(%arg0: i32) -> (i32, i32, i32) {
    %c0_i32 = arith.constant 0 : i32
    %c0_i32_0 = arith.constant 0 : i32
    %c0_i32_1 = arith.constant 0 : i32
    %c0_i32_2 = arith.constant 0 : i32
    return %c0_i32, %c0_i32_0, %c0_i32_1 : i32, i32, i32
  }
  func.func @transform_7(%arg0: i32) -> (i32, i32, i32) {
    %c0_i32 = arith.constant 0 : i32
    %c0_i32_0 = arith.constant 0 : i32
    %c0_i32_1 = arith.constant 0 : i32
    %c0_i32_2 = arith.constant 0 : i32
    return %c0_i32, %c0_i32_0, %c0_i32_1 : i32, i32, i32
  }
  func.func @transform_8(%arg0: i32) -> (i32, i32, i32) {
    %c0_i32 = arith.constant 0 : i32
    %c0_i32_0 = arith.constant 0 : i32
    %c0_i32_1 = arith.constant 0 : i32
    %c0_i32_2 = arith.constant 0 : i32
    return %c0_i32, %c0_i32_0, %c0_i32_1 : i32, i32, i32
  }
  func.func @transform_9(%arg0: i32) -> (i32, i32, i32) {
    %c0_i32 = arith.constant 0 : i32
    %c0_i32_0 = arith.constant 0 : i32
    %c0_i32_1 = arith.constant 0 : i32
    %c0_i32_2 = arith.constant 0 : i32
    return %c0_i32, %c0_i32_0, %c0_i32_1 : i32, i32, i32
  }
  func.func @transform_10(%arg0: i32) -> (i32, i32) {
    %c0_i32 = arith.constant 0 : i32
    %c0_i32_0 = arith.constant 0 : i32
    %c0_i32_1 = arith.constant 0 : i32
    return %c0_i32, %c0_i32_0 : i32, i32
  }
  func.func @transform_11(%arg0: i32) -> (i32, i32, i32) {
    %c0_i32 = arith.constant 0 : i32
    %c0_i32_0 = arith.constant 0 : i32
    %c0_i32_1 = arith.constant 0 : i32
    %c0_i32_2 = arith.constant 0 : i32
    return %c0_i32, %c0_i32_0, %c0_i32_1 : i32, i32, i32
  }
  func.func @transform_12(%arg0: i32) -> (i32, i32, i32) {
    %c0_i32 = arith.constant 0 : i32
    %c0_i32_0 = arith.constant 0 : i32
    %c0_i32_1 = arith.constant 0 : i32
    %c0_i32_2 = arith.constant 0 : i32
    return %c0_i32, %c0_i32_0, %c0_i32_1 : i32, i32, i32
  }
  func.func @transform_13(%arg0: i32) -> (i32, i32, i32) {
    %c0_i32 = arith.constant 0 : i32
    %c0_i32_0 = arith.constant 0 : i32
    %c0_i32_1 = arith.constant 0 : i32
    %c0_i32_2 = arith.constant 0 : i32
    return %c0_i32, %c0_i32_0, %c0_i32_1 : i32, i32, i32
  }
  func.func @transform_14(%arg0: i32) -> (i32, i32, i32) {
    %c0_i32 = arith.constant 0 : i32
    %c0_i32_0 = arith.constant 0 : i32
    %c0_i32_1 = arith.constant 0 : i32
    %c0_i32_2 = arith.constant 0 : i32
    return %c0_i32, %c0_i32_0, %c0_i32_1 : i32, i32, i32
  }
  func.func @transform_15(%arg0: i32) -> (i32, i32, i32) {
    %c0_i32 = arith.constant 0 : i32
    %c0_i32_0 = arith.constant 0 : i32
    %c0_i32_1 = arith.constant 0 : i32
    return %arg0, %c0_i32, %c0_i32_0 : i32, i32, i32
  }
}

</mosaic_0001>

<llo_original>
// kernel: attention_module_stage1.1
$region0: #{attention_module_stage1.1}
  #allocation0 [shape = 'u32[]', space=smem, size = 0x4, offset = 0x4, fixed_abs, tag = 'smem constant byte address 0x4 - core index']
  #allocation1 [shape = 'u32[144,128]{1,0:T(1,128)}', space=vmem, size = 0x12000, scoped, tag = 'internal scratch']
  %s0 = inlined_call_operand.vmem [shape: f32[2,16,128], index: 0, kind: input, shape index: {}]
  %s1 = inlined_call_operand.vmem [shape: bf16[4,384,128], index: 1, kind: input, shape index: {}]
  %s2 = inlined_call_operand.vmem [shape: bf16[4,128,128], index: 2, kind: input, shape index: {}]
  %s3 = inlined_call_operand.vmem [shape: bf16[3,192,64], index: 3, kind: input, shape index: {}]
  %s4 = inlined_call_operand.vmem [shape: bf16[3,64,64], index: 4, kind: input, shape index: {}]
  %s5 = inlined_call_operand.vmem [shape: bf16[3,96,32], index: 5, kind: input, shape index: {}]
  %s6 = inlined_call_operand.vmem [shape: bf16[3,32,32], index: 6, kind: input, shape index: {}]
  %s7 = inlined_call_operand.vmem [shape: bf16[2,48,16], index: 7, kind: input, shape index: {}]
  %s8 = inlined_call_operand.vmem [shape: bf16[2,16,16], index: 8, kind: input, shape index: {}]
  %s9 = inlined_call_operand.vmem [shape: bf16[2,128,128], index: 9, kind: input, shape index: {}]
  %s10 = inlined_call_operand.vmem [shape: f32[27,128], index: 10, kind: input, shape index: {}]
  %s11 = inlined_call_operand.vmem [shape: bf16[3,24,16], index: 11, kind: input, shape index: {}]
  %s12 = inlined_call_operand.vmem [shape: bf16[3,128,192], index: 12, kind: input, shape index: {}]
  %s13 = inlined_call_operand.vmem [shape: bf16[3,16,8], index: 13, kind: input, shape index: {}]
  %s14 = inlined_call_operand.vmem [shape: bf16[3,64,128], index: 14, kind: input, shape index: {}]
  %s15 = inlined_call_operand.vmem [shape: f32[2,16,128], index: 15, kind: output, shape index: {}]
  %s16 = sld [smem:[#allocation0]]
  $region93: #{attention_module_stage1.1} parent=0
    _
  %s18 = ssub.s32 1, %s16
  %s19 = scalar_select 0, %s18, %s16
  loop: start=0, step=1, limit=4
  $region2: #{attention_module_stage1.1} parent=0 // loop_pre_header
    _
  $region3: #{attention_module_stage1.1} parent=0 // loop_header
    %s21 = sphi 0, %s25
    %p22 = scmp.ge.s32.totalorder %s21, 4
    %s31 = sphi 0, %s33
    %s34 = sphi 0, %s31
    %s35 = sphi 0, %s34
    %s51 = sphi 0, %s35
    %s55 = sphi 0, %s55
    %s57 = sphi 0, %s55
    %s58 = sphi 0, %s57
    %s72 = sphi 0, %s58
    %s76 = sphi 0, %s76
    %s78 = sphi 0, %s76
    %s79 = sphi 0, %s78
    %s93 = sphi 0, %s79
    %s97 = sphi 0, %s97
    %s99 = sphi 0, %s97
    %s100 = sphi 0, %s99
    %s114 = sphi 0, %s100
    %s118 = sphi 0, %s118
    %s120 = sphi 0, %s118
    %s121 = sphi 0, %s120
    %s135 = sphi 0, %s121
    %s139 = sphi 0, %s139
    %s141 = sphi 0, %s139
    %s142 = sphi 0, %s141
    %s156 = sphi 0, %s142
    %s160 = sphi 0, %s160
    %s162 = sphi 0, %s160
    %s163 = sphi 0, %s162
    %s177 = sphi 0, %s163
    %s181 = sphi 0, %s181
    %s183 = sphi 0, %s181
    %s184 = sphi 0, %s183
    %s198 = sphi 0, %s184
    %s202 = sphi 0, %s202
    %s204 = sphi 0, %s202
    %s205 = sphi 0, %s204
    %s219 = sphi 0, %s205
    %s223 = sphi 0, %s223
    %s225 = sphi 0, %s223
    %s226 = sphi 0, %s225
    %s240 = sphi 0, %s226
    %s244 = sphi 0, %s244
    %s246 = sphi 0, %s244
    %s247 = sphi 0, %s246
    %s261 = sphi 0, %s247
    %s265 = sphi 0, %s265
    %s267 = sphi 0, %s265
    %s268 = sphi 0, %s267
    %s282 = sphi 0, %s268
    %s286 = sphi 0, %s286
    %s288 = sphi 0, %s286
    %s289 = sphi 0, %s288
    %s303 = sphi 0, %s289
    %s307 = sphi 0, %s307
    %s309 = sphi 0, %s307
    %s310 = sphi 0, %s309
    %s324 = sphi 0, %s310
    %s328 = sphi 0, %s328
    %s330 = sphi 0, %s328
    %s331 = sphi 0, %s330
    %s345 = sphi 0, %s331
    %s351 = sphi 0, %s353
    %s354 = sphi 0, %s351
    %s355 = sphi 0, %s354
    %s371 = sphi 0, %s355
  $region4: #{attention_module_stage1.1} parent=0 // loop_header_branch
    %24 = sbr.rel (%p22) target = $region8
  $region5: #{attention_module_stage1.1} parent=0 // loop_body
    %s26 = ssub.s32 %s21, 1
    %s27 = ssub.s32 %s21, 2
    %s28 = sadd.s32 %s21, 1
    %s29 = ssub.s32 %s21, %s28
    %p30 = scmp.eq.s32.totalorder %s29, 0
    %s32 = sadd.s32 %s31, 1
    %s33 = scalar_select %p30, %s31, %s32
    %p36 = pneg %p30
    %p37 = scmp.eq.s32.totalorder %s21, 1
    %p38 = por %p36, %p37
    %p39 = scmp.ne.s32.totalorder %s31, %s34
    %p40 = scmp.eq.s32.totalorder %s21, 0
    %p41 = por %p39, %p40
    %p42 = scmp.ne.s32.totalorder %s31, %s34
    %p43 = scmp.eq.s32.totalorder %s26, 1
    %p44 = por %p42, %p43
    %p45 = scmp.ne.s32.totalorder %s34, %s35
    %p46 = scmp.eq.s32.totalorder %s26, 0
    %p47 = por %p45, %p46
    %p48 = scmp.ne.s32.totalorder %s34, %s35
    %p49 = scmp.eq.s32.totalorder %s27, 1
    %p50 = por %p48, %p49
    %p52 = scmp.ne.s32.totalorder %s35, %s51
    %p53 = scmp.eq.s32.totalorder %s27, 0
    %p54 = por %p52, %p53
    %s56 = sadd.s32 %s55, 1
    %p59 = scmp.eq.s32.totalorder %s21, 1
    %p60 = scmp.ne.s32.totalorder %s55, %s57
    %p61 = scmp.eq.s32.totalorder %s21, 0
    %p62 = por %p60, %p61
    %p63 = scmp.ne.s32.totalorder %s55, %s57
    %p64 = scmp.eq.s32.totalorder %s26, 1
    %p65 = por %p63, %p64
    %p66 = scmp.ne.s32.totalorder %s57, %s58
    %p67 = scmp.eq.s32.totalorder %s26, 0
    %p68 = por %p66, %p67
    %p69 = scmp.ne.s32.totalorder %s57, %s58
    %p70 = scmp.eq.s32.totalorder %s27, 1
    %p71 = por %p69, %p70
    %p73 = scmp.ne.s32.totalorder %s58, %s72
    %p74 = scmp.eq.s32.totalorder %s27, 0
    %p75 = por %p73, %p74
    %s77 = sadd.s32 %s76, 1
    %p80 = scmp.eq.s32.totalorder %s21, 1
    %p81 = scmp.ne.s32.totalorder %s76, %s78
    %p82 = scmp.eq.s32.totalorder %s21, 0
    %p83 = por %p81, %p82
    %p84 = scmp.ne.s32.totalorder %s76, %s78
    %p85 = scmp.eq.s32.totalorder %s26, 1
    %p86 = por %p84, %p85
    %p87 = scmp.ne.s32.totalorder %s78, %s79
    %p88 = scmp.eq.s32.totalorder %s26, 0
    %p89 = por %p87, %p88
    %p90 = scmp.ne.s32.totalorder %s78, %s79
    %p91 = scmp.eq.s32.totalorder %s27, 1
    %p92 = por %p90, %p91
    %p94 = scmp.ne.s32.totalorder %s79, %s93
    %p95 = scmp.eq.s32.totalorder %s27, 0
    %p96 = por %p94, %p95
    %s98 = sadd.s32 %s97, 1
    %p101 = scmp.eq.s32.totalorder %s21, 1
    %p102 = scmp.ne.s32.totalorder %s97, %s99
    %p103 = scmp.eq.s32.totalorder %s21, 0
    %p104 = por %p102, %p103
    %p105 = scmp.ne.s32.totalorder %s97, %s99
    %p106 = scmp.eq.s32.totalorder %s26, 1
    %p107 = por %p105, %p106
    %p108 = scmp.ne.s32.totalorder %s99, %s100
    %p109 = scmp.eq.s32.totalorder %s26, 0
    %p110 = por %p108, %p109
    %p111 = scmp.ne.s32.totalorder %s99, %s100
    %p112 = scmp.eq.s32.totalorder %s27, 1
    %p113 = por %p111, %p112
    %p115 = scmp.ne.s32.totalorder %s100, %s114
    %p116 = scmp.eq.s32.totalorder %s27, 0
    %p117 = por %p115, %p116
    %s119 = sadd.s32 %s118, 1
    %p122 = scmp.eq.s32.totalorder %s21, 1
    %p123 = scmp.ne.s32.totalorder %s118, %s120
    %p124 = scmp.eq.s32.totalorder %s21, 0
    %p125 = por %p123, %p124
    %p126 = scmp.ne.s32.totalorder %s118, %s120
    %p127 = scmp.eq.s32.totalorder %s26, 1
    %p128 = por %p126, %p127
    %p129 = scmp.ne.s32.totalorder %s120, %s121
    %p130 = scmp.eq.s32.totalorder %s26, 0
    %p131 = por %p129, %p130
    %p132 = scmp.ne.s32.totalorder %s120, %s121
    %p133 = scmp.eq.s32.totalorder %s27, 1
    %p134 = por %p132, %p133
    %p136 = scmp.ne.s32.totalorder %s121, %s135
    %p137 = scmp.eq.s32.totalorder %s27, 0
    %p138 = por %p136, %p137
    %s140 = sadd.s32 %s139, 1
    %p143 = scmp.eq.s32.totalorder %s21, 1
    %p144 = scmp.ne.s32.totalorder %s139, %s141
    %p145 = scmp.eq.s32.totalorder %s21, 0
    %p146 = por %p144, %p145
    %p147 = scmp.ne.s32.totalorder %s139, %s141
    %p148 = scmp.eq.s32.totalorder %s26, 1
    %p149 = por %p147, %p148
    %p150 = scmp.ne.s32.totalorder %s141, %s142
    %p151 = scmp.eq.s32.totalorder %s26, 0
    %p152 = por %p150, %p151
    %p153 = scmp.ne.s32.totalorder %s141, %s142
    %p154 = scmp.eq.s32.totalorder %s27, 1
    %p155 = por %p153, %p154
    %p157 = scmp.ne.s32.totalorder %s142, %s156
    %p158 = scmp.eq.s32.totalorder %s27, 0
    %p159 = por %p157, %p158
    %s161 = sadd.s32 %s160, 1
    %p164 = scmp.eq.s32.totalorder %s21, 1
    %p165 = scmp.ne.s32.totalorder %s160, %s162
    %p166 = scmp.eq.s32.totalorder %s21, 0
    %p167 = por %p165, %p166
    %p168 = scmp.ne.s32.totalorder %s160, %s162
    %p169 = scmp.eq.s32.totalorder %s26, 1
    %p170 = por %p168, %p169
    %p171 = scmp.ne.s32.totalorder %s162, %s163
    %p172 = scmp.eq.s32.totalorder %s26, 0
    %p173 = por %p171, %p172
    %p174 = scmp.ne.s32.totalorder %s162, %s163
    %p175 = scmp.eq.s32.totalorder %s27, 1
    %p176 = por %p174, %p175
    %p178 = scmp.ne.s32.totalorder %s163, %s177
    %p179 = scmp.eq.s32.totalorder %s27, 0
    %p180 = por %p178, %p179
    %s182 = sadd.s32 %s181, 1
    %p185 = scmp.eq.s32.totalorder %s21, 1
    %p186 = scmp.ne.s32.totalorder %s181, %s183
    %p187 = scmp.eq.s32.totalorder %s21, 0
    %p188 = por %p186, %p187
    %p189 = scmp.ne.s32.totalorder %s181, %s183
    %p190 = scmp.eq.s32.totalorder %s26, 1
    %p191 = por %p189, %p190
    %p192 = scmp.ne.s32.totalorder %s183, %s184
    %p193 = scmp.eq.s32.totalorder %s26, 0
    %p194 = por %p192, %p193
    %p195 = scmp.ne.s32.totalorder %s183, %s184
    %p196 = scmp.eq.s32.totalorder %s27, 1
    %p197 = por %p195, %p196
    %p199 = scmp.ne.s32.totalorder %s184, %s198
    %p200 = scmp.eq.s32.totalorder %s27, 0
    %p201 = por %p199, %p200
    %s203 = sadd.s32 %s202, 1
    %p206 = scmp.eq.s32.totalorder %s21, 1
    %p207 = scmp.ne.s32.totalorder %s202, %s204
    %p208 = scmp.eq.s32.totalorder %s21, 0
    %p209 = por %p207, %p208
    %p210 = scmp.ne.s32.totalorder %s202, %s204
    %p211 = scmp.eq.s32.totalorder %s26, 1
    %p212 = por %p210, %p211
    %p213 = scmp.ne.s32.totalorder %s204, %s205
    %p214 = scmp.eq.s32.totalorder %s26, 0
    %p215 = por %p213, %p214
    %p216 = scmp.ne.s32.totalorder %s204, %s205
    %p217 = scmp.eq.s32.totalorder %s27, 1
    %p218 = por %p216, %p217
    %p220 = scmp.ne.s32.totalorder %s205, %s219
    %p221 = scmp.eq.s32.totalorder %s27, 0
    %p222 = por %p220, %p221
    %s224 = sadd.s32 %s223, 1
    %p227 = scmp.eq.s32.totalorder %s21, 1
    %p228 = scmp.ne.s32.totalorder %s223, %s225
    %p229 = scmp.eq.s32.totalorder %s21, 0
    %p230 = por %p228, %p229
    %p231 = scmp.ne.s32.totalorder %s223, %s225
    %p232 = scmp.eq.s32.totalorder %s26, 1
    %p233 = por %p231, %p232
    %p234 = scmp.ne.s32.totalorder %s225, %s226
    %p235 = scmp.eq.s32.totalorder %s26, 0
    %p236 = por %p234, %p235
    %p237 = scmp.ne.s32.totalorder %s225, %s226
    %p238 = scmp.eq.s32.totalorder %s27, 1
    %p239 = por %p237, %p238
    %p241 = scmp.ne.s32.totalorder %s226, %s240
    %p242 = scmp.eq.s32.totalorder %s27, 0
    %p243 = por %p241, %p242
    %s245 = sadd.s32 %s244, 1
    %p248 = scmp.eq.s32.totalorder %s21, 1
    %p249 = scmp.ne.s32.totalorder %s244, %s246
    %p250 = scmp.eq.s32.totalorder %s21, 0
    %p251 = por %p249, %p250
    %p252 = scmp.ne.s32.totalorder %s244, %s246
    %p253 = scmp.eq.s32.totalorder %s26, 1
    %p254 = por %p252, %p253
    %p255 = scmp.ne.s32.totalorder %s246, %s247
    %p256 = scmp.eq.s32.totalorder %s26, 0
    %p257 = por %p255, %p256
    %p258 = scmp.ne.s32.totalorder %s246, %s247
    %p259 = scmp.eq.s32.totalorder %s27, 1
    %p260 = por %p258, %p259
    %p262 = scmp.ne.s32.totalorder %s247, %s261
    %p263 = scmp.eq.s32.totalorder %s27, 0
    %p264 = por %p262, %p263
    %s266 = sadd.s32 %s265, 1
    %p269 = scmp.eq.s32.totalorder %s21, 1
    %p270 = scmp.ne.s32.totalorder %s265, %s267
    %p271 = scmp.eq.s32.totalorder %s21, 0
    %p272 = por %p270, %p271
    %p273 = scmp.ne.s32.totalorder %s265, %s267
    %p274 = scmp.eq.s32.totalorder %s26, 1
    %p275 = por %p273, %p274
    %p276 = scmp.ne.s32.totalorder %s267, %s268
    %p277 = scmp.eq.s32.totalorder %s26, 0
    %p278 = por %p276, %p277
    %p279 = scmp.ne.s32.totalorder %s267, %s268
    %p280 = scmp.eq.s32.totalorder %s27, 1
    %p281 = por %p279, %p280
    %p283 = scmp.ne.s32.totalorder %s268, %s282
    %p284 = scmp.eq.s32.totalorder %s27, 0
    %p285 = por %p283, %p284
    %s287 = sadd.s32 %s286, 1
    %p290 = scmp.eq.s32.totalorder %s21, 1
    %p291 = scmp.ne.s32.totalorder %s286, %s288
    %p292 = scmp.eq.s32.totalorder %s21, 0
    %p293 = por %p291, %p292
    %p294 = scmp.ne.s32.totalorder %s286, %s288
    %p295 = scmp.eq.s32.totalorder %s26, 1
    %p296 = por %p294, %p295
    %p297 = scmp.ne.s32.totalorder %s288, %s289
    %p298 = scmp.eq.s32.totalorder %s26, 0
    %p299 = por %p297, %p298
    %p300 = scmp.ne.s32.totalorder %s288, %s289
    %p301 = scmp.eq.s32.totalorder %s27, 1
    %p302 = por %p300, %p301
    %p304 = scmp.ne.s32.totalorder %s289, %s303
    %p305 = scmp.eq.s32.totalorder %s27, 0
    %p306 = por %p304, %p305
    %s308 = sadd.s32 %s307, 1
    %p311 = scmp.eq.s32.totalorder %s21, 1
    %p312 = scmp.ne.s32.totalorder %s307, %s309
    %p313 = scmp.eq.s32.totalorder %s21, 0
    %p314 = por %p312, %p313
    %p315 = scmp.ne.s32.totalorder %s307, %s309
    %p316 = scmp.eq.s32.totalorder %s26, 1
    %p317 = por %p315, %p316
    %p318 = scmp.ne.s32.totalorder %s309, %s310
    %p319 = scmp.eq.s32.totalorder %s26, 0
    %p320 = por %p318, %p319
    %p321 = scmp.ne.s32.totalorder %s309, %s310
    %p322 = scmp.eq.s32.totalorder %s27, 1
    %p323 = por %p321, %p322
    %p325 = scmp.ne.s32.totalorder %s310, %s324
    %p326 = scmp.eq.s32.totalorder %s27, 0
    %p327 = por %p325, %p326
    %s329 = sadd.s32 %s328, 1
    %p332 = scmp.eq.s32.totalorder %s21, 1
    %p333 = scmp.ne.s32.totalorder %s328, %s330
    %p334 = scmp.eq.s32.totalorder %s21, 0
    %p335 = por %p333, %p334
    %p336 = scmp.ne.s32.totalorder %s328, %s330
    %p337 = scmp.eq.s32.totalorder %s26, 1
    %p338 = por %p336, %p337
    %p339 = scmp.ne.s32.totalorder %s330, %s331
    %p340 = scmp.eq.s32.totalorder %s26, 0
    %p341 = por %p339, %p340
    %p342 = scmp.ne.s32.totalorder %s330, %s331
    %p343 = scmp.eq.s32.totalorder %s27, 1
    %p344 = por %p342, %p343
    %p346 = scmp.ne.s32.totalorder %s331, %s345
    %p347 = scmp.eq.s32.totalorder %s27, 0
    %p348 = por %p346, %p347
    %s349 = ssub.s32 %s21, %s28
    %p350 = scmp.eq.s32.totalorder %s349, 0
    %s352 = sadd.s32 %s351, 1
    %s353 = scalar_select %p350, %s351, %s352
    %p356 = pneg %p350
    %p357 = scmp.eq.s32.totalorder %s21, 1
    %p358 = por %p356, %p357
    %p359 = scmp.ne.s32.totalorder %s351, %s354
    %p360 = scmp.eq.s32.totalorder %s21, 0
    %p361 = por %p359, %p360
    %p362 = scmp.ne.s32.totalorder %s351, %s354
    %p363 = scmp.eq.s32.totalorder %s26, 1
    %p364 = por %p362, %p363
    %p365 = scmp.ne.s32.totalorder %s354, %s355
    %p366 = scmp.eq.s32.totalorder %s26, 0
    %p367 = por %p365, %p366
    %p368 = scmp.ne.s32.totalorder %s354, %s355
    %p369 = scmp.eq.s32.totalorder %s27, 1
    %p370 = por %p368, %p369
    %p372 = scmp.ne.s32.totalorder %s355, %s371
    %p373 = scmp.eq.s32.totalorder %s27, 0
    %p374 = por %p372, %p373
    %p375 = scmp.le.s32.totalorder 1, %s21
    %p376 = scmp.lt.s32.totalorder %s21, 3
    %p377 = pnand %p375, %p376
    %p378 = pneg %p377
    // Predicated region
    $region9: #{attention_module_stage1.1} parent=5 // pred_check
      _
    $region10: #{attention_module_stage1.1} parent=5 // pred_check_branch
      %380 = sbr.rel (%p377) target = $region12
    $region11: #{attention_module_stage1.1} parent=5 // pred_region
      %s381 = ssub.s32 %s21, 1
      // Predicated region
      $region13: #{attention_module_stage1.1} parent=11 // pred_check
        %p382 = pneg %p68
      $region14: #{attention_module_stage1.1} parent=11 // pred_check_branch
        %384 = sbr.rel (%p382) target = $region16
      $region15: #{attention_module_stage1.1} parent=11 // pred_region
        _
      $region16: #{attention_module_stage1.1} parent=11 // pred_fallthru
        _
      // Predicated region
      $region17: #{attention_module_stage1.1} parent=11 // pred_check
        %p385 = pneg %p89
      $region18: #{attention_module_stage1.1} parent=11 // pred_check_branch
        %387 = sbr.rel (%p385) target = $region20
      $region19: #{attention_module_stage1.1} parent=11 // pred_region
        _
      $region20: #{attention_module_stage1.1} parent=11 // pred_fallthru
        _
      // Predicated region
      $region21: #{attention_module_stage1.1} parent=11 // pred_check
        %p388 = pneg %p110
      $region22: #{attention_module_stage1.1} parent=11 // pred_check_branch
        %390 = sbr.rel (%p388) target = $region24
      $region23: #{attention_module_stage1.1} parent=11 // pred_region
        _
      $region24: #{attention_module_stage1.1} parent=11 // pred_fallthru
        _
      // Predicated region
      $region25: #{attention_module_stage1.1} parent=11 // pred_check
        %p391 = pneg %p131
      $region26: #{attention_module_stage1.1} parent=11 // pred_check_branch
        %393 = sbr.rel (%p391) target = $region28
      $region27: #{attention_module_stage1.1} parent=11 // pred_region
        _
      $region28: #{attention_module_stage1.1} parent=11 // pred_fallthru
        _
      // Predicated region
      $region29: #{attention_module_stage1.1} parent=11 // pred_check
        %p394 = pneg %p152
      $region30: #{attention_module_stage1.1} parent=11 // pred_check_branch
        %396 = sbr.rel (%p394) target = $region32
      $region31: #{attention_module_stage1.1} parent=11 // pred_region
        _
      $region32: #{attention_module_stage1.1} parent=11 // pred_fallthru
        _
      // Predicated region
      $region33: #{attention_module_stage1.1} parent=11 // pred_check
        %p397 = pneg %p173
      $region34: #{attention_module_stage1.1} parent=11 // pred_check_branch
        %399 = sbr.rel (%p397) target = $region36
      $region35: #{attention_module_stage1.1} parent=11 // pred_region
        _
      $region36: #{attention_module_stage1.1} parent=11 // pred_fallthru
        _
      // Predicated region
      $region37: #{attention_module_stage1.1} parent=11 // pred_check
        %p400 = pneg %p194
      $region38: #{attention_module_stage1.1} parent=11 // pred_check_branch
        %402 = sbr.rel (%p400) target = $region40
      $region39: #{attention_module_stage1.1} parent=11 // pred_region
        _
      $region40: #{attention_module_stage1.1} parent=11 // pred_fallthru
        _
      // Predicated region
      $region41: #{attention_module_stage1.1} parent=11 // pred_check
        %p403 = pneg %p215
      $region42: #{attention_module_stage1.1} parent=11 // pred_check_branch
        %405 = sbr.rel (%p403) target = $region44
      $region43: #{attention_module_stage1.1} parent=11 // pred_region
        _
      $region44: #{attention_module_stage1.1} parent=11 // pred_fallthru
        _
      // Predicated region
      $region45: #{attention_module_stage1.1} parent=11 // pred_check
        %p406 = pneg %p236
      $region46: #{attention_module_stage1.1} parent=11 // pred_check_branch
        %408 = sbr.rel (%p406) target = $region48
      $region47: #{attention_module_stage1.1} parent=11 // pred_region
        _
      $region48: #{attention_module_stage1.1} parent=11 // pred_fallthru
        _
      // Predicated region
      $region49: #{attention_module_stage1.1} parent=11 // pred_check
        %p409 = pneg %p257
      $region50: #{attention_module_stage1.1} parent=11 // pred_check_branch
        %411 = sbr.rel (%p409) target = $region52
      $region51: #{attention_module_stage1.1} parent=11 // pred_region
        _
      $region52: #{attention_module_stage1.1} parent=11 // pred_fallthru
        _
      // Predicated region
      $region53: #{attention_module_stage1.1} parent=11 // pred_check
        %p412 = pneg %p278
      $region54: #{attention_module_stage1.1} parent=11 // pred_check_branch
        %414 = sbr.rel (%p412) target = $region56
      $region55: #{attention_module_stage1.1} parent=11 // pred_region
        _
      $region56: #{attention_module_stage1.1} parent=11 // pred_fallthru
        _
      // Predicated region
      $region57: #{attention_module_stage1.1} parent=11 // pred_check
        %p415 = pneg %p299
      $region58: #{attention_module_stage1.1} parent=11 // pred_check_branch
        %417 = sbr.rel (%p415) target = $region60
      $region59: #{attention_module_stage1.1} parent=11 // pred_region
        _
      $region60: #{attention_module_stage1.1} parent=11 // pred_fallthru
        _
      // Predicated region
      $region61: #{attention_module_stage1.1} parent=11 // pred_check
        %p418 = pneg %p320
      $region62: #{attention_module_stage1.1} parent=11 // pred_check_branch
        %420 = sbr.rel (%p418) target = $region64
      $region63: #{attention_module_stage1.1} parent=11 // pred_region
        _
      $region64: #{attention_module_stage1.1} parent=11 // pred_fallthru
        _
      // Predicated region
      $region65: #{attention_module_stage1.1} parent=11 // pred_check
        %p421 = pneg %p341
      $region66: #{attention_module_stage1.1} parent=11 // pred_check_branch
        %423 = sbr.rel (%p421) target = $region68
      $region67: #{attention_module_stage1.1} parent=11 // pred_region
        _
      $region68: #{attention_module_stage1.1} parent=11 // pred_fallthru
        _
    $region12: #{attention_module_stage1.1} parent=5 // pred_fallthru
      _
    %p424 = scmp.lt.s32.totalorder %s21, 2
    // Predicated region
    $region69: #{attention_module_stage1.1} parent=5 // pred_check
      %p425 = pneg %p424
    $region70: #{attention_module_stage1.1} parent=5 // pred_check_branch
      %427 = sbr.rel (%p425) target = $region72
    $region71: #{attention_module_stage1.1} parent=5 // pred_region
      // Predicated region
      $region73: #{attention_module_stage1.1} parent=71 // pred_check
        %p428 = pneg %p41
      $region74: #{attention_module_stage1.1} parent=71 // pred_check_branch
        %430 = sbr.rel (%p428) target = $region76
      $region75: #{attention_module_stage1.1} parent=71 // pred_region
        %p431 = scmp.lt.s32.totalorder %s21, 1
        %s432 = scalar_select %p431, %s21, 1
        %s433 = smul.addr %s432, 2
        %s434 = smul.addr %s433, 8
        %s435 = scalar_lea.vmem %s0, %s434
      $region76: #{attention_module_stage1.1} parent=71 // pred_fallthru
        _
    $region72: #{attention_module_stage1.1} parent=5 // pred_fallthru
      _
    %p436 = scmp.le.s32.totalorder 1, %s21
    %p437 = scmp.lt.s32.totalorder %s21, 3
    %p438 = pnand %p436, %p437
    %p439 = pneg %p438
    // Predicated region
    $region77: #{attention_module_stage1.1} parent=5 // pred_check
      _
    $region78: #{attention_module_stage1.1} parent=5 // pred_check_branch
      %441 = sbr.rel (%p438) target = $region80
    $region79: #{attention_module_stage1.1} parent=5 // pred_region
      %s442 = ssub.s32 %s21, 1
      %p443 = scmp.lt.s32.totalorder %s26, 1
      %s444 = scalar_select %p443, %s26, 1
      %s445 = smul.addr %s444, 2
      %s446 = smul.addr %s445, 8
      %s447 = scalar_lea.vmem %s0, %s446
      %p448 = pneg %p47
      %p449 = pneg %p44
      %p450 = pneg %p68
      %p451 = pneg %p65
      %p452 = pneg %p89
      %p453 = pneg %p86
      %p454 = pneg %p110
      %p455 = pneg %p107
      %p456 = pneg %p131
      %p457 = pneg %p128
      %p458 = pneg %p152
      %p459 = pneg %p149
      %p460 = pneg %p173
      %p461 = pneg %p170
      %p462 = pneg %p194
      %p463 = pneg %p191
      %p464 = pneg %p215
      %p465 = pneg %p212
      %p466 = pneg %p236
      %p467 = pneg %p233
      %p468 = pneg %p257
      %p469 = pneg %p254
      %p470 = pneg %p278
      %p471 = pneg %p275
      %p472 = pneg %p299
      %p473 = pneg %p296
      %p474 = pneg %p320
      %p475 = pneg %p317
      %p476 = pneg %p341
      %p477 = pneg %p338
      %p478 = pneg %p367
      %p479 = pneg %p364
      %p480 = scmp.lt.s32.totalorder %s26, 1
      %s481 = scalar_select %p480, %s26, 1
      %s482 = smul.addr %s481, 2
      %s483 = smul.addr %s482, 8
      %s484 = scalar_lea.vmem %s15, %s483
      %p485 = scmp.lt.s32.totalorder %s26, 1
      %s486 = scalar_select %p485, %s26, 1
      %s487 = smul.addr %s486, 2
      %s488 = smul.addr %s487, 8
      %s489 = scalar_lea.vmem %s0, %s488
      %p490 = scmp.lt.s32.totalorder %s26, 1
      %s491 = scalar_select %p490, %s26, 1
      %s492 = smul.addr %s491, 2
      %s493 = smul.addr %s492, 8
      %s494 = scalar_lea.vmem %s15, %s493
      %v496 = vld [vmem:[%s489] sm:$0xff]
      %v497 = vld [vmem:[%s489 + $0x8] sm:$0xff]
      %vm500 = vcmask 1040384
      %v501 = vrot.slane %v496, 7
      %v502 = vrot.slane %v497, 7
      %v503 = vsel %vm500, %v501, %v502
      %v506 = vsel %vm500, 0.0, %v501
      %vm507 = vcmask 1046528
      %v508 = vrot.slane %v496, 1
      %v509 = vrot.slane %v497, 1
      %v510 = vsel %vm507, %v508, %v509
      %v513 = vsel %vm507, %v509, 0.0
      %v514 = vld [vmem:[%s1] sm:$0xf]
      %v515 = vld [vmem:[%s1 + $0x4] sm:$0xf]
      %v516 = vld [vmem:[%s1 + $0x8] sm:$0xf]
      %v517 = vld [vmem:[%s1 + $0xc] sm:$0xf]
      %v518 = vld [vmem:[%s1 + $0x10] sm:$0xf]
      %v519 = vld [vmem:[%s1 + $0x14] sm:$0xf]
      %v520 = vld [vmem:[%s1 + $0x18] sm:$0xf]
      %v521 = vld [vmem:[%s1 + $0x1c] sm:$0xf]
      %v522 = vld [vmem:[%s1 + $0x20] sm:$0xf]
      %v523 = vld [vmem:[%s1 + $0x24] sm:$0xf]
      %v524 = vld [vmem:[%s1 + $0x28] sm:$0xf]
      %v525 = vld [vmem:[%s1 + $0x2c] sm:$0xf]
      %v526 = vld [vmem:[%s1 + $0x30] sm:$0xf]
      %v527 = vld [vmem:[%s1 + $0x34] sm:$0xf]
      %v528 = vld [vmem:[%s1 + $0x38] sm:$0xf]
      %v529 = vld [vmem:[%s1 + $0x3c] sm:$0xf]
      %v530 = vld [vmem:[%s1 + $0x40] sm:$0xf]
      %v531 = vld [vmem:[%s1 + $0x44] sm:$0xf]
      %v532 = vld [vmem:[%s1 + $0x48] sm:$0xf]
      %v533 = vld [vmem:[%s1 + $0x4c] sm:$0xf]
      %v534 = vld [vmem:[%s1 + $0x50] sm:$0xf]
      %v535 = vld [vmem:[%s1 + $0x54] sm:$0xf]
      %v536 = vld [vmem:[%s1 + $0x58] sm:$0xf]
      %v537 = vld [vmem:[%s1 + $0x5c] sm:$0xf]
      %v538 = vld [vmem:[%s1 + $0x60] sm:$0xf]
      %v539 = vld [vmem:[%s1 + $0x64] sm:$0xf]
      %v540 = vld [vmem:[%s1 + $0x68] sm:$0xf]
      %v541 = vld [vmem:[%s1 + $0x6c] sm:$0xf]
      %v542 = vld [vmem:[%s1 + $0x70] sm:$0xf]
      %v543 = vld [vmem:[%s1 + $0x74] sm:$0xf]
      %v544 = vld [vmem:[%s1 + $0x78] sm:$0xf]
      %v545 = vld [vmem:[%s1 + $0x7c] sm:$0xf]
      %v546 = vld [vmem:[%s1 + $0x80] sm:$0xf]
      %v547 = vld [vmem:[%s1 + $0x84] sm:$0xf]
      %v548 = vld [vmem:[%s1 + $0x88] sm:$0xf]
      %v549 = vld [vmem:[%s1 + $0x8c] sm:$0xf]
      %v550 = vld [vmem:[%s1 + $0x90] sm:$0xf]
      %v551 = vld [vmem:[%s1 + $0x94] sm:$0xf]
      %v552 = vld [vmem:[%s1 + $0x98] sm:$0xf]
      %v553 = vld [vmem:[%s1 + $0x9c] sm:$0xf]
      %v554 = vld [vmem:[%s1 + $0xa0] sm:$0xf]
      %v555 = vld [vmem:[%s1 + $0xa4] sm:$0xf]
      %v556 = vld [vmem:[%s1 + $0xa8] sm:$0xf]
      %v557 = vld [vmem:[%s1 + $0xac] sm:$0xf]
      %v558 = vld [vmem:[%s1 + $0xb0] sm:$0xf]
      %v559 = vld [vmem:[%s1 + $0xb4] sm:$0xf]
      %v560 = vld [vmem:[%s1 + $0xb8] sm:$0xf]
      %v561 = vld [vmem:[%s1 + $0xbc] sm:$0xf]
      %v562 = vpack.c.bf16 %v503, %v506
      %v563 = vpack.c.bf16 %v497, %v496
      %v564 = vpack.c.bf16 %v513, %v510
      %v565 = vld [vmem:[%s10] sm:$0x1]
      %v566 = vlaneseq
      %v567 = vshrl.u32 %v566, 7
      %v568 = vsub.s32 0, %v567
      %v569 = vrot.slane %v565, %v568
      %v618 = vunpack.c.l.b16 %v514
      %v619 = vunpack.c.l.b16 %v515
      %v620 = vunpack.c.l.b16 %v516
      %v621 = vunpack.c.l.b16 %v517
      %v622 = vunpack.c.l.b16 %v518
      %v623 = vunpack.c.l.b16 %v519
      %v624 = vunpack.c.l.b16 %v520
      %v625 = vunpack.c.l.b16 %v521
      %v626 = vunpack.c.l.b16 %v522
      %v627 = vunpack.c.l.b16 %v523
      %v628 = vunpack.c.l.b16 %v524
      %v629 = vunpack.c.l.b16 %v525
      %v630 = vunpack.c.l.b16 %v526
      %v631 = vunpack.c.l.b16 %v527
      %v632 = vunpack.c.l.b16 %v528
      %v633 = vunpack.c.l.b16 %v529
      %v634 = vunpack.c.l.b16 %v530
      %v635 = vunpack.c.l.b16 %v531
      %v636 = vunpack.c.l.b16 %v532
      %v637 = vunpack.c.l.b16 %v533
      %v638 = vunpack.c.l.b16 %v534
      %v639 = vunpack.c.l.b16 %v535
      %v640 = vunpack.c.l.b16 %v536
      %v641 = vunpack.c.l.b16 %v537
      %v642 = vunpack.c.l.b16 %v538
      %v643 = vunpack.c.l.b16 %v539
      %v644 = vunpack.c.l.b16 %v540
      %v645 = vunpack.c.l.b16 %v541
      %v646 = vunpack.c.l.b16 %v542
      %v647 = vunpack.c.l.b16 %v543
      %v648 = vunpack.c.l.b16 %v544
      %v649 = vunpack.c.l.b16 %v545
      %v650 = vunpack.c.l.b16 %v546
      %v651 = vunpack.c.l.b16 %v547
      %v652 = vunpack.c.l.b16 %v548
      %v653 = vunpack.c.l.b16 %v549
      %v654 = vunpack.c.l.b16 %v550
      %v655 = vunpack.c.l.b16 %v551
      %v656 = vunpack.c.l.b16 %v552
      %v657 = vunpack.c.l.b16 %v553
      %v658 = vunpack.c.l.b16 %v554
      %v659 = vunpack.c.l.b16 %v555
      %v660 = vunpack.c.l.b16 %v556
      %v661 = vunpack.c.l.b16 %v557
      %v662 = vunpack.c.l.b16 %v558
      %v663 = vunpack.c.l.b16 %v559
      %v664 = vunpack.c.l.b16 %v560
      %v665 = vunpack.c.l.b16 %v561
      %v666 = vpack.c.b16 %v619, %v618
      %v667 = vpack.c.b16 %v621, %v620
      %v668 = vpack.c.b16 %v623, %v622
      %v669 = vpack.c.b16 %v625, %v624
      %v670 = vpack.c.b16 %v627, %v626
      %v671 = vpack.c.b16 %v629, %v628
      %v672 = vpack.c.b16 %v631, %v630
      %v673 = vpack.c.b16 %v633, %v632
      %v674 = vpack.c.b16 %v635, %v634
      %v675 = vpack.c.b16 %v637, %v636
      %v676 = vpack.c.b16 %v639, %v638
      %v677 = vpack.c.b16 %v641, %v640
      %v678 = vpack.c.b16 %v643, %v642
      %v679 = vpack.c.b16 %v645, %v644
      %v680 = vpack.c.b16 %v647, %v646
      %v681 = vpack.c.b16 %v649, %v648
      %v682 = vpack.c.b16 %v651, %v650
      %v683 = vpack.c.b16 %v653, %v652
      %v684 = vpack.c.b16 %v655, %v654
      %v685 = vpack.c.b16 %v657, %v656
      %v686 = vpack.c.b16 %v659, %v658
      %v687 = vpack.c.b16 %v661, %v660
      %v688 = vpack.c.b16 %v663, %v662
      %v689 = vpack.c.b16 %v665, %v664
      %714 = vmatprep.subr.bf16.mxu0 0
      %715 = vmatpush1.bf16.msra.mxu0 %v666
      %716 = vmatprep.subr.bf16.mxu0 0
      %717 = vmatpush1.bf16.msra.mxu0 %v667
      %718 = vmatprep.subr.bf16.mxu0 0
      %719 = vmatpush1.bf16.msra.mxu0 %v668
      %720 = vmatprep.subr.bf16.mxu0 0
      %721 = vmatpush1.bf16.msra.mxu0 %v669
      %722 = vmatprep.subr.bf16.mxu0 0
      %723 = vmatpush1.bf16.msra.mxu0 %v670
      %724 = vmatprep.subr.bf16.mxu0 0
      %725 = vmatpush1.bf16.msra.mxu0 %v671
      %726 = vmatprep.subr.bf16.mxu0 0
      %727 = vmatpush1.bf16.msra.mxu0 %v672
      %728 = vmatprep.subr.bf16.mxu0 0
      %729 = vmatpush1.bf16.msra.mxu0 %v673
      %730 = vmatprep.subr.bf16.mxu0 0
      %731 = vmatpush1.bf16.msra.mxu0 %v674
      %732 = vmatprep.subr.bf16.mxu0 0
      %733 = vmatpush1.bf16.msra.mxu0 %v675
      %734 = vmatprep.subr.bf16.mxu0 0
      %735 = vmatpush1.bf16.msra.mxu0 %v676
      %736 = vmatprep.subr.bf16.mxu0 0
      %737 = vmatpush1.bf16.msra.mxu0 %v677
      %738 = vmatprep.subr.bf16.mxu0 0
      %739 = vmatpush1.bf16.msra.mxu0 %v678
      %740 = vmatprep.subr.bf16.mxu0 0
      %741 = vmatpush1.bf16.msra.mxu0 %v679
      %742 = vmatprep.subr.bf16.mxu0 0
      %743 = vmatpush1.bf16.msra.mxu0 %v680
      %744 = vmatprep.subr.bf16.mxu0 0
      %745 = vmatpush1.bf16.msra.mxu0 %v681
      %746 = vmatprep.mubr.bf16.mxu0 %v563
      %747 = vmatmul.mubr.bf16.gmra.mrb[0].mxu0 %v562
      %v748 = vpop.f32.mrb[0].mxu0
      %v749 = vadd.f32 %v569, %v748
      %v750 = vpop.f32.mrb[0].mxu0
      %v751 = vpop.f32.mrb[0].mxu0
      %v752 = vadd.f32 %v569, %v751
      %v753 = vpop.f32.mrb[0].mxu0
      %754 = vdwg.mxu0
      %755 = vmatprep.subr.bf16.mxu0 0
      %756 = vmatpush1.bf16.msra.mxu0 %v682
      %757 = vmatprep.subr.bf16.mxu0 0
      %758 = vmatpush1.bf16.msra.mxu0 %v683
      %759 = vmatprep.subr.bf16.mxu0 0
      %760 = vmatpush1.bf16.msra.mxu0 %v684
      %761 = vmatprep.subr.bf16.mxu0 0
      %762 = vmatpush1.bf16.msra.mxu0 %v685
      %763 = vmatprep.subr.bf16.mxu0 0
      %764 = vmatpush1.bf16.msra.mxu0 %v686
      %765 = vmatprep.subr.bf16.mxu0 0
      %766 = vmatpush1.bf16.msra.mxu0 %v687
      %767 = vmatprep.subr.bf16.mxu0 0
      %768 = vmatpush1.bf16.msra.mxu0 %v688
      %769 = vmatprep.subr.bf16.mxu0 0
      %770 = vmatpush1.bf16.msra.mxu0 %v689
      %771 = vmatprep.subr.bf16.mxu0 0
      %772 = vmatpush1.bf16.msra.mxu0 0
      %773 = vmatprep.subr.bf16.mxu0 0
      %774 = vmatpush1.bf16.msra.mxu0 0
      %775 = vmatprep.subr.bf16.mxu0 0
      %776 = vmatpush1.bf16.msra.mxu0 0
      %777 = vmatprep.subr.bf16.mxu0 0
      %778 = vmatpush1.bf16.msra.mxu0 0
      %779 = vmatprep.subr.bf16.mxu0 0
      %780 = vmatpush1.bf16.msra.mxu0 0
      %781 = vmatprep.subr.bf16.mxu0 0
      %782 = vmatpush1.bf16.msra.mxu0 0
      %783 = vmatprep.subr.bf16.mxu0 0
      %784 = vmatpush1.bf16.msra.mxu0 0
      %785 = vmatprep.subr.bf16.mxu0 0
      %786 = vmatpush1.bf16.msra.mxu0 0
      %787 = vmatprep.mubr.bf16.mxu0 0
      %788 = vmatmul.mubr.bf16.gmra.mrb[0].mxu0 %v564
      %v789 = vpop.f32.mrb[0].mxu0
      %v790 = vadd.f32 %v749, %v789
      %v791 = vpop.f32.mrb[0].mxu0
      %v792 = vpop.f32.mrb[0].mxu0
      %v793 = vadd.f32 %v752, %v792
      %v794 = vpop.f32.mrb[0].mxu0
      %795 = vdwg.mxu0
      %v796 = vmax.f32 %v790, 0.0
      %v797 = vmax.f32 %v793, 0.0
      %v798 = vmin.f32 %v796, 6.0
      %v799 = vmin.f32 %v797, 6.0
      %v800 = vld [vmem:[%s2] sm:$0xf]
      %v801 = vld [vmem:[%s2 + $0x4] sm:$0xf]
      %v802 = vld [vmem:[%s2 + $0x8] sm:$0xf]
      %v803 = vld [vmem:[%s2 + $0xc] sm:$0xf]
      %v804 = vld [vmem:[%s2 + $0x10] sm:$0xf]
      %v805 = vld [vmem:[%s2 + $0x14] sm:$0xf]
      %v806 = vld [vmem:[%s2 + $0x18] sm:$0xf]
      %v807 = vld [vmem:[%s2 + $0x1c] sm:$0xf]
      %v808 = vld [vmem:[%s2 + $0x20] sm:$0xf]
      %v809 = vld [vmem:[%s2 + $0x24] sm:$0xf]
      %v810 = vld [vmem:[%s2 + $0x28] sm:$0xf]
      %v811 = vld [vmem:[%s2 + $0x2c] sm:$0xf]
      %v812 = vld [vmem:[%s2 + $0x30] sm:$0xf]
      %v813 = vld [vmem:[%s2 + $0x34] sm:$0xf]
      %v814 = vld [vmem:[%s2 + $0x38] sm:$0xf]
      %v815 = vld [vmem:[%s2 + $0x3c] sm:$0xf]
      %v816 = vpack.c.bf16 %v799, %v798
      %v817 = vld [vmem:[%s10 + $0x1] sm:$0x1]
      %v818 = vlaneseq
      %v819 = vshrl.u32 %v818, 7
      %v820 = vsub.s32 0, %v819
      %v821 = vrot.slane %v817, %v820
      %v838 = vunpack.c.l.b16 %v800
      %v839 = vunpack.c.l.b16 %v801
      %v840 = vunpack.c.l.b16 %v802
      %v841 = vunpack.c.l.b16 %v803
      %v842 = vunpack.c.l.b16 %v804
      %v843 = vunpack.c.l.b16 %v805
      %v844 = vunpack.c.l.b16 %v806
      %v845 = vunpack.c.l.b16 %v807
      %v846 = vunpack.c.l.b16 %v808
      %v847 = vunpack.c.l.b16 %v809
      %v848 = vunpack.c.l.b16 %v810
      %v849 = vunpack.c.l.b16 %v811
      %v850 = vunpack.c.l.b16 %v812
      %v851 = vunpack.c.l.b16 %v813
      %v852 = vunpack.c.l.b16 %v814
      %v853 = vunpack.c.l.b16 %v815
      %v854 = vpack.c.b16 %v839, %v838
      %v855 = vpack.c.b16 %v841, %v840
      %v856 = vpack.c.b16 %v843, %v842
      %v857 = vpack.c.b16 %v845, %v844
      %v858 = vpack.c.b16 %v847, %v846
      %v859 = vpack.c.b16 %v849, %v848
      %v860 = vpack.c.b16 %v851, %v850
      %v861 = vpack.c.b16 %v853, %v852
      %870 = vmatprep.subr.bf16.mxu0 0
      %871 = vmatpush1.bf16.msra.mxu0 %v854
      %872 = vmatprep.subr.bf16.mxu0 0
      %873 = vmatpush1.bf16.msra.mxu0 %v855
      %874 = vmatprep.subr.bf16.mxu0 0
      %875 = vmatpush1.bf16.msra.mxu0 %v856
      %876 = vmatprep.subr.bf16.mxu0 0
      %877 = vmatpush1.bf16.msra.mxu0 %v857
      %878 = vmatprep.subr.bf16.mxu0 0
      %879 = vmatpush1.bf16.msra.mxu0 %v858
      %880 = vmatprep.subr.bf16.mxu0 0
      %881 = vmatpush1.bf16.msra.mxu0 %v859
      %882 = vmatprep.subr.bf16.mxu0 0
      %883 = vmatpush1.bf16.msra.mxu0 %v860
      %884 = vmatprep.subr.bf16.mxu0 0
      %885 = vmatpush1.bf16.msra.mxu0 %v861
      %886 = vmatprep.subr.bf16.mxu0 0
      %887 = vmatpush1.bf16.msra.mxu0 0
      %888 = vmatprep.subr.bf16.mxu0 0
      %889 = vmatpush1.bf16.msra.mxu0 0
      %890 = vmatprep.subr.bf16.mxu0 0
      %891 = vmatpush1.bf16.msra.mxu0 0
      %892 = vmatprep.subr.bf16.mxu0 0
      %893 = vmatpush1.bf16.msra.mxu0 0
      %894 = vmatprep.subr.bf16.mxu0 0
      %895 = vmatpush1.bf16.msra.mxu0 0
      %896 = vmatprep.subr.bf16.mxu0 0
      %897 = vmatpush1.bf16.msra.mxu0 0
      %898 = vmatprep.subr.bf16.mxu0 0
      %899 = vmatpush1.bf16.msra.mxu0 0
      %900 = vmatprep.subr.bf16.mxu0 0
      %901 = vmatpush1.bf16.msra.mxu0 0
      %902 = vmatprep.mubr.bf16.mxu0 0
      %903 = vmatmul.mubr.bf16.gmra.mrb[0].mxu0 %v816
      %v904 = vpop.f32.mrb[0].mxu0
      %v905 = vadd.f32 %v821, %v904
      %v906 = vpop.f32.mrb[0].mxu0
      %v907 = vpop.f32.mrb[0].mxu0
      %v908 = vadd.f32 %v821, %v907
      %v909 = vpop.f32.mrb[0].mxu0
      %910 = vdwg.mxu0
      %v911 = vmax.f32 %v905, 0.0
      %v912 = vmax.f32 %v908, 0.0
      %v913 = vmin.f32 %v911, 6.0
      %v914 = vmin.f32 %v912, 6.0
      %v917 = vrot.slane %v913, 7
      %v918 = vrot.slane %v914, 7
      %v919 = vsel %vm500, %v917, %v918
      %v922 = vsel %vm500, 0.0, %v917
      %v923 = vrot.slane %v913, 1
      %v924 = vrot.slane %v914, 1
      %v925 = vsel %vm507, %v923, %v924
      %v928 = vsel %vm507, %v924, 0.0
      %s929 = scalar_lea.vmem %s1, 192
      %v930 = vld [vmem:[%s929] sm:$0xf]
      %v931 = vld [vmem:[%s929 + $0x4] sm:$0xf]
      %v932 = vld [vmem:[%s929 + $0x8] sm:$0xf]
      %v933 = vld [vmem:[%s929 + $0xc] sm:$0xf]
      %v934 = vld [vmem:[%s929 + $0x10] sm:$0xf]
      %v935 = vld [vmem:[%s929 + $0x14] sm:$0xf]
      %v936 = vld [vmem:[%s929 + $0x18] sm:$0xf]
      %v937 = vld [vmem:[%s929 + $0x1c] sm:$0xf]
      %v938 = vld [vmem:[%s929 + $0x20] sm:$0xf]
      %v939 = vld [vmem:[%s929 + $0x24] sm:$0xf]
      %v940 = vld [vmem:[%s929 + $0x28] sm:$0xf]
      %v941 = vld [vmem:[%s929 + $0x2c] sm:$0xf]
      %v942 = vld [vmem:[%s929 + $0x30] sm:$0xf]
      %v943 = vld [vmem:[%s929 + $0x34] sm:$0xf]
      %v944 = vld [vmem:[%s929 + $0x38] sm:$0xf]
      %v945 = vld [vmem:[%s929 + $0x3c] sm:$0xf]
      %v946 = vld [vmem:[%s929 + $0x40] sm:$0xf]
      %v947 = vld [vmem:[%s929 + $0x44] sm:$0xf]
      %v948 = vld [vmem:[%s929 + $0x48] sm:$0xf]
      %v949 = vld [vmem:[%s929 + $0x4c] sm:$0xf]
      %v950 = vld [vmem:[%s929 + $0x50] sm:$0xf]
      %v951 = vld [vmem:[%s929 + $0x54] sm:$0xf]
      %v952 = vld [vmem:[%s929 + $0x58] sm:$0xf]
      %v953 = vld [vmem:[%s929 + $0x5c] sm:$0xf]
      %v954 = vld [vmem:[%s929 + $0x60] sm:$0xf]
      %v955 = vld [vmem:[%s929 + $0x64] sm:$0xf]
      %v956 = vld [vmem:[%s929 + $0x68] sm:$0xf]
      %v957 = vld [vmem:[%s929 + $0x6c] sm:$0xf]
      %v958 = vld [vmem:[%s929 + $0x70] sm:$0xf]
      %v959 = vld [vmem:[%s929 + $0x74] sm:$0xf]
      %v960 = vld [vmem:[%s929 + $0x78] sm:$0xf]
      %v961 = vld [vmem:[%s929 + $0x7c] sm:$0xf]
      %v962 = vld [vmem:[%s929 + $0x80] sm:$0xf]
      %v963 = vld [vmem:[%s929 + $0x84] sm:$0xf]
      %v964 = vld [vmem:[%s929 + $0x88] sm:$0xf]
      %v965 = vld [vmem:[%s929 + $0x8c] sm:$0xf]
      %v966 = vld [vmem:[%s929 + $0x90] sm:$0xf]
      %v967 = vld [vmem:[%s929 + $0x94] sm:$0xf]
      %v968 = vld [vmem:[%s929 + $0x98] sm:$0xf]
      %v969 = vld [vmem:[%s929 + $0x9c] sm:$0xf]
      %v970 = vld [vmem:[%s929 + $0xa0] sm:$0xf]
      %v971 = vld [vmem:[%s929 + $0xa4] sm:$0xf]
      %v972 = vld [vmem:[%s929 + $0xa8] sm:$0xf]
      %v973 = vld [vmem:[%s929 + $0xac] sm:$0xf]
      %v974 = vld [vmem:[%s929 + $0xb0] sm:$0xf]
      %v975 = vld [vmem:[%s929 + $0xb4] sm:$0xf]
      %v976 = vld [vmem:[%s929 + $0xb8] sm:$0xf]
      %v977 = vld [vmem:[%s929 + $0xbc] sm:$0xf]
      %v978 = vpack.c.bf16 %v919, %v922
      %v979 = vpack.c.bf16 %v914, %v913
      %v980 = vpack.c.bf16 %v928, %v925
      %v981 = vld [vmem:[%s10 + $0x2] sm:$0x1]
      %v982 = vlaneseq
      %v983 = vshrl.u32 %v982, 7
      %v984 = vsub.s32 0, %v983
      %v985 = vrot.slane %v981, %v984
      %v1034 = vunpack.c.l.b16 %v930
      %v1035 = vunpack.c.l.b16 %v931
      %v1036 = vunpack.c.l.b16 %v932
      %v1037 = vunpack.c.l.b16 %v933
      %v1038 = vunpack.c.l.b16 %v934
      %v1039 = vunpack.c.l.b16 %v935
      %v1040 = vunpack.c.l.b16 %v936
      %v1041 = vunpack.c.l.b16 %v937
      %v1042 = vunpack.c.l.b16 %v938
      %v1043 = vunpack.c.l.b16 %v939
      %v1044 = vunpack.c.l.b16 %v940
      %v1045 = vunpack.c.l.b16 %v941
      %v1046 = vunpack.c.l.b16 %v942
      %v1047 = vunpack.c.l.b16 %v943
      %v1048 = vunpack.c.l.b16 %v944
      %v1049 = vunpack.c.l.b16 %v945
      %v1050 = vunpack.c.l.b16 %v946
      %v1051 = vunpack.c.l.b16 %v947
      %v1052 = vunpack.c.l.b16 %v948
      %v1053 = vunpack.c.l.b16 %v949
      %v1054 = vunpack.c.l.b16 %v950
      %v1055 = vunpack.c.l.b16 %v951
      %v1056 = vunpack.c.l.b16 %v952
      %v1057 = vunpack.c.l.b16 %v953
      %v1058 = vunpack.c.l.b16 %v954
      %v1059 = vunpack.c.l.b16 %v955
      %v1060 = vunpack.c.l.b16 %v956
      %v1061 = vunpack.c.l.b16 %v957
      %v1062 = vunpack.c.l.b16 %v958
      %v1063 = vunpack.c.l.b16 %v959
      %v1064 = vunpack.c.l.b16 %v960
      %v1065 = vunpack.c.l.b16 %v961
      %v1066 = vunpack.c.l.b16 %v962
      %v1067 = vunpack.c.l.b16 %v963
      %v1068 = vunpack.c.l.b16 %v964
      %v1069 = vunpack.c.l.b16 %v965
      %v1070 = vunpack.c.l.b16 %v966
      %v1071 = vunpack.c.l.b16 %v967
      %v1072 = vunpack.c.l.b16 %v968
      %v1073 = vunpack.c.l.b16 %v969
      %v1074 = vunpack.c.l.b16 %v970
      %v1075 = vunpack.c.l.b16 %v971
      %v1076 = vunpack.c.l.b16 %v972
      %v1077 = vunpack.c.l.b16 %v973
      %v1078 = vunpack.c.l.b16 %v974
      %v1079 = vunpack.c.l.b16 %v975
      %v1080 = vunpack.c.l.b16 %v976
      %v1081 = vunpack.c.l.b16 %v977
      %v1082 = vpack.c.b16 %v1035, %v1034
      %v1083 = vpack.c.b16 %v1037, %v1036
      %v1084 = vpack.c.b16 %v1039, %v1038
      %v1085 = vpack.c.b16 %v1041, %v1040
      %v1086 = vpack.c.b16 %v1043, %v1042
      %v1087 = vpack.c.b16 %v1045, %v1044
      %v1088 = vpack.c.b16 %v1047, %v1046
      %v1089 = vpack.c.b16 %v1049, %v1048
      %v1090 = vpack.c.b16 %v1051, %v1050
      %v1091 = vpack.c.b16 %v1053, %v1052
      %v1092 = vpack.c.b16 %v1055, %v1054
      %v1093 = vpack.c.b16 %v1057, %v1056
      %v1094 = vpack.c.b16 %v1059, %v1058
      %v1095 = vpack.c.b16 %v1061, %v1060
      %v1096 = vpack.c.b16 %v1063, %v1062
      %v1097 = vpack.c.b16 %v1065, %v1064
      %v1098 = vpack.c.b16 %v1067, %v1066
      %v1099 = vpack.c.b16 %v1069, %v1068
      %v1100 = vpack.c.b16 %v1071, %v1070
      %v1101 = vpack.c.b16 %v1073, %v1072
      %v1102 = vpack.c.b16 %v1075, %v1074
      %v1103 = vpack.c.b16 %v1077, %v1076
      %v1104 = vpack.c.b16 %v1079, %v1078
      %v1105 = vpack.c.b16 %v1081, %v1080
      %1130 = vmatprep.subr.bf16.mxu0 0
      %1131 = vmatpush1.bf16.msra.mxu0 %v1082
      %1132 = vmatprep.subr.bf16.mxu0 0
      %1133 = vmatpush1.bf16.msra.mxu0 %v1083
      %1134 = vmatprep.subr.bf16.mxu0 0
      %1135 = vmatpush1.bf16.msra.mxu0 %v1084
      %1136 = vmatprep.subr.bf16.mxu0 0
      %1137 = vmatpush1.bf16.msra.mxu0 %v1085
      %1138 = vmatprep.subr.bf16.mxu0 0
      %1139 = vmatpush1.bf16.msra.mxu0 %v1086
      %1140 = vmatprep.subr.bf16.mxu0 0
      %1141 = vmatpush1.bf16.msra.mxu0 %v1087
      %1142 = vmatprep.subr.bf16.mxu0 0
      %1143 = vmatpush1.bf16.msra.mxu0 %v1088
      %1144 = vmatprep.subr.bf16.mxu0 0
      %1145 = vmatpush1.bf16.msra.mxu0 %v1089
      %1146 = vmatprep.subr.bf16.mxu0 0
      %1147 = vmatpush1.bf16.msra.mxu0 %v1090
      %1148 = vmatprep.subr.bf16.mxu0 0
      %1149 = vmatpush1.bf16.msra.mxu0 %v1091
      %1150 = vmatprep.subr.bf16.mxu0 0
      %1151 = vmatpush1.bf16.msra.mxu0 %v1092
      %1152 = vmatprep.subr.bf16.mxu0 0
      %1153 = vmatpush1.bf16.msra.mxu0 %v1093
      %1154 = vmatprep.subr.bf16.mxu0 0
      %1155 = vmatpush1.bf16.msra.mxu0 %v1094
      %1156 = vmatprep.subr.bf16.mxu0 0
      %1157 = vmatpush1.bf16.msra.mxu0 %v1095
      %1158 = vmatprep.subr.bf16.mxu0 0
      %1159 = vmatpush1.bf16.msra.mxu0 %v1096
      %1160 = vmatprep.subr.bf16.mxu0 0
      %1161 = vmatpush1.bf16.msra.mxu0 %v1097
      %1162 = vmatprep.mubr.bf16.mxu0 %v979
      %1163 = vmatmul.mubr.bf16.gmra.mrb[0].mxu0 %v978
      %v1164 = vpop.f32.mrb[0].mxu0
      %v1165 = vadd.f32 %v985, %v1164
      %v1166 = vpop.f32.mrb[0].mxu0
      %v1167 = vpop.f32.mrb[0].mxu0
      %v1168 = vadd.f32 %v985, %v1167
      %v1169 = vpop.f32.mrb[0].mxu0
      %1170 = vdwg.mxu0
      %1171 = vmatprep.subr.bf16.mxu0 0
      %1172 = vmatpush1.bf16.msra.mxu0 %v1098
      %1173 = vmatprep.subr.bf16.mxu0 0
      %1174 = vmatpush1.bf16.msra.mxu0 %v1099
      %1175 = vmatprep.subr.bf16.mxu0 0
      %1176 = vmatpush1.bf16.msra.mxu0 %v1100
      %1177 = vmatprep.subr.bf16.mxu0 0
      %1178 = vmatpush1.bf16.msra.mxu0 %v1101
      %1179 = vmatprep.subr.bf16.mxu0 0
      %1180 = vmatpush1.bf16.msra.mxu0 %v1102
      %1181 = vmatprep.subr.bf16.mxu0 0
      %1182 = vmatpush1.bf16.msra.mxu0 %v1103
      %1183 = vmatprep.subr.bf16.mxu0 0
      %1184 = vmatpush1.bf16.msra.mxu0 %v1104
      %1185 = vmatprep.subr.bf16.mxu0 0
      %1186 = vmatpush1.bf16.msra.mxu0 %v1105
      %1187 = vmatprep.subr.bf16.mxu0 0
      %1188 = vmatpush1.bf16.msra.mxu0 0
      %1189 = vmatprep.subr.bf16.mxu0 0
      %1190 = vmatpush1.bf16.msra.mxu0 0
      %1191 = vmatprep.subr.bf16.mxu0 0
      %1192 = vmatpush1.bf16.msra.mxu0 0
      %1193 = vmatprep.subr.bf16.mxu0 0
      %1194 = vmatpush1.bf16.msra.mxu0 0
      %1195 = vmatprep.subr.bf16.mxu0 0
      %1196 = vmatpush1.bf16.msra.mxu0 0
      %1197 = vmatprep.subr.bf16.mxu0 0
      %1198 = vmatpush1.bf16.msra.mxu0 0
      %1199 = vmatprep.subr.bf16.mxu0 0
      %1200 = vmatpush1.bf16.msra.mxu0 0
      %1201 = vmatprep.subr.bf16.mxu0 0
      %1202 = vmatpush1.bf16.msra.mxu0 0
      %1203 = vmatprep.mubr.bf16.mxu0 0
      %1204 = vmatmul.mubr.bf16.gmra.mrb[0].mxu0 %v980
      %v1205 = vpop.f32.mrb[0].mxu0
      %v1206 = vadd.f32 %v1165, %v1205
      %v1207 = vpop.f32.mrb[0].mxu0
      %v1208 = vpop.f32.mrb[0].mxu0
      %v1209 = vadd.f32 %v1168, %v1208
      %v1210 = vpop.f32.mrb[0].mxu0
      %1211 = vdwg.mxu0
      %v1212 = vmax.f32 %v1206, 0.0
      %v1213 = vmax.f32 %v1209, 0.0
      %v1214 = vmin.f32 %v1212, 6.0
      %v1215 = vmin.f32 %v1213, 6.0
      %s1216 = scalar_lea.vmem %s2, 64
      %v1217 = vld [vmem:[%s1216] sm:$0xf]
      %v1218 = vld [vmem:[%s1216 + $0x4] sm:$0xf]
      %v1219 = vld [vmem:[%s1216 + $0x8] sm:$0xf]
      %v1220 = vld [vmem:[%s1216 + $0xc] sm:$0xf]
      %v1221 = vld [vmem:[%s1216 + $0x10] sm:$0xf]
      %v1222 = vld [vmem:[%s1216 + $0x14] sm:$0xf]
      %v1223 = vld [vmem:[%s1216 + $0x18] sm:$0xf]
      %v1224 = vld [vmem:[%s1216 + $0x1c] sm:$0xf]
      %v1225 = vld [vmem:[%s1216 + $0x20] sm:$0xf]
      %v1226 = vld [vmem:[%s1216 + $0x24] sm:$0xf]
      %v1227 = vld [vmem:[%s1216 + $0x28] sm:$0xf]
      %v1228 = vld [vmem:[%s1216 + $0x2c] sm:$0xf]
      %v1229 = vld [vmem:[%s1216 + $0x30] sm:$0xf]
      %v1230 = vld [vmem:[%s1216 + $0x34] sm:$0xf]
      %v1231 = vld [vmem:[%s1216 + $0x38] sm:$0xf]
      %v1232 = vld [vmem:[%s1216 + $0x3c] sm:$0xf]
      %v1233 = vpack.c.bf16 %v1215, %v1214
      %v1234 = vld [vmem:[%s10 + $0x3] sm:$0x1]
      %v1235 = vlaneseq
      %v1236 = vshrl.u32 %v1235, 7
      %v1237 = vsub.s32 0, %v1236
      %v1238 = vrot.slane %v1234, %v1237
      %v1255 = vunpack.c.l.b16 %v1217
      %v1256 = vunpack.c.l.b16 %v1218
      %v1257 = vunpack.c.l.b16 %v1219
      %v1258 = vunpack.c.l.b16 %v1220
      %v1259 = vunpack.c.l.b16 %v1221
      %v1260 = vunpack.c.l.b16 %v1222
      %v1261 = vunpack.c.l.b16 %v1223
      %v1262 = vunpack.c.l.b16 %v1224
      %v1263 = vunpack.c.l.b16 %v1225
      %v1264 = vunpack.c.l.b16 %v1226
      %v1265 = vunpack.c.l.b16 %v1227
      %v1266 = vunpack.c.l.b16 %v1228
      %v1267 = vunpack.c.l.b16 %v1229
      %v1268 = vunpack.c.l.b16 %v1230
      %v1269 = vunpack.c.l.b16 %v1231
      %v1270 = vunpack.c.l.b16 %v1232
      %v1271 = vpack.c.b16 %v1256, %v1255
      %v1272 = vpack.c.b16 %v1258, %v1257
      %v1273 = vpack.c.b16 %v1260, %v1259
      %v1274 = vpack.c.b16 %v1262, %v1261
      %v1275 = vpack.c.b16 %v1264, %v1263
      %v1276 = vpack.c.b16 %v1266, %v1265
      %v1277 = vpack.c.b16 %v1268, %v1267
      %v1278 = vpack.c.b16 %v1270, %v1269
      %1287 = vmatprep.subr.bf16.mxu0 0
      %1288 = vmatpush1.bf16.msra.mxu0 %v1271
      %1289 = vmatprep.subr.bf16.mxu0 0
      %1290 = vmatpush1.bf16.msra.mxu0 %v1272
      %1291 = vmatprep.subr.bf16.mxu0 0
      %1292 = vmatpush1.bf16.msra.mxu0 %v1273
      %1293 = vmatprep.subr.bf16.mxu0 0
      %1294 = vmatpush1.bf16.msra.mxu0 %v1274
      %1295 = vmatprep.subr.bf16.mxu0 0
      %1296 = vmatpush1.bf16.msra.mxu0 %v1275
      %1297 = vmatprep.subr.bf16.mxu0 0
      %1298 = vmatpush1.bf16.msra.mxu0 %v1276
      %1299 = vmatprep.subr.bf16.mxu0 0
      %1300 = vmatpush1.bf16.msra.mxu0 %v1277
      %1301 = vmatprep.subr.bf16.mxu0 0
      %1302 = vmatpush1.bf16.msra.mxu0 %v1278
      %1303 = vmatprep.subr.bf16.mxu0 0
      %1304 = vmatpush1.bf16.msra.mxu0 0
      %1305 = vmatprep.subr.bf16.mxu0 0
      %1306 = vmatpush1.bf16.msra.mxu0 0
      %1307 = vmatprep.subr.bf16.mxu0 0
      %1308 = vmatpush1.bf16.msra.mxu0 0
      %1309 = vmatprep.subr.bf16.mxu0 0
      %1310 = vmatpush1.bf16.msra.mxu0 0
      %1311 = vmatprep.subr.bf16.mxu0 0
      %1312 = vmatpush1.bf16.msra.mxu0 0
      %1313 = vmatprep.subr.bf16.mxu0 0
      %1314 = vmatpush1.bf16.msra.mxu0 0
      %1315 = vmatprep.subr.bf16.mxu0 0
      %1316 = vmatpush1.bf16.msra.mxu0 0
      %1317 = vmatprep.subr.bf16.mxu0 0
      %1318 = vmatpush1.bf16.msra.mxu0 0
      %1319 = vmatprep.mubr.bf16.mxu0 0
      %1320 = vmatmul.mubr.bf16.gmra.mrb[0].mxu0 %v1233
      %v1321 = vpop.f32.mrb[0].mxu0
      %v1322 = vadd.f32 %v1238, %v1321
      %v1323 = vpop.f32.mrb[0].mxu0
      %v1324 = vpop.f32.mrb[0].mxu0
      %v1325 = vadd.f32 %v1238, %v1324
      %v1326 = vpop.f32.mrb[0].mxu0
      %1327 = vdwg.mxu0
      %v1328 = vmax.f32 %v1322, 0.0
      %v1329 = vmax.f32 %v1325, 0.0
      %v1330 = vmin.f32 %v1328, 6.0
      %v1331 = vmin.f32 %v1329, 6.0
      %v1334 = vrot.slane %v1330, 7
      %v1335 = vrot.slane %v1331, 7
      %v1336 = vsel %vm500, %v1334, %v1335
      %v1339 = vsel %vm500, 0.0, %v1334
      %v1340 = vrot.slane %v1330, 1
      %v1341 = vrot.slane %v1331, 1
      %v1342 = vsel %vm507, %v1340, %v1341
      %v1345 = vsel %vm507, %v1341, 0.0
      %s1346 = scalar_lea.vmem %s1, 384
      %v1347 = vld [vmem:[%s1346] sm:$0xf]
      %v1348 = vld [vmem:[%s1346 + $0x4] sm:$0xf]
      %v1349 = vld [vmem:[%s1346 + $0x8] sm:$0xf]
      %v1350 = vld [vmem:[%s1346 + $0xc] sm:$0xf]
      %v1351 = vld [vmem:[%s1346 + $0x10] sm:$0xf]
      %v1352 = vld [vmem:[%s1346 + $0x14] sm:$0xf]
      %v1353 = vld [vmem:[%s1346 + $0x18] sm:$0xf]
      %v1354 = vld [vmem:[%s1346 + $0x1c] sm:$0xf]
      %v1355 = vld [vmem:[%s1346 + $0x20] sm:$0xf]
      %v1356 = vld [vmem:[%s1346 + $0x24] sm:$0xf]
      %v1357 = vld [vmem:[%s1346 + $0x28] sm:$0xf]
      %v1358 = vld [vmem:[%s1346 + $0x2c] sm:$0xf]
      %v1359 = vld [vmem:[%s1346 + $0x30] sm:$0xf]
      %v1360 = vld [vmem:[%s1346 + $0x34] sm:$0xf]
      %v1361 = vld [vmem:[%s1346 + $0x38] sm:$0xf]
      %v1362 = vld [vmem:[%s1346 + $0x3c] sm:$0xf]
      %v1363 = vld [vmem:[%s1346 + $0x40] sm:$0xf]
      %v1364 = vld [vmem:[%s1346 + $0x44] sm:$0xf]
      %v1365 = vld [vmem:[%s1346 + $0x48] sm:$0xf]
      %v1366 = vld [vmem:[%s1346 + $0x4c] sm:$0xf]
      %v1367 = vld [vmem:[%s1346 + $0x50] sm:$0xf]
      %v1368 = vld [vmem:[%s1346 + $0x54] sm:$0xf]
      %v1369 = vld [vmem:[%s1346 + $0x58] sm:$0xf]
      %v1370 = vld [vmem:[%s1346 + $0x5c] sm:$0xf]
      %v1371 = vld [vmem:[%s1346 + $0x60] sm:$0xf]
      %v1372 = vld [vmem:[%s1346 + $0x64] sm:$0xf]
      %v1373 = vld [vmem:[%s1346 + $0x68] sm:$0xf]
      %v1374 = vld [vmem:[%s1346 + $0x6c] sm:$0xf]
      %v1375 = vld [vmem:[%s1346 + $0x70] sm:$0xf]
      %v1376 = vld [vmem:[%s1346 + $0x74] sm:$0xf]
      %v1377 = vld [vmem:[%s1346 + $0x78] sm:$0xf]
      %v1378 = vld [vmem:[%s1346 + $0x7c] sm:$0xf]
      %v1379 = vld [vmem:[%s1346 + $0x80] sm:$0xf]
      %v1380 = vld [vmem:[%s1346 + $0x84] sm:$0xf]
      %v1381 = vld [vmem:[%s1346 + $0x88] sm:$0xf]
      %v1382 = vld [vmem:[%s1346 + $0x8c] sm:$0xf]
      %v1383 = vld [vmem:[%s1346 + $0x90] sm:$0xf]
      %v1384 = vld [vmem:[%s1346 + $0x94] sm:$0xf]
      %v1385 = vld [vmem:[%s1346 + $0x98] sm:$0xf]
      %v1386 = vld [vmem:[%s1346 + $0x9c] sm:$0xf]
      %v1387 = vld [vmem:[%s1346 + $0xa0] sm:$0xf]
      %v1388 = vld [vmem:[%s1346 + $0xa4] sm:$0xf]
      %v1389 = vld [vmem:[%s1346 + $0xa8] sm:$0xf]
      %v1390 = vld [vmem:[%s1346 + $0xac] sm:$0xf]
      %v1391 = vld [vmem:[%s1346 + $0xb0] sm:$0xf]
      %v1392 = vld [vmem:[%s1346 + $0xb4] sm:$0xf]
      %v1393 = vld [vmem:[%s1346 + $0xb8] sm:$0xf]
      %v1394 = vld [vmem:[%s1346 + $0xbc] sm:$0xf]
      %v1395 = vpack.c.bf16 %v1336, %v1339
      %v1396 = vpack.c.bf16 %v1331, %v1330
      %v1397 = vpack.c.bf16 %v1345, %v1342
      %v1398 = vld [vmem:[%s10 + $0x4] sm:$0x1]
      %v1399 = vlaneseq
      %v1400 = vshrl.u32 %v1399, 7
      %v1401 = vsub.s32 0, %v1400
      %v1402 = vrot.slane %v1398, %v1401
      %v1451 = vunpack.c.l.b16 %v1347
      %v1452 = vunpack.c.l.b16 %v1348
      %v1453 = vunpack.c.l.b16 %v1349
      %v1454 = vunpack.c.l.b16 %v1350
      %v1455 = vunpack.c.l.b16 %v1351
      %v1456 = vunpack.c.l.b16 %v1352
      %v1457 = vunpack.c.l.b16 %v1353
      %v1458 = vunpack.c.l.b16 %v1354
      %v1459 = vunpack.c.l.b16 %v1355
      %v1460 = vunpack.c.l.b16 %v1356
      %v1461 = vunpack.c.l.b16 %v1357
      %v1462 = vunpack.c.l.b16 %v1358
      %v1463 = vunpack.c.l.b16 %v1359
      %v1464 = vunpack.c.l.b16 %v1360
      %v1465 = vunpack.c.l.b16 %v1361
      %v1466 = vunpack.c.l.b16 %v1362
      %v1467 = vunpack.c.l.b16 %v1363
      %v1468 = vunpack.c.l.b16 %v1364
      %v1469 = vunpack.c.l.b16 %v1365
      %v1470 = vunpack.c.l.b16 %v1366
      %v1471 = vunpack.c.l.b16 %v1367
      %v1472 = vunpack.c.l.b16 %v1368
      %v1473 = vunpack.c.l.b16 %v1369
      %v1474 = vunpack.c.l.b16 %v1370
      %v1475 = vunpack.c.l.b16 %v1371
      %v1476 = vunpack.c.l.b16 %v1372
      %v1477 = vunpack.c.l.b16 %v1373
      %v1478 = vunpack.c.l.b16 %v1374
      %v1479 = vunpack.c.l.b16 %v1375
      %v1480 = vunpack.c.l.b16 %v1376
      %v1481 = vunpack.c.l.b16 %v1377
      %v1482 = vunpack.c.l.b16 %v1378
      %v1483 = vunpack.c.l.b16 %v1379
      %v1484 = vunpack.c.l.b16 %v1380
      %v1485 = vunpack.c.l.b16 %v1381
      %v1486 = vunpack.c.l.b16 %v1382
      %v1487 = vunpack.c.l.b16 %v1383
      %v1488 = vunpack.c.l.b16 %v1384
      %v1489 = vunpack.c.l.b16 %v1385
      %v1490 = vunpack.c.l.b16 %v1386
      %v1491 = vunpack.c.l.b16 %v1387
      %v1492 = vunpack.c.l.b16 %v1388
      %v1493 = vunpack.c.l.b16 %v1389
      %v1494 = vunpack.c.l.b16 %v1390
      %v1495 = vunpack.c.l.b16 %v1391
      %v1496 = vunpack.c.l.b16 %v1392
      %v1497 = vunpack.c.l.b16 %v1393
      %v1498 = vunpack.c.l.b16 %v1394
      %v1499 = vpack.c.b16 %v1452, %v1451
      %v1500 = vpack.c.b16 %v1454, %v1453
      %v1501 = vpack.c.b16 %v1456, %v1455
      %v1502 = vpack.c.b16 %v1458, %v1457
      %v1503 = vpack.c.b16 %v1460, %v1459
      %v1504 = vpack.c.b16 %v1462, %v1461
      %v1505 = vpack.c.b16 %v1464, %v1463
      %v1506 = vpack.c.b16 %v1466, %v1465
      %v1507 = vpack.c.b16 %v1468, %v1467
      %v1508 = vpack.c.b16 %v1470, %v1469
      %v1509 = vpack.c.b16 %v1472, %v1471
      %v1510 = vpack.c.b16 %v1474, %v1473
      %v1511 = vpack.c.b16 %v1476, %v1475
      %v1512 = vpack.c.b16 %v1478, %v1477
      %v1513 = vpack.c.b16 %v1480, %v1479
      %v1514 = vpack.c.b16 %v1482, %v1481
      %v1515 = vpack.c.b16 %v1484, %v1483
      %v1516 = vpack.c.b16 %v1486, %v1485
      %v1517 = vpack.c.b16 %v1488, %v1487
      %v1518 = vpack.c.b16 %v1490, %v1489
      %v1519 = vpack.c.b16 %v1492, %v1491
      %v1520 = vpack.c.b16 %v1494, %v1493
      %v1521 = vpack.c.b16 %v1496, %v1495
      %v1522 = vpack.c.b16 %v1498, %v1497
      %1547 = vmatprep.subr.bf16.mxu0 0
      %1548 = vmatpush1.bf16.msra.mxu0 %v1499
      %1549 = vmatprep.subr.bf16.mxu0 0
      %1550 = vmatpush1.bf16.msra.mxu0 %v1500
      %1551 = vmatprep.subr.bf16.mxu0 0
      %1552 = vmatpush1.bf16.msra.mxu0 %v1501
      %1553 = vmatprep.subr.bf16.mxu0 0
      %1554 = vmatpush1.bf16.msra.mxu0 %v1502
      %1555 = vmatprep.subr.bf16.mxu0 0
      %1556 = vmatpush1.bf16.msra.mxu0 %v1503
      %1557 = vmatprep.subr.bf16.mxu0 0
      %1558 = vmatpush1.bf16.msra.mxu0 %v1504
      %1559 = vmatprep.subr.bf16.mxu0 0
      %1560 = vmatpush1.bf16.msra.mxu0 %v1505
      %1561 = vmatprep.subr.bf16.mxu0 0
      %1562 = vmatpush1.bf16.msra.mxu0 %v1506
      %1563 = vmatprep.subr.bf16.mxu0 0
      %1564 = vmatpush1.bf16.msra.mxu0 %v1507
      %1565 = vmatprep.subr.bf16.mxu0 0
      %1566 = vmatpush1.bf16.msra.mxu0 %v1508
      %1567 = vmatprep.subr.bf16.mxu0 0
      %1568 = vmatpush1.bf16.msra.mxu0 %v1509
      %1569 = vmatprep.subr.bf16.mxu0 0
      %1570 = vmatpush1.bf16.msra.mxu0 %v1510
      %1571 = vmatprep.subr.bf16.mxu0 0
      %1572 = vmatpush1.bf16.msra.mxu0 %v1511
      %1573 = vmatprep.subr.bf16.mxu0 0
      %1574 = vmatpush1.bf16.msra.mxu0 %v1512
      %1575 = vmatprep.subr.bf16.mxu0 0
      %1576 = vmatpush1.bf16.msra.mxu0 %v1513
      %1577 = vmatprep.subr.bf16.mxu0 0
      %1578 = vmatpush1.bf16.msra.mxu0 %v1514
      %1579 = vmatprep.mubr.bf16.mxu0 %v1396
      %1580 = vmatmul.mubr.bf16.gmra.mrb[0].mxu0 %v1395
      %v1581 = vpop.f32.mrb[0].mxu0
      %v1582 = vadd.f32 %v1402, %v1581
      %v1583 = vpop.f32.mrb[0].mxu0
      %v1584 = vpop.f32.mrb[0].mxu0
      %v1585 = vadd.f32 %v1402, %v1584
      %v1586 = vpop.f32.mrb[0].mxu0
      %1587 = vdwg.mxu0
      %1588 = vmatprep.subr.bf16.mxu0 0
      %1589 = vmatpush1.bf16.msra.mxu0 %v1515
      %1590 = vmatprep.subr.bf16.mxu0 0
      %1591 = vmatpush1.bf16.msra.mxu0 %v1516
      %1592 = vmatprep.subr.bf16.mxu0 0
      %1593 = vmatpush1.bf16.msra.mxu0 %v1517
      %1594 = vmatprep.subr.bf16.mxu0 0
      %1595 = vmatpush1.bf16.msra.mxu0 %v1518
      %1596 = vmatprep.subr.bf16.mxu0 0
      %1597 = vmatpush1.bf16.msra.mxu0 %v1519
      %1598 = vmatprep.subr.bf16.mxu0 0
      %1599 = vmatpush1.bf16.msra.mxu0 %v1520
      %1600 = vmatprep.subr.bf16.mxu0 0
      %1601 = vmatpush1.bf16.msra.mxu0 %v1521
      %1602 = vmatprep.subr.bf16.mxu0 0
      %1603 = vmatpush1.bf16.msra.mxu0 %v1522
      %1604 = vmatprep.subr.bf16.mxu0 0
      %1605 = vmatpush1.bf16.msra.mxu0 0
      %1606 = vmatprep.subr.bf16.mxu0 0
      %1607 = vmatpush1.bf16.msra.mxu0 0
      %1608 = vmatprep.subr.bf16.mxu0 0
      %1609 = vmatpush1.bf16.msra.mxu0 0
      %1610 = vmatprep.subr.bf16.mxu0 0
      %1611 = vmatpush1.bf16.msra.mxu0 0
      %1612 = vmatprep.subr.bf16.mxu0 0
      %1613 = vmatpush1.bf16.msra.mxu0 0
      %1614 = vmatprep.subr.bf16.mxu0 0
      %1615 = vmatpush1.bf16.msra.mxu0 0
      %1616 = vmatprep.subr.bf16.mxu0 0
      %1617 = vmatpush1.bf16.msra.mxu0 0
      %1618 = vmatprep.subr.bf16.mxu0 0
      %1619 = vmatpush1.bf16.msra.mxu0 0
      %1620 = vmatprep.mubr.bf16.mxu0 0
      %1621 = vmatmul.mubr.bf16.gmra.mrb[0].mxu0 %v1397
      %v1622 = vpop.f32.mrb[0].mxu0
      %v1623 = vadd.f32 %v1582, %v1622
      %v1624 = vpop.f32.mrb[0].mxu0
      %v1625 = vpop.f32.mrb[0].mxu0
      %v1626 = vadd.f32 %v1585, %v1625
      %v1627 = vpop.f32.mrb[0].mxu0
      %1628 = vdwg.mxu0
      %v1629 = vmax.f32 %v1623, 0.0
      %v1630 = vmax.f32 %v1626, 0.0
      %v1631 = vmin.f32 %v1629, 6.0
      %v1632 = vmin.f32 %v1630, 6.0
      %s1633 = scalar_lea.vmem %s2, 128
      %v1634 = vld [vmem:[%s1633] sm:$0xf]
      %v1635 = vld [vmem:[%s1633 + $0x4] sm:$0xf]
      %v1636 = vld [vmem:[%s1633 + $0x8] sm:$0xf]
      %v1637 = vld [vmem:[%s1633 + $0xc] sm:$0xf]
      %v1638 = vld [vmem:[%s1633 + $0x10] sm:$0xf]
      %v1639 = vld [vmem:[%s1633 + $0x14] sm:$0xf]
      %v1640 = vld [vmem:[%s1633 + $0x18] sm:$0xf]
      %v1641 = vld [vmem:[%s1633 + $0x1c] sm:$0xf]
      %v1642 = vld [vmem:[%s1633 + $0x20] sm:$0xf]
      %v1643 = vld [vmem:[%s1633 + $0x24] sm:$0xf]
      %v1644 = vld [vmem:[%s1633 + $0x28] sm:$0xf]
      %v1645 = vld [vmem:[%s1633 + $0x2c] sm:$0xf]
      %v1646 = vld [vmem:[%s1633 + $0x30] sm:$0xf]
      %v1647 = vld [vmem:[%s1633 + $0x34] sm:$0xf]
      %v1648 = vld [vmem:[%s1633 + $0x38] sm:$0xf]
      %v1649 = vld [vmem:[%s1633 + $0x3c] sm:$0xf]
      %v1650 = vpack.c.bf16 %v1632, %v1631
      %v1651 = vld [vmem:[%s10 + $0x5] sm:$0x1]
      %v1652 = vlaneseq
      %v1653 = vshrl.u32 %v1652, 7
      %v1654 = vsub.s32 0, %v1653
      %v1655 = vrot.slane %v1651, %v1654
      %v1672 = vunpack.c.l.b16 %v1634
      %v1673 = vunpack.c.l.b16 %v1635
      %v1674 = vunpack.c.l.b16 %v1636
      %v1675 = vunpack.c.l.b16 %v1637
      %v1676 = vunpack.c.l.b16 %v1638
      %v1677 = vunpack.c.l.b16 %v1639
      %v1678 = vunpack.c.l.b16 %v1640
      %v1679 = vunpack.c.l.b16 %v1641
      %v1680 = vunpack.c.l.b16 %v1642
      %v1681 = vunpack.c.l.b16 %v1643
      %v1682 = vunpack.c.l.b16 %v1644
      %v1683 = vunpack.c.l.b16 %v1645
      %v1684 = vunpack.c.l.b16 %v1646
      %v1685 = vunpack.c.l.b16 %v1647
      %v1686 = vunpack.c.l.b16 %v1648
      %v1687 = vunpack.c.l.b16 %v1649
      %v1688 = vpack.c.b16 %v1673, %v1672
      %v1689 = vpack.c.b16 %v1675, %v1674
      %v1690 = vpack.c.b16 %v1677, %v1676
      %v1691 = vpack.c.b16 %v1679, %v1678
      %v1692 = vpack.c.b16 %v1681, %v1680
      %v1693 = vpack.c.b16 %v1683, %v1682
      %v1694 = vpack.c.b16 %v1685, %v1684
      %v1695 = vpack.c.b16 %v1687, %v1686
      %1704 = vmatprep.subr.bf16.mxu0 0
      %1705 = vmatpush1.bf16.msra.mxu0 %v1688
      %1706 = vmatprep.subr.bf16.mxu0 0
      %1707 = vmatpush1.bf16.msra.mxu0 %v1689
      %1708 = vmatprep.subr.bf16.mxu0 0
      %1709 = vmatpush1.bf16.msra.mxu0 %v1690
      %1710 = vmatprep.subr.bf16.mxu0 0
      %1711 = vmatpush1.bf16.msra.mxu0 %v1691
      %1712 = vmatprep.subr.bf16.mxu0 0
      %1713 = vmatpush1.bf16.msra.mxu0 %v1692
      %1714 = vmatprep.subr.bf16.mxu0 0
      %1715 = vmatpush1.bf16.msra.mxu0 %v1693
      %1716 = vmatprep.subr.bf16.mxu0 0
      %1717 = vmatpush1.bf16.msra.mxu0 %v1694
      %1718 = vmatprep.subr.bf16.mxu0 0
      %1719 = vmatpush1.bf16.msra.mxu0 %v1695
      %1720 = vmatprep.subr.bf16.mxu0 0
      %1721 = vmatpush1.bf16.msra.mxu0 0
      %1722 = vmatprep.subr.bf16.mxu0 0
      %1723 = vmatpush1.bf16.msra.mxu0 0
      %1724 = vmatprep.subr.bf16.mxu0 0
      %1725 = vmatpush1.bf16.msra.mxu0 0
      %1726 = vmatprep.subr.bf16.mxu0 0
      %1727 = vmatpush1.bf16.msra.mxu0 0
      %1728 = vmatprep.subr.bf16.mxu0 0
      %1729 = vmatpush1.bf16.msra.mxu0 0
      %1730 = vmatprep.subr.bf16.mxu0 0
      %1731 = vmatpush1.bf16.msra.mxu0 0
      %1732 = vmatprep.subr.bf16.mxu0 0
      %1733 = vmatpush1.bf16.msra.mxu0 0
      %1734 = vmatprep.subr.bf16.mxu0 0
      %1735 = vmatpush1.bf16.msra.mxu0 0
      %1736 = vmatprep.mubr.bf16.mxu0 0
      %1737 = vmatmul.mubr.bf16.gmra.mrb[0].mxu0 %v1650
      %v1738 = vpop.f32.mrb[0].mxu0
      %v1739 = vadd.f32 %v1655, %v1738
      %v1740 = vpop.f32.mrb[0].mxu0
      %v1741 = vpop.f32.mrb[0].mxu0
      %v1742 = vadd.f32 %v1655, %v1741
      %v1743 = vpop.f32.mrb[0].mxu0
      %1744 = vdwg.mxu0
      %v1745 = vmax.f32 %v1739, 0.0
      %v1746 = vmax.f32 %v1742, 0.0
      %v1747 = vmin.f32 %v1745, 6.0
      %v1748 = vmin.f32 %v1746, 6.0
      %v1749 = vld [vmem:[%s11] sm:$0xf]
      %v1750 = vld [vmem:[%s11 + $0x4] sm:$0xf]
      %v1751 = vld [vmem:[%s11 + $0x8] sm:$0xf]
      %v1755 = vunpack.c.l.b16 %v1749
      %v1756 = vunpack.c.l.b16 %v1750
      %v1757 = vunpack.c.l.b16 %v1751
      %v1758 = vpack.c.b16 %v1756, %v1755
      %v1759 = vpack.c.b16 %v1757, %v1757
      %vm1760 = vcmask 130048
      %v1762 = vsel %vm1760, %v1758, 0
      %v1765 = vsel %vm1760, %v1759, 0
      %1767 = vmatprep.subr.bf16.mxu0 0
      %1768 = vmatpush1.bf16.msra.mxu0 %v979
      %1769 = vmatprep.subr.bf16.mxu0 0
      %1770 = vmatpush1.bf16.msra.mxu0 0
      %1771 = vmatprep.subr.bf16.mxu0 0
      %1772 = vmatpush1.bf16.msra.mxu0 0
      %1773 = vmatprep.subr.bf16.mxu0 0
      %1774 = vmatpush1.bf16.msra.mxu0 0
      %1775 = vmatprep.subr.bf16.mxu0 0
      %1776 = vmatpush1.bf16.msra.mxu0 0
      %1777 = vmatprep.subr.bf16.mxu0 0
      %1778 = vmatpush1.bf16.msra.mxu0 0
      %1779 = vmatprep.subr.bf16.mxu0 0
      %1780 = vmatpush1.bf16.msra.mxu0 0
      %1781 = vmatprep.subr.bf16.mxu0 0
      %1782 = vmatpush1.bf16.msra.mxu0 0
      %1783 = vmatprep.subr.bf16.mxu0 0
      %1784 = vmatpush1.bf16.msra.mxu0 0
      %1785 = vmatprep.subr.bf16.mxu0 0
      %1786 = vmatpush1.bf16.msra.mxu0 0
      %1787 = vmatprep.subr.bf16.mxu0 0
      %1788 = vmatpush1.bf16.msra.mxu0 0
      %1789 = vmatprep.subr.bf16.mxu0 0
      %1790 = vmatpush1.bf16.msra.mxu0 0
      %1791 = vmatprep.subr.bf16.mxu0 0
      %1792 = vmatpush1.bf16.msra.mxu0 0
      %1793 = vmatprep.subr.bf16.mxu0 0
      %1794 = vmatpush1.bf16.msra.mxu0 0
      %1795 = vmatprep.subr.bf16.mxu0 0
      %1796 = vmatpush1.bf16.msra.mxu0 0
      %1797 = vmatprep.subr.bf16.mxu0 0
      %1798 = vmatpush1.bf16.msra.mxu0 0
      %1799 = vmatprep.mubr.bf16.mxu0 0
      %1800 = vmatmul.mubr.bf16.gmra.mrb[0].mxu0 %v1762
      %v1801 = vpop.f32.mrb[0].mxu0
      %v1802 = vadd.f32 0.0, %v1801
      %v1803 = vpop.f32.mrb[0].mxu0
      %v1804 = vpop.f32.mrb[0].mxu0
      %v1805 = vadd.f32 0.0, %v1804
      %v1806 = vpop.f32.mrb[0].mxu0
      %1807 = vmatprep.mubr.bf16.mxu0 0
      %1808 = vmatmul.mubr.bf16.gmra.mrb[0].mxu0 %v1765
      %v1809 = vpop.f32.mrb[0].mxu0
      %v1810 = vadd.f32 0.0, %v1809
      %v1811 = vpop.f32.mrb[0].mxu0
      %v1812 = vpop.f32.mrb[0].mxu0
      %v1813 = vpop.f32.mrb[0].mxu0
      %1814 = vdwg.mxu0
      %v1815 = vmax.f32 %v1802, %v1805
      %v1816 = vmax.f32 %v1815, %v1810
      %v1817 = vld [vmem:[%s12] sm:$0xff]
      %v1818 = vld [vmem:[%s12 + $0x8] sm:$0xff]
      %v1819 = vld [vmem:[%s12 + $0x10] sm:$0xff]
      %v1820 = vld [vmem:[%s12 + $0x18] sm:$0xff]
      %v1821 = vld [vmem:[%s12 + $0x20] sm:$0xff]
      %v1822 = vld [vmem:[%s12 + $0x28] sm:$0xff]
      %v1823 = vld [vmem:[%s12 + $0x30] sm:$0xff]
      %v1824 = vld [vmem:[%s12 + $0x38] sm:$0xff]
      %v1825 = vld [vmem:[%s12 + $0x40] sm:$0xff]
      %v1826 = vld [vmem:[%s12 + $0x48] sm:$0xff]
      %v1827 = vld [vmem:[%s12 + $0x50] sm:$0xff]
      %v1828 = vld [vmem:[%s12 + $0x58] sm:$0xff]
      %v1829 = vld [vmem:[%s12 + $0x60] sm:$0xff]
      %v1830 = vld [vmem:[%s12 + $0x68] sm:$0xff]
      %v1831 = vld [vmem:[%s12 + $0x70] sm:$0xff]
      %v1832 = vld [vmem:[%s12 + $0x78] sm:$0xff]
      %v1833 = vpack.c.bf16 %v1816, %v1816
      %v1850 = vunpack.c.l.b16 %v1817
      %v1851 = vunpack.c.h.b16 %v1817
      %v1852 = vunpack.c.l.b16 %v1818
      %v1853 = vunpack.c.h.b16 %v1818
      %v1854 = vunpack.c.l.b16 %v1819
      %v1855 = vunpack.c.h.b16 %v1819
      %v1856 = vunpack.c.l.b16 %v1820
      %v1857 = vunpack.c.h.b16 %v1820
      %v1858 = vunpack.c.l.b16 %v1821
      %v1859 = vunpack.c.h.b16 %v1821
      %v1860 = vunpack.c.l.b16 %v1822
      %v1861 = vunpack.c.h.b16 %v1822
      %v1862 = vunpack.c.l.b16 %v1823
      %v1863 = vunpack.c.h.b16 %v1823
      %v1864 = vunpack.c.l.b16 %v1824
      %v1865 = vunpack.c.h.b16 %v1824
      %v1866 = vunpack.c.l.b16 %v1825
      %v1867 = vunpack.c.h.b16 %v1825
      %v1868 = vunpack.c.l.b16 %v1826
      %v1869 = vunpack.c.h.b16 %v1826
      %v1870 = vunpack.c.l.b16 %v1827
      %v1871 = vunpack.c.h.b16 %v1827
      %v1872 = vunpack.c.l.b16 %v1828
      %v1873 = vunpack.c.h.b16 %v1828
      %v1874 = vunpack.c.l.b16 %v1829
      %v1875 = vunpack.c.h.b16 %v1829
      %v1876 = vunpack.c.l.b16 %v1830
      %v1877 = vunpack.c.h.b16 %v1830
      %v1878 = vunpack.c.l.b16 %v1831
      %v1879 = vunpack.c.h.b16 %v1831
      %v1880 = vunpack.c.l.b16 %v1832
      %v1881 = vunpack.c.h.b16 %v1832
      %v1882 = vpack.c.b16 %v1852, %v1850
      %v1883 = vpack.c.b16 %v1853, %v1851
      %v1884 = vpack.c.b16 %v1856, %v1854
      %v1885 = vpack.c.b16 %v1857, %v1855
      %v1886 = vpack.c.b16 %v1860, %v1858
      %v1887 = vpack.c.b16 %v1861, %v1859
      %v1888 = vpack.c.b16 %v1864, %v1862
      %v1889 = vpack.c.b16 %v1865, %v1863
      %v1890 = vpack.c.b16 %v1868, %v1866
      %v1891 = vpack.c.b16 %v1869, %v1867
      %v1892 = vpack.c.b16 %v1872, %v1870
      %v1893 = vpack.c.b16 %v1873, %v1871
      %v1894 = vpack.c.b16 %v1876, %v1874
      %v1895 = vpack.c.b16 %v1877, %v1875
      %v1896 = vpack.c.b16 %v1880, %v1878
      %v1897 = vpack.c.b16 %v1881, %v1879
      %1914 = vmatprep.subr.bf16.mxu0 %v1883
      %1915 = vmatpush1.bf16.msra.mxu0 %v1882
      %1916 = vmatprep.subr.bf16.mxu0 %v1885
      %1917 = vmatpush1.bf16.msra.mxu0 %v1884
      %1918 = vmatprep.subr.bf16.mxu0 %v1887
      %1919 = vmatpush1.bf16.msra.mxu0 %v1886
      %1920 = vmatprep.subr.bf16.mxu0 %v1889
      %1921 = vmatpush1.bf16.msra.mxu0 %v1888
      %1922 = vmatprep.subr.bf16.mxu0 %v1891
      %1923 = vmatpush1.bf16.msra.mxu0 %v1890
      %1924 = vmatprep.subr.bf16.mxu0 %v1893
      %1925 = vmatpush1.bf16.msra.mxu0 %v1892
      %1926 = vmatprep.subr.bf16.mxu0 %v1895
      %1927 = vmatpush1.bf16.msra.mxu0 %v1894
      %1928 = vmatprep.subr.bf16.mxu0 %v1897
      %1929 = vmatpush1.bf16.msra.mxu0 %v1896
      %1930 = vmatprep.subr.bf16.mxu0 0
      %1931 = vmatpush1.bf16.msra.mxu0 0
      %1932 = vmatprep.subr.bf16.mxu0 0
      %1933 = vmatpush1.bf16.msra.mxu0 0
      %1934 = vmatprep.subr.bf16.mxu0 0
      %1935 = vmatpush1.bf16.msra.mxu0 0
      %1936 = vmatprep.subr.bf16.mxu0 0
      %1937 = vmatpush1.bf16.msra.mxu0 0
      %1938 = vmatprep.subr.bf16.mxu0 0
      %1939 = vmatpush1.bf16.msra.mxu0 0
      %1940 = vmatprep.subr.bf16.mxu0 0
      %1941 = vmatpush1.bf16.msra.mxu0 0
      %1942 = vmatprep.subr.bf16.mxu0 0
      %1943 = vmatpush1.bf16.msra.mxu0 0
      %1944 = vmatprep.subr.bf16.mxu0 0
      %1945 = vmatpush1.bf16.msra.mxu0 0
      %1946 = vmatprep.mubr.bf16.mxu0 0
      %1947 = vmatmul.mubr.bf16.gmra.mrb[0].mxu0 %v1833
      %v1948 = vpop.f32.mrb[0].mxu0
      %v1949 = vadd.f32 0.0, %v1948
      %v1950 = vpop.f32.mrb[0].mxu0
      %v1951 = vadd.f32 0.0, %v1950
      %v1952 = vpop.f32.mrb[0].mxu0
      %v1953 = vpop.f32.mrb[0].mxu0
      %1954 = vdwg.mxu0
      %1956 = vrot.lane.b32.xlu0 %v1949, 64
      %v1957 = vpop.permute.xlu0 %1956
      %v1959 = vmax.f32 %v1949, %v1957
      %v1960 = vmax.f32 %v1959, %v1951
      %v1962 = vrot.slane %v1960, 7
      %v1964 = vsel %vm500, 0.0, %v1962
      %v1965 = vrot.slane %v1960, 1
      %v1967 = vsel %vm507, %v1965, 0.0
      %1968 = vrot.lane.b32.xlu0 %v1960, 64
      %v1969 = vpop.permute.xlu0 %1968
      %vm1971 = vcmask 523264
      %v1972 = vsel %vm1971, %v1964, %v1969
      %v1973 = vld [vmem:[%s3] sm:$0xf]
      %v1974 = vld [vmem:[%s3 + $0x4] sm:$0xf]
      %v1975 = vld [vmem:[%s3 + $0x8] sm:$0xf]
      %v1976 = vld [vmem:[%s3 + $0xc] sm:$0xf]
      %v1977 = vld [vmem:[%s3 + $0x10] sm:$0xf]
      %v1978 = vld [vmem:[%s3 + $0x14] sm:$0xf]
      %v1979 = vld [vmem:[%s3 + $0x18] sm:$0xf]
      %v1980 = vld [vmem:[%s3 + $0x1c] sm:$0xf]
      %v1981 = vld [vmem:[%s3 + $0x20] sm:$0xf]
      %v1982 = vld [vmem:[%s3 + $0x24] sm:$0xf]
      %v1983 = vld [vmem:[%s3 + $0x28] sm:$0xf]
      %v1984 = vld [vmem:[%s3 + $0x2c] sm:$0xf]
      %v1985 = vld [vmem:[%s3 + $0x30] sm:$0xf]
      %v1986 = vld [vmem:[%s3 + $0x34] sm:$0xf]
      %v1987 = vld [vmem:[%s3 + $0x38] sm:$0xf]
      %v1988 = vld [vmem:[%s3 + $0x3c] sm:$0xf]
      %v1989 = vld [vmem:[%s3 + $0x40] sm:$0xf]
      %v1990 = vld [vmem:[%s3 + $0x44] sm:$0xf]
      %v1991 = vld [vmem:[%s3 + $0x48] sm:$0xf]
      %v1992 = vld [vmem:[%s3 + $0x4c] sm:$0xf]
      %v1993 = vld [vmem:[%s3 + $0x50] sm:$0xf]
      %v1994 = vld [vmem:[%s3 + $0x54] sm:$0xf]
      %v1995 = vld [vmem:[%s3 + $0x58] sm:$0xf]
      %v1996 = vld [vmem:[%s3 + $0x5c] sm:$0xf]
      %v1997 = vpack.c.bf16 %v1972, %v1972
      %v1998 = vpack.c.bf16 %v1967, %v1967
      %v1999 = vld [vmem:[%s10 + $0x8] sm:$0x1]
      %v2000 = vlaneseq
      %v2001 = vshrl.u32 %v2000, 7
      %v2002 = vsub.s32 0, %v2001
      %v2003 = vrot.slane %v1999, %v2002
      %v2028 = vunpack.c.l.b16 %v1973
      %v2029 = vunpack.c.l.b16 %v1974
      %v2030 = vunpack.c.l.b16 %v1975
      %v2031 = vunpack.c.l.b16 %v1976
      %v2032 = vunpack.c.l.b16 %v1977
      %v2033 = vunpack.c.l.b16 %v1978
      %v2034 = vunpack.c.l.b16 %v1979
      %v2035 = vunpack.c.l.b16 %v1980
      %v2036 = vunpack.c.l.b16 %v1981
      %v2037 = vunpack.c.l.b16 %v1982
      %v2038 = vunpack.c.l.b16 %v1983
      %v2039 = vunpack.c.l.b16 %v1984
      %v2040 = vunpack.c.l.b16 %v1985
      %v2041 = vunpack.c.l.b16 %v1986
      %v2042 = vunpack.c.l.b16 %v1987
      %v2043 = vunpack.c.l.b16 %v1988
      %v2044 = vunpack.c.l.b16 %v1989
      %v2045 = vunpack.c.l.b16 %v1990
      %v2046 = vunpack.c.l.b16 %v1991
      %v2047 = vunpack.c.l.b16 %v1992
      %v2048 = vunpack.c.l.b16 %v1993
      %v2049 = vunpack.c.l.b16 %v1994
      %v2050 = vunpack.c.l.b16 %v1995
      %v2051 = vunpack.c.l.b16 %v1996
      %v2052 = vpack.c.b16 %v2029, %v2028
      %v2053 = vpack.c.b16 %v2031, %v2030
      %v2054 = vpack.c.b16 %v2033, %v2032
      %v2055 = vpack.c.b16 %v2035, %v2034
      %v2056 = vpack.c.b16 %v2037, %v2036
      %v2057 = vpack.c.b16 %v2039, %v2038
      %v2058 = vpack.c.b16 %v2041, %v2040
      %v2059 = vpack.c.b16 %v2043, %v2042
      %v2060 = vpack.c.b16 %v2045, %v2044
      %v2061 = vpack.c.b16 %v2047, %v2046
      %v2062 = vpack.c.b16 %v2049, %v2048
      %v2063 = vpack.c.b16 %v2051, %v2050
      %v2077 = vsel %vm1971, %v1998, 0
      %2079 = vmatprep.subr.bf16.mxu0 0
      %2080 = vmatpush1.bf16.msra.mxu0 %v2052
      %2081 = vmatprep.subr.bf16.mxu0 0
      %2082 = vmatpush1.bf16.msra.mxu0 %v2053
      %2083 = vmatprep.subr.bf16.mxu0 0
      %2084 = vmatpush1.bf16.msra.mxu0 %v2054
      %2085 = vmatprep.subr.bf16.mxu0 0
      %2086 = vmatpush1.bf16.msra.mxu0 %v2055
      %2087 = vmatprep.subr.bf16.mxu0 0
      %2088 = vmatpush1.bf16.msra.mxu0 %v2056
      %2089 = vmatprep.subr.bf16.mxu0 0
      %2090 = vmatpush1.bf16.msra.mxu0 %v2057
      %2091 = vmatprep.subr.bf16.mxu0 0
      %2092 = vmatpush1.bf16.msra.mxu0 %v2058
      %2093 = vmatprep.subr.bf16.mxu0 0
      %2094 = vmatpush1.bf16.msra.mxu0 %v2059
      %2095 = vmatprep.subr.bf16.mxu0 0
      %2096 = vmatpush1.bf16.msra.mxu0 %v2060
      %2097 = vmatprep.subr.bf16.mxu0 0
      %2098 = vmatpush1.bf16.msra.mxu0 %v2061
      %2099 = vmatprep.subr.bf16.mxu0 0
      %2100 = vmatpush1.bf16.msra.mxu0 %v2062
      %2101 = vmatprep.subr.bf16.mxu0 0
      %2102 = vmatpush1.bf16.msra.mxu0 %v2063
      %2103 = vmatprep.subr.bf16.mxu0 0
      %2104 = vmatpush1.bf16.msra.mxu0 0
      %2105 = vmatprep.subr.bf16.mxu0 0
      %2106 = vmatpush1.bf16.msra.mxu0 0
      %2107 = vmatprep.subr.bf16.mxu0 0
      %2108 = vmatpush1.bf16.msra.mxu0 0
      %2109 = vmatprep.subr.bf16.mxu0 0
      %2110 = vmatpush1.bf16.msra.mxu0 0
      %2111 = vmatprep.mubr.bf16.mxu0 %v2077
      %2112 = vmatmul.mubr.bf16.gmra.mrb[0].mxu0 %v1997
      %v2113 = vpop.f32.mrb[0].mxu0
      %v2114 = vadd.f32 %v2003, %v2113
      %v2115 = vpop.f32.mrb[0].mxu0
      %v2116 = vpop.f32.mrb[0].mxu0
      %v2117 = vpop.f32.mrb[0].mxu0
      %2118 = vdwg.mxu0
      %v2119 = vmax.f32 %v2114, 0.0
      %v2120 = vmin.f32 %v2119, 6.0
      %v2121 = vld [vmem:[%s4] sm:$0xf]
      %v2122 = vld [vmem:[%s4 + $0x4] sm:$0xf]
      %v2123 = vld [vmem:[%s4 + $0x8] sm:$0xf]
      %v2124 = vld [vmem:[%s4 + $0xc] sm:$0xf]
      %v2125 = vld [vmem:[%s4 + $0x10] sm:$0xf]
      %v2126 = vld [vmem:[%s4 + $0x14] sm:$0xf]
      %v2127 = vld [vmem:[%s4 + $0x18] sm:$0xf]
      %v2128 = vld [vmem:[%s4 + $0x1c] sm:$0xf]
      %v2129 = vpack.c.bf16 %v2120, %v2120
      %v2130 = vld [vmem:[%s10 + $0x9] sm:$0x1]
      %v2131 = vlaneseq
      %v2132 = vshrl.u32 %v2131, 7
      %v2133 = vsub.s32 0, %v2132
      %v2134 = vrot.slane %v2130, %v2133
      %v2143 = vunpack.c.l.b16 %v2121
      %v2144 = vunpack.c.l.b16 %v2122
      %v2145 = vunpack.c.l.b16 %v2123
      %v2146 = vunpack.c.l.b16 %v2124
      %v2147 = vunpack.c.l.b16 %v2125
      %v2148 = vunpack.c.l.b16 %v2126
      %v2149 = vunpack.c.l.b16 %v2127
      %v2150 = vunpack.c.l.b16 %v2128
      %v2151 = vpack.c.b16 %v2144, %v2143
      %v2152 = vpack.c.b16 %v2146, %v2145
      %v2153 = vpack.c.b16 %v2148, %v2147
      %v2154 = vpack.c.b16 %v2150, %v2149
      %v2160 = vsel %vm1971, %v2129, 0
      %2162 = vmatprep.subr.bf16.mxu0 0
      %2163 = vmatpush1.bf16.msra.mxu0 %v2151
      %2164 = vmatprep.subr.bf16.mxu0 0
      %2165 = vmatpush1.bf16.msra.mxu0 %v2152
      %2166 = vmatprep.subr.bf16.mxu0 0
      %2167 = vmatpush1.bf16.msra.mxu0 %v2153
      %2168 = vmatprep.subr.bf16.mxu0 0
      %2169 = vmatpush1.bf16.msra.mxu0 %v2154
      %2170 = vmatprep.subr.bf16.mxu0 0
      %2171 = vmatpush1.bf16.msra.mxu0 0
      %2172 = vmatprep.subr.bf16.mxu0 0
      %2173 = vmatpush1.bf16.msra.mxu0 0
      %2174 = vmatprep.subr.bf16.mxu0 0
      %2175 = vmatpush1.bf16.msra.mxu0 0
      %2176 = vmatprep.subr.bf16.mxu0 0
      %2177 = vmatpush1.bf16.msra.mxu0 0
      %2178 = vmatprep.subr.bf16.mxu0 0
      %2179 = vmatpush1.bf16.msra.mxu0 0
      %2180 = vmatprep.subr.bf16.mxu0 0
      %2181 = vmatpush1.bf16.msra.mxu0 0
      %2182 = vmatprep.subr.bf16.mxu0 0
      %2183 = vmatpush1.bf16.msra.mxu0 0
      %2184 = vmatprep.subr.bf16.mxu0 0
      %2185 = vmatpush1.bf16.msra.mxu0 0
      %2186 = vmatprep.subr.bf16.mxu0 0
      %2187 = vmatpush1.bf16.msra.mxu0 0
      %2188 = vmatprep.subr.bf16.mxu0 0
      %2189 = vmatpush1.bf16.msra.mxu0 0
      %2190 = vmatprep.subr.bf16.mxu0 0
      %2191 = vmatpush1.bf16.msra.mxu0 0
      %2192 = vmatprep.subr.bf16.mxu0 0
      %2193 = vmatpush1.bf16.msra.mxu0 0
      %2194 = vmatprep.mubr.bf16.mxu0 0
      %2195 = vmatmul.mubr.bf16.gmra.mrb[0].mxu0 %v2160
      %v2196 = vpop.f32.mrb[0].mxu0
      %v2197 = vadd.f32 %v2134, %v2196
      %v2198 = vpop.f32.mrb[0].mxu0
      %v2199 = vpop.f32.mrb[0].mxu0
      %v2200 = vpop.f32.mrb[0].mxu0
      %2201 = vdwg.mxu0
      %v2202 = vmax.f32 %v2197, 0.0
      %v2203 = vmin.f32 %v2202, 6.0
      %v2205 = vrot.slane %v2203, 7
      %v2207 = vsel %vm500, 0.0, %v2205
      %v2208 = vrot.slane %v2203, 1
      %v2210 = vsel %vm507, %v2208, 0.0
      %2211 = vrot.lane.b32.xlu0 %v2203, 64
      %v2212 = vpop.permute.xlu0 %2211
      %v2214 = vsel %vm1971, %v2207, %v2212
      %s2215 = scalar_lea.vmem %s3, 96
      %v2216 = vld [vmem:[%s2215] sm:$0xf]
      %v2217 = vld [vmem:[%s2215 + $0x4] sm:$0xf]
      %v2218 = vld [vmem:[%s2215 + $0x8] sm:$0xf]
      %v2219 = vld [vmem:[%s2215 + $0xc] sm:$0xf]
      %v2220 = vld [vmem:[%s2215 + $0x10] sm:$0xf]
      %v2221 = vld [vmem:[%s2215 + $0x14] sm:$0xf]
      %v2222 = vld [vmem:[%s2215 + $0x18] sm:$0xf]
      %v2223 = vld [vmem:[%s2215 + $0x1c] sm:$0xf]
      %v2224 = vld [vmem:[%s2215 + $0x20] sm:$0xf]
      %v2225 = vld [vmem:[%s2215 + $0x24] sm:$0xf]
      %v2226 = vld [vmem:[%s2215 + $0x28] sm:$0xf]
      %v2227 = vld [vmem:[%s2215 + $0x2c] sm:$0xf]
      %v2228 = vld [vmem:[%s2215 + $0x30] sm:$0xf]
      %v2229 = vld [vmem:[%s2215 + $0x34] sm:$0xf]
      %v2230 = vld [vmem:[%s2215 + $0x38] sm:$0xf]
      %v2231 = vld [vmem:[%s2215 + $0x3c] sm:$0xf]
      %v2232 = vld [vmem:[%s2215 + $0x40] sm:$0xf]
      %v2233 = vld [vmem:[%s2215 + $0x44] sm:$0xf]
      %v2234 = vld [vmem:[%s2215 + $0x48] sm:$0xf]
      %v2235 = vld [vmem:[%s2215 + $0x4c] sm:$0xf]
      %v2236 = vld [vmem:[%s2215 + $0x50] sm:$0xf]
      %v2237 = vld [vmem:[%s2215 + $0x54] sm:$0xf]
      %v2238 = vld [vmem:[%s2215 + $0x58] sm:$0xf]
      %v2239 = vld [vmem:[%s2215 + $0x5c] sm:$0xf]
      %v2240 = vpack.c.bf16 %v2214, %v2214
      %v2241 = vpack.c.bf16 %v2210, %v2210
      %v2242 = vld [vmem:[%s10 + $0xa] sm:$0x1]
      %v2243 = vlaneseq
      %v2244 = vshrl.u32 %v2243, 7
      %v2245 = vsub.s32 0, %v2244
      %v2246 = vrot.slane %v2242, %v2245
      %v2271 = vunpack.c.l.b16 %v2216
      %v2272 = vunpack.c.l.b16 %v2217
      %v2273 = vunpack.c.l.b16 %v2218
      %v2274 = vunpack.c.l.b16 %v2219
      %v2275 = vunpack.c.l.b16 %v2220
      %v2276 = vunpack.c.l.b16 %v2221
      %v2277 = vunpack.c.l.b16 %v2222
      %v2278 = vunpack.c.l.b16 %v2223
      %v2279 = vunpack.c.l.b16 %v2224
      %v2280 = vunpack.c.l.b16 %v2225
      %v2281 = vunpack.c.l.b16 %v2226
      %v2282 = vunpack.c.l.b16 %v2227
      %v2283 = vunpack.c.l.b16 %v2228
      %v2284 = vunpack.c.l.b16 %v2229
      %v2285 = vunpack.c.l.b16 %v2230
      %v2286 = vunpack.c.l.b16 %v2231
      %v2287 = vunpack.c.l.b16 %v2232
      %v2288 = vunpack.c.l.b16 %v2233
      %v2289 = vunpack.c.l.b16 %v2234
      %v2290 = vunpack.c.l.b16 %v2235
      %v2291 = vunpack.c.l.b16 %v2236
      %v2292 = vunpack.c.l.b16 %v2237
      %v2293 = vunpack.c.l.b16 %v2238
      %v2294 = vunpack.c.l.b16 %v2239
      %v2295 = vpack.c.b16 %v2272, %v2271
      %v2296 = vpack.c.b16 %v2274, %v2273
      %v2297 = vpack.c.b16 %v2276, %v2275
      %v2298 = vpack.c.b16 %v2278, %v2277
      %v2299 = vpack.c.b16 %v2280, %v2279
      %v2300 = vpack.c.b16 %v2282, %v2281
      %v2301 = vpack.c.b16 %v2284, %v2283
      %v2302 = vpack.c.b16 %v2286, %v2285
      %v2303 = vpack.c.b16 %v2288, %v2287
      %v2304 = vpack.c.b16 %v2290, %v2289
      %v2305 = vpack.c.b16 %v2292, %v2291
      %v2306 = vpack.c.b16 %v2294, %v2293
      %v2320 = vsel %vm1971, %v2241, 0
      %2322 = vmatprep.subr.bf16.mxu0 0
      %2323 = vmatpush1.bf16.msra.mxu0 %v2295
      %2324 = vmatprep.subr.bf16.mxu0 0
      %2325 = vmatpush1.bf16.msra.mxu0 %v2296
      %2326 = vmatprep.subr.bf16.mxu0 0
      %2327 = vmatpush1.bf16.msra.mxu0 %v2297
      %2328 = vmatprep.subr.bf16.mxu0 0
      %2329 = vmatpush1.bf16.msra.mxu0 %v2298
      %2330 = vmatprep.subr.bf16.mxu0 0
      %2331 = vmatpush1.bf16.msra.mxu0 %v2299
      %2332 = vmatprep.subr.bf16.mxu0 0
      %2333 = vmatpush1.bf16.msra.mxu0 %v2300
      %2334 = vmatprep.subr.bf16.mxu0 0
      %2335 = vmatpush1.bf16.msra.mxu0 %v2301
      %2336 = vmatprep.subr.bf16.mxu0 0
      %2337 = vmatpush1.bf16.msra.mxu0 %v2302
      %2338 = vmatprep.subr.bf16.mxu0 0
      %2339 = vmatpush1.bf16.msra.mxu0 %v2303
      %2340 = vmatprep.subr.bf16.mxu0 0
      %2341 = vmatpush1.bf16.msra.mxu0 %v2304
      %2342 = vmatprep.subr.bf16.mxu0 0
      %2343 = vmatpush1.bf16.msra.mxu0 %v2305
      %2344 = vmatprep.subr.bf16.mxu0 0
      %2345 = vmatpush1.bf16.msra.mxu0 %v2306
      %2346 = vmatprep.subr.bf16.mxu0 0
      %2347 = vmatpush1.bf16.msra.mxu0 0
      %2348 = vmatprep.subr.bf16.mxu0 0
      %2349 = vmatpush1.bf16.msra.mxu0 0
      %2350 = vmatprep.subr.bf16.mxu0 0
      %2351 = vmatpush1.bf16.msra.mxu0 0
      %2352 = vmatprep.subr.bf16.mxu0 0
      %2353 = vmatpush1.bf16.msra.mxu0 0
      %2354 = vmatprep.mubr.bf16.mxu0 %v2320
      %2355 = vmatmul.mubr.bf16.gmra.mrb[0].mxu0 %v2240
      %v2356 = vpop.f32.mrb[0].mxu0
      %v2357 = vadd.f32 %v2246, %v2356
      %v2358 = vpop.f32.mrb[0].mxu0
      %v2359 = vpop.f32.mrb[0].mxu0
      %v2360 = vpop.f32.mrb[0].mxu0
      %2361 = vdwg.mxu0
      %v2362 = vmax.f32 %v2357, 0.0
      %v2363 = vmin.f32 %v2362, 6.0
      %s2364 = scalar_lea.vmem %s4, 32
      %v2365 = vld [vmem:[%s2364] sm:$0xf]
      %v2366 = vld [vmem:[%s2364 + $0x4] sm:$0xf]
      %v2367 = vld [vmem:[%s2364 + $0x8] sm:$0xf]
      %v2368 = vld [vmem:[%s2364 + $0xc] sm:$0xf]
      %v2369 = vld [vmem:[%s2364 + $0x10] sm:$0xf]
      %v2370 = vld [vmem:[%s2364 + $0x14] sm:$0xf]
      %v2371 = vld [vmem:[%s2364 + $0x18] sm:$0xf]
      %v2372 = vld [vmem:[%s2364 + $0x1c] sm:$0xf]
      %v2373 = vpack.c.bf16 %v2363, %v2363
      %v2374 = vld [vmem:[%s10 + $0xb] sm:$0x1]
      %v2375 = vlaneseq
      %v2376 = vshrl.u32 %v2375, 7
      %v2377 = vsub.s32 0, %v2376
      %v2378 = vrot.slane %v2374, %v2377
      %v2387 = vunpack.c.l.b16 %v2365
      %v2388 = vunpack.c.l.b16 %v2366
      %v2389 = vunpack.c.l.b16 %v2367
      %v2390 = vunpack.c.l.b16 %v2368
      %v2391 = vunpack.c.l.b16 %v2369
      %v2392 = vunpack.c.l.b16 %v2370
      %v2393 = vunpack.c.l.b16 %v2371
      %v2394 = vunpack.c.l.b16 %v2372
      %v2395 = vpack.c.b16 %v2388, %v2387
      %v2396 = vpack.c.b16 %v2390, %v2389
      %v2397 = vpack.c.b16 %v2392, %v2391
      %v2398 = vpack.c.b16 %v2394, %v2393
      %v2404 = vsel %vm1971, %v2373, 0
      %2406 = vmatprep.subr.bf16.mxu0 0
      %2407 = vmatpush1.bf16.msra.mxu0 %v2395
      %2408 = vmatprep.subr.bf16.mxu0 0
      %2409 = vmatpush1.bf16.msra.mxu0 %v2396
      %2410 = vmatprep.subr.bf16.mxu0 0
      %2411 = vmatpush1.bf16.msra.mxu0 %v2397
      %2412 = vmatprep.subr.bf16.mxu0 0
      %2413 = vmatpush1.bf16.msra.mxu0 %v2398
      %2414 = vmatprep.subr.bf16.mxu0 0
      %2415 = vmatpush1.bf16.msra.mxu0 0
      %2416 = vmatprep.subr.bf16.mxu0 0
      %2417 = vmatpush1.bf16.msra.mxu0 0
      %2418 = vmatprep.subr.bf16.mxu0 0
      %2419 = vmatpush1.bf16.msra.mxu0 0
      %2420 = vmatprep.subr.bf16.mxu0 0
      %2421 = vmatpush1.bf16.msra.mxu0 0
      %2422 = vmatprep.subr.bf16.mxu0 0
      %2423 = vmatpush1.bf16.msra.mxu0 0
      %2424 = vmatprep.subr.bf16.mxu0 0
      %2425 = vmatpush1.bf16.msra.mxu0 0
      %2426 = vmatprep.subr.bf16.mxu0 0
      %2427 = vmatpush1.bf16.msra.mxu0 0
      %2428 = vmatprep.subr.bf16.mxu0 0
      %2429 = vmatpush1.bf16.msra.mxu0 0
      %2430 = vmatprep.subr.bf16.mxu0 0
      %2431 = vmatpush1.bf16.msra.mxu0 0
      %2432 = vmatprep.subr.bf16.mxu0 0
      %2433 = vmatpush1.bf16.msra.mxu0 0
      %2434 = vmatprep.subr.bf16.mxu0 0
      %2435 = vmatpush1.bf16.msra.mxu0 0
      %2436 = vmatprep.subr.bf16.mxu0 0
      %2437 = vmatpush1.bf16.msra.mxu0 0
      %2438 = vmatprep.mubr.bf16.mxu0 0
      %2439 = vmatmul.mubr.bf16.gmra.mrb[0].mxu0 %v2404
      %v2440 = vpop.f32.mrb[0].mxu0
      %v2441 = vadd.f32 %v2378, %v2440
      %v2442 = vpop.f32.mrb[0].mxu0
      %v2443 = vpop.f32.mrb[0].mxu0
      %v2444 = vpop.f32.mrb[0].mxu0
      %2445 = vdwg.mxu0
      %v2446 = vmax.f32 %v2441, 0.0
      %v2447 = vmin.f32 %v2446, 6.0
      %s2448 = scalar_lea.vmem %s11, 12
      %v2449 = vld [vmem:[%s2448] sm:$0xf]
      %v2450 = vld [vmem:[%s2448 + $0x4] sm:$0x3]
      %v2451 = vpack.c.bf16 %v2203, %v2203
      %v2454 = vunpack.c.l.b16 %v2449
      %v2455 = vunpack.c.l.b16 %v2450
      %v2456 = vpack.c.b16 %v2455, %v2454
      %vm2457 = vcmask 64512
      %v2459 = vsel %vm2457, %v2456, 0
      %vm2461 = vcmask 1043456
      %v2463 = vsel %vm2461, %v2451, 0
      %2465 = vmatprep.subr.bf16.mxu0 0
      %2466 = vmatpush1.bf16.msra.mxu0 %v2463
      %2467 = vmatprep.subr.bf16.mxu0 0
      %2468 = vmatpush1.bf16.msra.mxu0 0
      %2469 = vmatprep.subr.bf16.mxu0 0
      %2470 = vmatpush1.bf16.msra.mxu0 0
      %2471 = vmatprep.subr.bf16.mxu0 0
      %2472 = vmatpush1.bf16.msra.mxu0 0
      %2473 = vmatprep.subr.bf16.mxu0 0
      %2474 = vmatpush1.bf16.msra.mxu0 0
      %2475 = vmatprep.subr.bf16.mxu0 0
      %2476 = vmatpush1.bf16.msra.mxu0 0
      %2477 = vmatprep.subr.bf16.mxu0 0
      %2478 = vmatpush1.bf16.msra.mxu0 0
      %2479 = vmatprep.subr.bf16.mxu0 0
      %2480 = vmatpush1.bf16.msra.mxu0 0
      %2481 = vmatprep.subr.bf16.mxu0 0
      %2482 = vmatpush1.bf16.msra.mxu0 0
      %2483 = vmatprep.subr.bf16.mxu0 0
      %2484 = vmatpush1.bf16.msra.mxu0 0
      %2485 = vmatprep.subr.bf16.mxu0 0
      %2486 = vmatpush1.bf16.msra.mxu0 0
      %2487 = vmatprep.subr.bf16.mxu0 0
      %2488 = vmatpush1.bf16.msra.mxu0 0
      %2489 = vmatprep.subr.bf16.mxu0 0
      %2490 = vmatpush1.bf16.msra.mxu0 0
      %2491 = vmatprep.subr.bf16.mxu0 0
      %2492 = vmatpush1.bf16.msra.mxu0 0
      %2493 = vmatprep.subr.bf16.mxu0 0
      %2494 = vmatpush1.bf16.msra.mxu0 0
      %2495 = vmatprep.subr.bf16.mxu0 0
      %2496 = vmatpush1.bf16.msra.mxu0 0
      %2497 = vmatprep.mubr.bf16.mxu0 0
      %2498 = vmatmul.mubr.bf16.gmra.mrb[0].mxu0 %v2459
      %v2499 = vpop.f32.mrb[0].mxu0
      %v2500 = vadd.f32 0.0, %v2499
      %v2501 = vpop.f32.mrb[0].mxu0
      %v2502 = vpop.f32.mrb[0].mxu0
      %v2503 = vadd.f32 0.0, %v2502
      %v2504 = vpop.f32.mrb[0].mxu0
      %2505 = vdwg.mxu0
      %v2507 = vrot.slane %v2500, 4
      %v2509 = vmax.f32 %v2500, %v2507
      %v2510 = vmax.f32 %v2509, %v2503
      %s2511 = scalar_lea.vmem %s12, 128
      %v2512 = vld [vmem:[%s2511] sm:$0xf]
      %v2513 = vld [vmem:[%s2511 + $0x8] sm:$0xf]
      %v2514 = vld [vmem:[%s2511 + $0x10] sm:$0xf]
      %v2515 = vld [vmem:[%s2511 + $0x18] sm:$0xf]
      %v2516 = vld [vmem:[%s2511 + $0x20] sm:$0xf]
      %v2517 = vld [vmem:[%s2511 + $0x28] sm:$0xf]
      %v2518 = vld [vmem:[%s2511 + $0x30] sm:$0xf]
      %v2519 = vld [vmem:[%s2511 + $0x38] sm:$0xf]
      %v2520 = vpack.c.bf16 %v2510, %v2510
      %v2529 = vunpack.c.l.b16 %v2512
      %v2530 = vunpack.c.l.b16 %v2513
      %v2531 = vunpack.c.l.b16 %v2514
      %v2532 = vunpack.c.l.b16 %v2515
      %v2533 = vunpack.c.l.b16 %v2516
      %v2534 = vunpack.c.l.b16 %v2517
      %v2535 = vunpack.c.l.b16 %v2518
      %v2536 = vunpack.c.l.b16 %v2519
      %v2537 = vpack.c.b16 %v2530, %v2529
      %v2538 = vpack.c.b16 %v2532, %v2531
      %v2539 = vpack.c.b16 %v2534, %v2533
      %v2540 = vpack.c.b16 %v2536, %v2535
      %v2546 = vsel %vm1971, %v2520, 0
      %2548 = vmatprep.subr.bf16.mxu0 0
      %2549 = vmatpush1.bf16.msra.mxu0 %v2537
      %2550 = vmatprep.subr.bf16.mxu0 0
      %2551 = vmatpush1.bf16.msra.mxu0 %v2538
      %2552 = vmatprep.subr.bf16.mxu0 0
      %2553 = vmatpush1.bf16.msra.mxu0 %v2539
      %2554 = vmatprep.subr.bf16.mxu0 0
      %2555 = vmatpush1.bf16.msra.mxu0 %v2540
      %2556 = vmatprep.subr.bf16.mxu0 0
      %2557 = vmatpush1.bf16.msra.mxu0 0
      %2558 = vmatprep.subr.bf16.mxu0 0
      %2559 = vmatpush1.bf16.msra.mxu0 0
      %2560 = vmatprep.subr.bf16.mxu0 0
      %2561 = vmatpush1.bf16.msra.mxu0 0
      %2562 = vmatprep.subr.bf16.mxu0 0
      %2563 = vmatpush1.bf16.msra.mxu0 0
      %2564 = vmatprep.subr.bf16.mxu0 0
      %2565 = vmatpush1.bf16.msra.mxu0 0
      %2566 = vmatprep.subr.bf16.mxu0 0
      %2567 = vmatpush1.bf16.msra.mxu0 0
      %2568 = vmatprep.subr.bf16.mxu0 0
      %2569 = vmatpush1.bf16.msra.mxu0 0
      %2570 = vmatprep.subr.bf16.mxu0 0
      %2571 = vmatpush1.bf16.msra.mxu0 0
      %2572 = vmatprep.subr.bf16.mxu0 0
      %2573 = vmatpush1.bf16.msra.mxu0 0
      %2574 = vmatprep.subr.bf16.mxu0 0
      %2575 = vmatpush1.bf16.msra.mxu0 0
      %2576 = vmatprep.subr.bf16.mxu0 0
      %2577 = vmatpush1.bf16.msra.mxu0 0
      %2578 = vmatprep.subr.bf16.mxu0 0
      %2579 = vmatpush1.bf16.msra.mxu0 0
      %2580 = vmatprep.mubr.bf16.mxu0 0
      %2581 = vmatmul.mubr.bf16.gmra.mrb[0].mxu0 %v2546
      %v2582 = vpop.f32.mrb[0].mxu0
      %v2583 = vadd.f32 0.0, %v2582
      %v2584 = vpop.f32.mrb[0].mxu0
      %v2585 = vpop.f32.mrb[0].mxu0
      %v2586 = vpop.f32.mrb[0].mxu0
      %2587 = vdwg.mxu0
      %2589 = vrot.lane.b32.xlu0 %v2583, 96
      %v2590 = vpop.permute.xlu0 %2589
      %v2592 = vmax.f32 %v2583, %v2590
      %2593 = vrot.lane.b32.xlu0 %v2583, 64
      %v2594 = vpop.permute.xlu0 %2593
      %v2596 = vmax.f32 %v2592, %v2594
      %v2598 = vrot.slane %v2596, 7
      %v2600 = vsel %vm500, 0.0, %v2598
      %v2601 = vrot.slane %v2596, 1
      %vm2603 = vcmask 1042432
      %v2604 = vsel %vm2603, %v2601, 0.0
      %2605 = vrot.lane.b32.xlu0 %v2596, 32
      %v2606 = vpop.permute.xlu0 %2605
      %2609 = vrot.lane.b32.xlu0 %v2604, 64
      %v2610 = vpop.permute.xlu0 %2609
      %vm2612 = vcmask 261120
      %v2613 = vsel %vm2612, %v2600, %v2606
      %v2614 = vsel %vm1971, %v2613, %v2610
      %v2615 = vld [vmem:[%s5] sm:$0xf]
      %v2616 = vld [vmem:[%s5 + $0x4] sm:$0xf]
      %v2617 = vld [vmem:[%s5 + $0x8] sm:$0xf]
      %v2618 = vld [vmem:[%s5 + $0xc] sm:$0xf]
      %v2619 = vld [vmem:[%s5 + $0x10] sm:$0xf]
      %v2620 = vld [vmem:[%s5 + $0x14] sm:$0xf]
      %v2621 = vld [vmem:[%s5 + $0x18] sm:$0xf]
      %v2622 = vld [vmem:[%s5 + $0x1c] sm:$0xf]
      %v2623 = vld [vmem:[%s5 + $0x20] sm:$0xf]
      %v2624 = vld [vmem:[%s5 + $0x24] sm:$0xf]
      %v2625 = vld [vmem:[%s5 + $0x28] sm:$0xf]
      %v2626 = vld [vmem:[%s5 + $0x2c] sm:$0xf]
      %v2627 = vpack.c.bf16 %v2614, %v2614
      %v2628 = vld [vmem:[%s10 + $0xe] sm:$0x1]
      %v2629 = vlaneseq
      %v2630 = vshrl.u32 %v2629, 7
      %v2631 = vsub.s32 0, %v2630
      %v2632 = vrot.slane %v2628, %v2631
      %v2645 = vunpack.c.l.b16 %v2615
      %v2646 = vunpack.c.l.b16 %v2616
      %v2647 = vunpack.c.l.b16 %v2617
      %v2648 = vunpack.c.l.b16 %v2618
      %v2649 = vunpack.c.l.b16 %v2619
      %v2650 = vunpack.c.l.b16 %v2620
      %v2651 = vunpack.c.l.b16 %v2621
      %v2652 = vunpack.c.l.b16 %v2622
      %v2653 = vunpack.c.l.b16 %v2623
      %v2654 = vunpack.c.l.b16 %v2624
      %v2655 = vunpack.c.l.b16 %v2625
      %v2656 = vunpack.c.l.b16 %v2626
      %v2657 = vpack.c.b16 %v2646, %v2645
      %v2658 = vpack.c.b16 %v2648, %v2647
      %v2659 = vpack.c.b16 %v2650, %v2649
      %v2660 = vpack.c.b16 %v2652, %v2651
      %v2661 = vpack.c.b16 %v2654, %v2653
      %v2662 = vpack.c.b16 %v2656, %v2655
      %vm2669 = vcmask 785408
      %v2671 = vsel %vm2669, %v2627, 0
      %2673 = vmatprep.subr.bf16.mxu0 0
      %2674 = vmatpush1.bf16.msra.mxu0 %v2657
      %2675 = vmatprep.subr.bf16.mxu0 0
      %2676 = vmatpush1.bf16.msra.mxu0 %v2658
      %2677 = vmatprep.subr.bf16.mxu0 0
      %2678 = vmatpush1.bf16.msra.mxu0 %v2659
      %2679 = vmatprep.subr.bf16.mxu0 0
      %2680 = vmatpush1.bf16.msra.mxu0 %v2660
      %2681 = vmatprep.subr.bf16.mxu0 0
      %2682 = vmatpush1.bf16.msra.mxu0 %v2661
      %2683 = vmatprep.subr.bf16.mxu0 0
      %2684 = vmatpush1.bf16.msra.mxu0 %v2662
      %2685 = vmatprep.subr.bf16.mxu0 0
      %2686 = vmatpush1.bf16.msra.mxu0 0
      %2687 = vmatprep.subr.bf16.mxu0 0
      %2688 = vmatpush1.bf16.msra.mxu0 0
      %2689 = vmatprep.subr.bf16.mxu0 0
      %2690 = vmatpush1.bf16.msra.mxu0 0
      %2691 = vmatprep.subr.bf16.mxu0 0
      %2692 = vmatpush1.bf16.msra.mxu0 0
      %2693 = vmatprep.subr.bf16.mxu0 0
      %2694 = vmatpush1.bf16.msra.mxu0 0
      %2695 = vmatprep.subr.bf16.mxu0 0
      %2696 = vmatpush1.bf16.msra.mxu0 0
      %2697 = vmatprep.subr.bf16.mxu0 0
      %2698 = vmatpush1.bf16.msra.mxu0 0
      %2699 = vmatprep.subr.bf16.mxu0 0
      %2700 = vmatpush1.bf16.msra.mxu0 0
      %2701 = vmatprep.subr.bf16.mxu0 0
      %2702 = vmatpush1.bf16.msra.mxu0 0
      %2703 = vmatprep.subr.bf16.mxu0 0
      %2704 = vmatpush1.bf16.msra.mxu0 0
      %2705 = vmatprep.mubr.bf16.mxu0 0
      %2706 = vmatmul.mubr.bf16.gmra.mrb[0].mxu0 %v2671
      %v2707 = vpop.f32.mrb[0].mxu0
      %v2708 = vadd.f32 %v2632, %v2707
      %v2709 = vpop.f32.mrb[0].mxu0
      %v2710 = vpop.f32.mrb[0].mxu0
      %v2711 = vpop.f32.mrb[0].mxu0
      %2712 = vdwg.mxu0
      %v2713 = vmax.f32 %v2708, 0.0
      %v2714 = vmin.f32 %v2713, 6.0
      %v2715 = vld [vmem:[%s6] sm:$0xf]
      %v2716 = vld [vmem:[%s6 + $0x4] sm:$0xf]
      %v2717 = vld [vmem:[%s6 + $0x8] sm:$0xf]
      %v2718 = vld [vmem:[%s6 + $0xc] sm:$0xf]
      %v2719 = vpack.c.bf16 %v2714, %v2714
      %v2720 = vld [vmem:[%s10 + $0xf] sm:$0x1]
      %v2721 = vlaneseq
      %v2722 = vshrl.u32 %v2721, 7
      %v2723 = vsub.s32 0, %v2722
      %v2724 = vrot.slane %v2720, %v2723
      %v2729 = vunpack.c.l.b16 %v2715
      %v2730 = vunpack.c.l.b16 %v2716
      %v2731 = vunpack.c.l.b16 %v2717
      %v2732 = vunpack.c.l.b16 %v2718
      %v2733 = vpack.c.b16 %v2730, %v2729
      %v2734 = vpack.c.b16 %v2732, %v2731
      %v2738 = vsel %vm2612, %v2719, 0
      %2740 = vmatprep.subr.bf16.mxu0 0
      %2741 = vmatpush1.bf16.msra.mxu0 %v2733
      %2742 = vmatprep.subr.bf16.mxu0 0
      %2743 = vmatpush1.bf16.msra.mxu0 %v2734
      %2744 = vmatprep.subr.bf16.mxu0 0
      %2745 = vmatpush1.bf16.msra.mxu0 0
      %2746 = vmatprep.subr.bf16.mxu0 0
      %2747 = vmatpush1.bf16.msra.mxu0 0
      %2748 = vmatprep.subr.bf16.mxu0 0
      %2749 = vmatpush1.bf16.msra.mxu0 0
      %2750 = vmatprep.subr.bf16.mxu0 0
      %2751 = vmatpush1.bf16.msra.mxu0 0
      %2752 = vmatprep.subr.bf16.mxu0 0
      %2753 = vmatpush1.bf16.msra.mxu0 0
      %2754 = vmatprep.subr.bf16.mxu0 0
      %2755 = vmatpush1.bf16.msra.mxu0 0
      %2756 = vmatprep.subr.bf16.mxu0 0
      %2757 = vmatpush1.bf16.msra.mxu0 0
      %2758 = vmatprep.subr.bf16.mxu0 0
      %2759 = vmatpush1.bf16.msra.mxu0 0
      %2760 = vmatprep.subr.bf16.mxu0 0
      %2761 = vmatpush1.bf16.msra.mxu0 0
      %2762 = vmatprep.subr.bf16.mxu0 0
      %2763 = vmatpush1.bf16.msra.mxu0 0
      %2764 = vmatprep.subr.bf16.mxu0 0
      %2765 = vmatpush1.bf16.msra.mxu0 0
      %2766 = vmatprep.subr.bf16.mxu0 0
      %2767 = vmatpush1.bf16.msra.mxu0 0
      %2768 = vmatprep.subr.bf16.mxu0 0
      %2769 = vmatpush1.bf16.msra.mxu0 0
      %2770 = vmatprep.subr.bf16.mxu0 0
      %2771 = vmatpush1.bf16.msra.mxu0 0
      %2772 = vmatprep.mubr.bf16.mxu0 0
      %2773 = vmatmul.mubr.bf16.gmra.mrb[0].mxu0 %v2738
      %v2774 = vpop.f32.mrb[0].mxu0
      %v2775 = vadd.f32 %v2724, %v2774
      %v2776 = vpop.f32.mrb[0].mxu0
      %v2777 = vpop.f32.mrb[0].mxu0
      %v2778 = vpop.f32.mrb[0].mxu0
      %2779 = vdwg.mxu0
      %v2780 = vmax.f32 %v2775, 0.0
      %v2781 = vmin.f32 %v2780, 6.0
      %v2783 = vrot.slane %v2781, 7
      %v2785 = vsel %vm500, 0.0, %v2783
      %v2786 = vrot.slane %v2781, 1
      %v2788 = vsel %vm2603, %v2786, 0.0
      %2789 = vrot.lane.b32.xlu0 %v2781, 32
      %v2790 = vpop.permute.xlu0 %2789
      %2793 = vrot.lane.b32.xlu0 %v2788, 64
      %v2794 = vpop.permute.xlu0 %2793
      %v2796 = vsel %vm2612, %v2785, %v2790
      %v2797 = vsel %vm1971, %v2796, %v2794
      %s2798 = scalar_lea.vmem %s5, 48
      %v2799 = vld [vmem:[%s2798] sm:$0xf]
      %v2800 = vld [vmem:[%s2798 + $0x4] sm:$0xf]
      %v2801 = vld [vmem:[%s2798 + $0x8] sm:$0xf]
      %v2802 = vld [vmem:[%s2798 + $0xc] sm:$0xf]
      %v2803 = vld [vmem:[%s2798 + $0x10] sm:$0xf]
      %v2804 = vld [vmem:[%s2798 + $0x14] sm:$0xf]
      %v2805 = vld [vmem:[%s2798 + $0x18] sm:$0xf]
      %v2806 = vld [vmem:[%s2798 + $0x1c] sm:$0xf]
      %v2807 = vld [vmem:[%s2798 + $0x20] sm:$0xf]
      %v2808 = vld [vmem:[%s2798 + $0x24] sm:$0xf]
      %v2809 = vld [vmem:[%s2798 + $0x28] sm:$0xf]
      %v2810 = vld [vmem:[%s2798 + $0x2c] sm:$0xf]
      %v2811 = vpack.c.bf16 %v2797, %v2797
      %v2812 = vld [vmem:[%s10 + $0x10] sm:$0x1]
      %v2813 = vlaneseq
      %v2814 = vshrl.u32 %v2813, 7
      %v2815 = vsub.s32 0, %v2814
      %v2816 = vrot.slane %v2812, %v2815
      %v2829 = vunpack.c.l.b16 %v2799
      %v2830 = vunpack.c.l.b16 %v2800
      %v2831 = vunpack.c.l.b16 %v2801
      %v2832 = vunpack.c.l.b16 %v2802
      %v2833 = vunpack.c.l.b16 %v2803
      %v2834 = vunpack.c.l.b16 %v2804
      %v2835 = vunpack.c.l.b16 %v2805
      %v2836 = vunpack.c.l.b16 %v2806
      %v2837 = vunpack.c.l.b16 %v2807
      %v2838 = vunpack.c.l.b16 %v2808
      %v2839 = vunpack.c.l.b16 %v2809
      %v2840 = vunpack.c.l.b16 %v2810
      %v2841 = vpack.c.b16 %v2830, %v2829
      %v2842 = vpack.c.b16 %v2832, %v2831
      %v2843 = vpack.c.b16 %v2834, %v2833
      %v2844 = vpack.c.b16 %v2836, %v2835
      %v2845 = vpack.c.b16 %v2838, %v2837
      %v2846 = vpack.c.b16 %v2840, %v2839
      %v2854 = vsel %vm2669, %v2811, 0
      %2856 = vmatprep.subr.bf16.mxu0 0
      %2857 = vmatpush1.bf16.msra.mxu0 %v2841
      %2858 = vmatprep.subr.bf16.mxu0 0
      %2859 = vmatpush1.bf16.msra.mxu0 %v2842
      %2860 = vmatprep.subr.bf16.mxu0 0
      %2861 = vmatpush1.bf16.msra.mxu0 %v2843
      %2862 = vmatprep.subr.bf16.mxu0 0
      %2863 = vmatpush1.bf16.msra.mxu0 %v2844
      %2864 = vmatprep.subr.bf16.mxu0 0
      %2865 = vmatpush1.bf16.msra.mxu0 %v2845
      %2866 = vmatprep.subr.bf16.mxu0 0
      %2867 = vmatpush1.bf16.msra.mxu0 %v2846
      %2868 = vmatprep.subr.bf16.mxu0 0
      %2869 = vmatpush1.bf16.msra.mxu0 0
      %2870 = vmatprep.subr.bf16.mxu0 0
      %2871 = vmatpush1.bf16.msra.mxu0 0
      %2872 = vmatprep.subr.bf16.mxu0 0
      %2873 = vmatpush1.bf16.msra.mxu0 0
      %2874 = vmatprep.subr.bf16.mxu0 0
      %2875 = vmatpush1.bf16.msra.mxu0 0
      %2876 = vmatprep.subr.bf16.mxu0 0
      %2877 = vmatpush1.bf16.msra.mxu0 0
      %2878 = vmatprep.subr.bf16.mxu0 0
      %2879 = vmatpush1.bf16.msra.mxu0 0
      %2880 = vmatprep.subr.bf16.mxu0 0
      %2881 = vmatpush1.bf16.msra.mxu0 0
      %2882 = vmatprep.subr.bf16.mxu0 0
      %2883 = vmatpush1.bf16.msra.mxu0 0
      %2884 = vmatprep.subr.bf16.mxu0 0
      %2885 = vmatpush1.bf16.msra.mxu0 0
      %2886 = vmatprep.subr.bf16.mxu0 0
      %2887 = vmatpush1.bf16.msra.mxu0 0
      %2888 = vmatprep.mubr.bf16.mxu0 0
      %2889 = vmatmul.mubr.bf16.gmra.mrb[0].mxu0 %v2854
      %v2890 = vpop.f32.mrb[0].mxu0
      %v2891 = vadd.f32 %v2816, %v2890
      %v2892 = vpop.f32.mrb[0].mxu0
      %v2893 = vpop.f32.mrb[0].mxu0
      %v2894 = vpop.f32.mrb[0].mxu0
      %2895 = vdwg.mxu0
      %v2896 = vmax.f32 %v2891, 0.0
      %v2897 = vmin.f32 %v2896, 6.0
      %s2898 = scalar_lea.vmem %s6, 16
      %v2899 = vld [vmem:[%s2898] sm:$0xf]
      %v2900 = vld [vmem:[%s2898 + $0x4] sm:$0xf]
      %v2901 = vld [vmem:[%s2898 + $0x8] sm:$0xf]
      %v2902 = vld [vmem:[%s2898 + $0xc] sm:$0xf]
      %v2903 = vpack.c.bf16 %v2897, %v2897
      %v2904 = vld [vmem:[%s10 + $0x11] sm:$0x1]
      %v2905 = vlaneseq
      %v2906 = vshrl.u32 %v2905, 7
      %v2907 = vsub.s32 0, %v2906
      %v2908 = vrot.slane %v2904, %v2907
      %v2913 = vunpack.c.l.b16 %v2899
      %v2914 = vunpack.c.l.b16 %v2900
      %v2915 = vunpack.c.l.b16 %v2901
      %v2916 = vunpack.c.l.b16 %v2902
      %v2917 = vpack.c.b16 %v2914, %v2913
      %v2918 = vpack.c.b16 %v2916, %v2915
      %v2922 = vsel %vm2612, %v2903, 0
      %2924 = vmatprep.subr.bf16.mxu0 0
      %2925 = vmatpush1.bf16.msra.mxu0 %v2917
      %2926 = vmatprep.subr.bf16.mxu0 0
      %2927 = vmatpush1.bf16.msra.mxu0 %v2918
      %2928 = vmatprep.subr.bf16.mxu0 0
      %2929 = vmatpush1.bf16.msra.mxu0 0
      %2930 = vmatprep.subr.bf16.mxu0 0
      %2931 = vmatpush1.bf16.msra.mxu0 0
      %2932 = vmatprep.subr.bf16.mxu0 0
      %2933 = vmatpush1.bf16.msra.mxu0 0
      %2934 = vmatprep.subr.bf16.mxu0 0
      %2935 = vmatpush1.bf16.msra.mxu0 0
      %2936 = vmatprep.subr.bf16.mxu0 0
      %2937 = vmatpush1.bf16.msra.mxu0 0
      %2938 = vmatprep.subr.bf16.mxu0 0
      %2939 = vmatpush1.bf16.msra.mxu0 0
      %2940 = vmatprep.subr.bf16.mxu0 0
      %2941 = vmatpush1.bf16.msra.mxu0 0
      %2942 = vmatprep.subr.bf16.mxu0 0
      %2943 = vmatpush1.bf16.msra.mxu0 0
      %2944 = vmatprep.subr.bf16.mxu0 0
      %2945 = vmatpush1.bf16.msra.mxu0 0
      %2946 = vmatprep.subr.bf16.mxu0 0
      %2947 = vmatpush1.bf16.msra.mxu0 0
      %2948 = vmatprep.subr.bf16.mxu0 0
      %2949 = vmatpush1.bf16.msra.mxu0 0
      %2950 = vmatprep.subr.bf16.mxu0 0
      %2951 = vmatpush1.bf16.msra.mxu0 0
      %2952 = vmatprep.subr.bf16.mxu0 0
      %2953 = vmatpush1.bf16.msra.mxu0 0
      %2954 = vmatprep.subr.bf16.mxu0 0
      %2955 = vmatpush1.bf16.msra.mxu0 0
      %2956 = vmatprep.mubr.bf16.mxu0 0
      %2957 = vmatmul.mubr.bf16.gmra.mrb[0].mxu0 %v2922
      %v2958 = vpop.f32.mrb[0].mxu0
      %v2959 = vadd.f32 %v2908, %v2958
      %v2960 = vpop.f32.mrb[0].mxu0
      %v2961 = vpop.f32.mrb[0].mxu0
      %v2962 = vpop.f32.mrb[0].mxu0
      %2963 = vdwg.mxu0
      %v2964 = vmax.f32 %v2959, 0.0
      %v2965 = vmin.f32 %v2964, 6.0
      %s2966 = scalar_lea.vmem %s11, 24
      %v2967 = vld [vmem:[%s2966] sm:$0x7]
      %v2968 = vpack.c.bf16 %v2781, %v2781
      %vm2969 = vcmask 31744
      %v2971 = vsel %vm2969, %v2967, 0
      %vm2973 = vcmask 1041408
      %v2975 = vsel %vm2973, %v2968, 0
      %2977 = vmatprep.subr.bf16.mxu0 0
      %2978 = vmatpush1.bf16.msra.mxu0 %v2975
      %2979 = vmatprep.subr.bf16.mxu0 0
      %2980 = vmatpush1.bf16.msra.mxu0 0
      %2981 = vmatprep.subr.bf16.mxu0 0
      %2982 = vmatpush1.bf16.msra.mxu0 0
      %2983 = vmatprep.subr.bf16.mxu0 0
      %2984 = vmatpush1.bf16.msra.mxu0 0
      %2985 = vmatprep.subr.bf16.mxu0 0
      %2986 = vmatpush1.bf16.msra.mxu0 0
      %2987 = vmatprep.subr.bf16.mxu0 0
      %2988 = vmatpush1.bf16.msra.mxu0 0
      %2989 = vmatprep.subr.bf16.mxu0 0
      %2990 = vmatpush1.bf16.msra.mxu0 0
      %2991 = vmatprep.subr.bf16.mxu0 0
      %2992 = vmatpush1.bf16.msra.mxu0 0
      %2993 = vmatprep.subr.bf16.mxu0 0
      %2994 = vmatpush1.bf16.msra.mxu0 0
      %2995 = vmatprep.subr.bf16.mxu0 0
      %2996 = vmatpush1.bf16.msra.mxu0 0
      %2997 = vmatprep.subr.bf16.mxu0 0
      %2998 = vmatpush1.bf16.msra.mxu0 0
      %2999 = vmatprep.subr.bf16.mxu0 0
      %3000 = vmatpush1.bf16.msra.mxu0 0
      %3001 = vmatprep.subr.bf16.mxu0 0
      %3002 = vmatpush1.bf16.msra.mxu0 0
      %3003 = vmatprep.subr.bf16.mxu0 0
      %3004 = vmatpush1.bf16.msra.mxu0 0
      %3005 = vmatprep.subr.bf16.mxu0 0
      %3006 = vmatpush1.bf16.msra.mxu0 0
      %3007 = vmatprep.subr.bf16.mxu0 0
      %3008 = vmatpush1.bf16.msra.mxu0 0
      %3009 = vmatprep.mubr.bf16.mxu0 0
      %3010 = vmatmul.mubr.bf16.gmra.mrb[0].mxu0 %v2971
      %v3011 = vpop.f32.mrb[0].mxu0
      %v3012 = vadd.f32 0.0, %v3011
      %v3013 = vpop.f32.mrb[0].mxu0
      %v3014 = vpop.f32.mrb[0].mxu0
      %v3015 = vpop.f32.mrb[0].mxu0
      %3016 = vdwg.mxu0
      %v3018 = vrot.slane %v3012, 2
      %v3020 = vmax.f32 %v3012, %v3018
      %v3021 = vrot.slane %v3012, 4
      %v3023 = vmax.f32 %v3020, %v3021
      %s3024 = scalar_lea.vmem %s12, 256
      %v3025 = vld [vmem:[%s3024] sm:$0xf]
      %v3026 = vld [vmem:[%s3024 + $0x8] sm:$0xf]
      %v3027 = vld [vmem:[%s3024 + $0x10] sm:$0xf]
      %v3028 = vld [vmem:[%s3024 + $0x18] sm:$0xf]
      %v3029 = vpack.c.bf16 %v3023, %v3023
      %v3034 = vunpack.c.l.b16 %v3025
      %v3035 = vunpack.c.l.b16 %v3026
      %v3036 = vunpack.c.l.b16 %v3027
      %v3037 = vunpack.c.l.b16 %v3028
      %v3038 = vpack.c.b16 %v3035, %v3034
      %v3039 = vpack.c.b16 %v3037, %v3036
      %v3043 = vsel %vm2612, %v3029, 0
      %3045 = vmatprep.subr.bf16.mxu0 0
      %3046 = vmatpush1.bf16.msra.mxu0 %v3038
      %3047 = vmatprep.subr.bf16.mxu0 0
      %3048 = vmatpush1.bf16.msra.mxu0 %v3039
      %3049 = vmatprep.subr.bf16.mxu0 0
      %3050 = vmatpush1.bf16.msra.mxu0 0
      %3051 = vmatprep.subr.bf16.mxu0 0
      %3052 = vmatpush1.bf16.msra.mxu0 0
      %3053 = vmatprep.subr.bf16.mxu0 0
      %3054 = vmatpush1.bf16.msra.mxu0 0
      %3055 = vmatprep.subr.bf16.mxu0 0
      %3056 = vmatpush1.bf16.msra.mxu0 0
      %3057 = vmatprep.subr.bf16.mxu0 0
      %3058 = vmatpush1.bf16.msra.mxu0 0
      %3059 = vmatprep.subr.bf16.mxu0 0
      %3060 = vmatpush1.bf16.msra.mxu0 0
      %3061 = vmatprep.subr.bf16.mxu0 0
      %3062 = vmatpush1.bf16.msra.mxu0 0
      %3063 = vmatprep.subr.bf16.mxu0 0
      %3064 = vmatpush1.bf16.msra.mxu0 0
      %3065 = vmatprep.subr.bf16.mxu0 0
      %3066 = vmatpush1.bf16.msra.mxu0 0
      %3067 = vmatprep.subr.bf16.mxu0 0
      %3068 = vmatpush1.bf16.msra.mxu0 0
      %3069 = vmatprep.subr.bf16.mxu0 0
      %3070 = vmatpush1.bf16.msra.mxu0 0
      %3071 = vmatprep.subr.bf16.mxu0 0
      %3072 = vmatpush1.bf16.msra.mxu0 0
      %3073 = vmatprep.subr.bf16.mxu0 0
      %3074 = vmatpush1.bf16.msra.mxu0 0
      %3075 = vmatprep.subr.bf16.mxu0 0
      %3076 = vmatpush1.bf16.msra.mxu0 0
      %3077 = vmatprep.mubr.bf16.mxu0 0
      %3078 = vmatmul.mubr.bf16.gmra.mrb[0].mxu0 %v3043
      %v3079 = vpop.f32.mrb[0].mxu0
      %v3080 = vadd.f32 0.0, %v3079
      %v3081 = vpop.f32.mrb[0].mxu0
      %v3082 = vpop.f32.mrb[0].mxu0
      %v3083 = vpop.f32.mrb[0].mxu0
      %3084 = vdwg.mxu0
      %3086 = vrot.lane.b32.xlu0 %v3080, 112
      %v3087 = vpop.permute.xlu0 %3086
      %v3089 = vmax.f32 %v3080, %v3087
      %3090 = vrot.lane.b32.xlu0 %v3080, 96
      %v3091 = vpop.permute.xlu0 %3090
      %v3093 = vmax.f32 %v3089, %v3091
      %v3095 = vrot.slane %v3093, 7
      %v3097 = vsel %vm500, 0.0, %v3095
      %v3098 = vrot.slane %v3093, 1
      %v3100 = vsel %vm500, %v3098, 0.0
      %3101 = vrot.lane.b32.xlu0 %v3093, 16
      %v3102 = vpop.permute.xlu0 %3101
      %3105 = vrot.lane.b32.xlu0 %v3100, 32
      %v3106 = vpop.permute.xlu0 %3105
      %v3108 = vsel %vm1760, %v3097, %v3102
      %v3109 = vsel %vm2612, %v3108, %v3106
      %v3110 = vld [vmem:[%s7] sm:$0xf]
      %v3111 = vld [vmem:[%s7 + $0x4] sm:$0xf]
      %v3112 = vld [vmem:[%s7 + $0x8] sm:$0xf]
      %v3113 = vld [vmem:[%s7 + $0xc] sm:$0xf]
      %v3114 = vld [vmem:[%s7 + $0x10] sm:$0xf]
      %v3115 = vld [vmem:[%s7 + $0x14] sm:$0xf]
      %v3116 = vpack.c.bf16 %v3109, %v3109
      %v3117 = vld [vmem:[%s10 + $0x14] sm:$0x1]
      %v3118 = vlaneseq
      %v3119 = vshrl.u32 %v3118, 7
      %v3120 = vsub.s32 0, %v3119
      %v3121 = vrot.slane %v3117, %v3120
      %v3128 = vunpack.c.l.b16 %v3110
      %v3129 = vunpack.c.l.b16 %v3111
      %v3130 = vunpack.c.l.b16 %v3112
      %v3131 = vunpack.c.l.b16 %v3113
      %v3132 = vunpack.c.l.b16 %v3114
      %v3133 = vunpack.c.l.b16 %v3115
      %v3134 = vpack.c.b16 %v3129, %v3128
      %v3135 = vpack.c.b16 %v3131, %v3130
      %v3136 = vpack.c.b16 %v3133, %v3132
      %vm3140 = vcmask 392192
      %v3142 = vsel %vm3140, %v3116, 0
      %3144 = vmatprep.subr.bf16.mxu0 0
      %3145 = vmatpush1.bf16.msra.mxu0 %v3134
      %3146 = vmatprep.subr.bf16.mxu0 0
      %3147 = vmatpush1.bf16.msra.mxu0 %v3135
      %3148 = vmatprep.subr.bf16.mxu0 0
      %3149 = vmatpush1.bf16.msra.mxu0 %v3136
      %3150 = vmatprep.subr.bf16.mxu0 0
      %3151 = vmatpush1.bf16.msra.mxu0 0
      %3152 = vmatprep.subr.bf16.mxu0 0
      %3153 = vmatpush1.bf16.msra.mxu0 0
      %3154 = vmatprep.subr.bf16.mxu0 0
      %3155 = vmatpush1.bf16.msra.mxu0 0
      %3156 = vmatprep.subr.bf16.mxu0 0
      %3157 = vmatpush1.bf16.msra.mxu0 0
      %3158 = vmatprep.subr.bf16.mxu0 0
      %3159 = vmatpush1.bf16.msra.mxu0 0
      %3160 = vmatprep.subr.bf16.mxu0 0
      %3161 = vmatpush1.bf16.msra.mxu0 0
      %3162 = vmatprep.subr.bf16.mxu0 0
      %3163 = vmatpush1.bf16.msra.mxu0 0
      %3164 = vmatprep.subr.bf16.mxu0 0
      %3165 = vmatpush1.bf16.msra.mxu0 0
      %3166 = vmatprep.subr.bf16.mxu0 0
      %3167 = vmatpush1.bf16.msra.mxu0 0
      %3168 = vmatprep.subr.bf16.mxu0 0
      %3169 = vmatpush1.bf16.msra.mxu0 0
      %3170 = vmatprep.subr.bf16.mxu0 0
      %3171 = vmatpush1.bf16.msra.mxu0 0
      %3172 = vmatprep.subr.bf16.mxu0 0
      %3173 = vmatpush1.bf16.msra.mxu0 0
      %3174 = vmatprep.subr.bf16.mxu0 0
      %3175 = vmatpush1.bf16.msra.mxu0 0
      %3176 = vmatprep.mubr.bf16.mxu0 0
      %3177 = vmatmul.mubr.bf16.gmra.mrb[0].mxu0 %v3142
      %v3178 = vpop.f32.mrb[0].mxu0
      %v3179 = vadd.f32 %v3121, %v3178
      %v3180 = vpop.f32.mrb[0].mxu0
      %v3181 = vpop.f32.mrb[0].mxu0
      %v3182 = vpop.f32.mrb[0].mxu0
      %3183 = vdwg.mxu0
      %v3184 = vmax.f32 %v3179, 0.0
      %v3185 = vmin.f32 %v3184, 6.0
      %v3186 = vld [vmem:[%s8] sm:$0xf]
      %v3187 = vld [vmem:[%s8 + $0x4] sm:$0xf]
      %v3188 = vpack.c.bf16 %v3185, %v3185
      %v3189 = vld [vmem:[%s10 + $0x15] sm:$0x1]
      %v3190 = vlaneseq
      %v3191 = vshrl.u32 %v3190, 7
      %v3192 = vsub.s32 0, %v3191
      %v3193 = vrot.slane %v3189, %v3192
      %v3196 = vunpack.c.l.b16 %v3186
      %v3197 = vunpack.c.l.b16 %v3187
      %v3198 = vpack.c.b16 %v3197, %v3196
      %v3201 = vsel %vm1760, %v3188, 0
      %3203 = vmatprep.subr.bf16.mxu0 0
      %3204 = vmatpush1.bf16.msra.mxu0 %v3198
      %3205 = vmatprep.subr.bf16.mxu0 0
      %3206 = vmatpush1.bf16.msra.mxu0 0
      %3207 = vmatprep.subr.bf16.mxu0 0
      %3208 = vmatpush1.bf16.msra.mxu0 0
      %3209 = vmatprep.subr.bf16.mxu0 0
      %3210 = vmatpush1.bf16.msra.mxu0 0
      %3211 = vmatprep.subr.bf16.mxu0 0
      %3212 = vmatpush1.bf16.msra.mxu0 0
      %3213 = vmatprep.subr.bf16.mxu0 0
      %3214 = vmatpush1.bf16.msra.mxu0 0
      %3215 = vmatprep.subr.bf16.mxu0 0
      %3216 = vmatpush1.bf16.msra.mxu0 0
      %3217 = vmatprep.subr.bf16.mxu0 0
      %3218 = vmatpush1.bf16.msra.mxu0 0
      %3219 = vmatprep.subr.bf16.mxu0 0
      %3220 = vmatpush1.bf16.msra.mxu0 0
      %3221 = vmatprep.subr.bf16.mxu0 0
      %3222 = vmatpush1.bf16.msra.mxu0 0
      %3223 = vmatprep.subr.bf16.mxu0 0
      %3224 = vmatpush1.bf16.msra.mxu0 0
      %3225 = vmatprep.subr.bf16.mxu0 0
      %3226 = vmatpush1.bf16.msra.mxu0 0
      %3227 = vmatprep.subr.bf16.mxu0 0
      %3228 = vmatpush1.bf16.msra.mxu0 0
      %3229 = vmatprep.subr.bf16.mxu0 0
      %3230 = vmatpush1.bf16.msra.mxu0 0
      %3231 = vmatprep.subr.bf16.mxu0 0
      %3232 = vmatpush1.bf16.msra.mxu0 0
      %3233 = vmatprep.subr.bf16.mxu0 0
      %3234 = vmatpush1.bf16.msra.mxu0 0
      %3235 = vmatprep.mubr.bf16.mxu0 0
      %3236 = vmatmul.mubr.bf16.gmra.mrb[0].mxu0 %v3201
      %v3237 = vpop.f32.mrb[0].mxu0
      %v3238 = vadd.f32 %v3193, %v3237
      %v3239 = vpop.f32.mrb[0].mxu0
      %v3240 = vpop.f32.mrb[0].mxu0
      %v3241 = vpop.f32.mrb[0].mxu0
      %3242 = vdwg.mxu0
      %v3243 = vmax.f32 %v3238, 0.0
      %v3244 = vmin.f32 %v3243, 6.0
      %v3246 = vrot.slane %v3244, 7
      %v3248 = vsel %vm500, 0.0, %v3246
      %v3249 = vrot.slane %v3244, 1
      %v3251 = vsel %vm500, %v3249, 0.0
      %3252 = vrot.lane.b32.xlu0 %v3244, 16
      %v3253 = vpop.permute.xlu0 %3252
      %3256 = vrot.lane.b32.xlu0 %v3251, 32
      %v3257 = vpop.permute.xlu0 %3256
      %v3259 = vsel %vm1760, %v3248, %v3253
      %v3260 = vsel %vm2612, %v3259, %v3257
      %s3261 = scalar_lea.vmem %s7, 24
      %v3262 = vld [vmem:[%s3261] sm:$0xf]
      %v3263 = vld [vmem:[%s3261 + $0x4] sm:$0xf]
      %v3264 = vld [vmem:[%s3261 + $0x8] sm:$0xf]
      %v3265 = vld [vmem:[%s3261 + $0xc] sm:$0xf]
      %v3266 = vld [vmem:[%s3261 + $0x10] sm:$0xf]
      %v3267 = vld [vmem:[%s3261 + $0x14] sm:$0xf]
      %v3268 = vpack.c.bf16 %v3260, %v3260
      %v3269 = vld [vmem:[%s10 + $0x16] sm:$0x1]
      %v3270 = vlaneseq
      %v3271 = vshrl.u32 %v3270, 7
      %v3272 = vsub.s32 0, %v3271
      %v3273 = vrot.slane %v3269, %v3272
      %v3280 = vunpack.c.l.b16 %v3262
      %v3281 = vunpack.c.l.b16 %v3263
      %v3282 = vunpack.c.l.b16 %v3264
      %v3283 = vunpack.c.l.b16 %v3265
      %v3284 = vunpack.c.l.b16 %v3266
      %v3285 = vunpack.c.l.b16 %v3267
      %v3286 = vpack.c.b16 %v3281, %v3280
      %v3287 = vpack.c.b16 %v3283, %v3282
      %v3288 = vpack.c.b16 %v3285, %v3284
      %v3293 = vsel %vm3140, %v3268, 0
      %3295 = vmatprep.subr.bf16.mxu0 0
      %3296 = vmatpush1.bf16.msra.mxu0 %v3286
      %3297 = vmatprep.subr.bf16.mxu0 0
      %3298 = vmatpush1.bf16.msra.mxu0 %v3287
      %3299 = vmatprep.subr.bf16.mxu0 0
      %3300 = vmatpush1.bf16.msra.mxu0 %v3288
      %3301 = vmatprep.subr.bf16.mxu0 0
      %3302 = vmatpush1.bf16.msra.mxu0 0
      %3303 = vmatprep.subr.bf16.mxu0 0
      %3304 = vmatpush1.bf16.msra.mxu0 0
      %3305 = vmatprep.subr.bf16.mxu0 0
      %3306 = vmatpush1.bf16.msra.mxu0 0
      %3307 = vmatprep.subr.bf16.mxu0 0
      %3308 = vmatpush1.bf16.msra.mxu0 0
      %3309 = vmatprep.subr.bf16.mxu0 0
      %3310 = vmatpush1.bf16.msra.mxu0 0
      %3311 = vmatprep.subr.bf16.mxu0 0
      %3312 = vmatpush1.bf16.msra.mxu0 0
      %3313 = vmatprep.subr.bf16.mxu0 0
      %3314 = vmatpush1.bf16.msra.mxu0 0
      %3315 = vmatprep.subr.bf16.mxu0 0
      %3316 = vmatpush1.bf16.msra.mxu0 0
      %3317 = vmatprep.subr.bf16.mxu0 0
      %3318 = vmatpush1.bf16.msra.mxu0 0
      %3319 = vmatprep.subr.bf16.mxu0 0
      %3320 = vmatpush1.bf16.msra.mxu0 0
      %3321 = vmatprep.subr.bf16.mxu0 0
      %3322 = vmatpush1.bf16.msra.mxu0 0
      %3323 = vmatprep.subr.bf16.mxu0 0
      %3324 = vmatpush1.bf16.msra.mxu0 0
      %3325 = vmatprep.subr.bf16.mxu0 0
      %3326 = vmatpush1.bf16.msra.mxu0 0
      %3327 = vmatprep.mubr.bf16.mxu0 0
      %3328 = vmatmul.mubr.bf16.gmra.mrb[0].mxu0 %v3293
      %v3329 = vpop.f32.mrb[0].mxu0
      %v3330 = vadd.f32 %v3273, %v3329
      %v3331 = vpop.f32.mrb[0].mxu0
      %v3332 = vpop.f32.mrb[0].mxu0
      %v3333 = vpop.f32.mrb[0].mxu0
      %3334 = vdwg.mxu0
      %v3335 = vmax.f32 %v3330, 0.0
      %v3336 = vmin.f32 %v3335, 6.0
      %s3337 = scalar_lea.vmem %s8, 8
      %v3338 = vld [vmem:[%s3337] sm:$0xf]
      %v3339 = vld [vmem:[%s3337 + $0x4] sm:$0xf]
      %v3340 = vpack.c.bf16 %v3336, %v3336
      %v3341 = vld [vmem:[%s10 + $0x17] sm:$0x1]
      %v3342 = vlaneseq
      %v3343 = vshrl.u32 %v3342, 7
      %v3344 = vsub.s32 0, %v3343
      %v3345 = vrot.slane %v3341, %v3344
      %v3348 = vunpack.c.l.b16 %v3338
      %v3349 = vunpack.c.l.b16 %v3339
      %v3350 = vpack.c.b16 %v3349, %v3348
      %v3353 = vsel %vm1760, %v3340, 0
      %3355 = vmatprep.subr.bf16.mxu0 0
      %3356 = vmatpush1.bf16.msra.mxu0 %v3350
      %3357 = vmatprep.subr.bf16.mxu0 0
      %3358 = vmatpush1.bf16.msra.mxu0 0
      %3359 = vmatprep.subr.bf16.mxu0 0
      %3360 = vmatpush1.bf16.msra.mxu0 0
      %3361 = vmatprep.subr.bf16.mxu0 0
      %3362 = vmatpush1.bf16.msra.mxu0 0
      %3363 = vmatprep.subr.bf16.mxu0 0
      %3364 = vmatpush1.bf16.msra.mxu0 0
      %3365 = vmatprep.subr.bf16.mxu0 0
      %3366 = vmatpush1.bf16.msra.mxu0 0
      %3367 = vmatprep.subr.bf16.mxu0 0
      %3368 = vmatpush1.bf16.msra.mxu0 0
      %3369 = vmatprep.subr.bf16.mxu0 0
      %3370 = vmatpush1.bf16.msra.mxu0 0
      %3371 = vmatprep.subr.bf16.mxu0 0
      %3372 = vmatpush1.bf16.msra.mxu0 0
      %3373 = vmatprep.subr.bf16.mxu0 0
      %3374 = vmatpush1.bf16.msra.mxu0 0
      %3375 = vmatprep.subr.bf16.mxu0 0
      %3376 = vmatpush1.bf16.msra.mxu0 0
      %3377 = vmatprep.subr.bf16.mxu0 0
      %3378 = vmatpush1.bf16.msra.mxu0 0
      %3379 = vmatprep.subr.bf16.mxu0 0
      %3380 = vmatpush1.bf16.msra.mxu0 0
      %3381 = vmatprep.subr.bf16.mxu0 0
      %3382 = vmatpush1.bf16.msra.mxu0 0
      %3383 = vmatprep.subr.bf16.mxu0 0
      %3384 = vmatpush1.bf16.msra.mxu0 0
      %3385 = vmatprep.subr.bf16.mxu0 0
      %3386 = vmatpush1.bf16.msra.mxu0 0
      %3387 = vmatprep.mubr.bf16.mxu0 0
      %3388 = vmatmul.mubr.bf16.gmra.mrb[0].mxu0 %v3353
      %v3389 = vpop.f32.mrb[0].mxu0
      %v3390 = vadd.f32 %v3345, %v3389
      %v3391 = vpop.f32.mrb[0].mxu0
      %v3392 = vpop.f32.mrb[0].mxu0
      %v3393 = vpop.f32.mrb[0].mxu0
      %3394 = vdwg.mxu0
      %v3395 = vmax.f32 %v3390, 0.0
      %v3396 = vmin.f32 %v3395, 6.0
      %v3397 = vld [vmem:[%s13] sm:$0x3]
      %v3398 = vpack.c.bf16 %v3396, %v3396
      %vm3399 = vcmask 15360
      %v3401 = vsel %vm3399, %v3397, 0
      %v3404 = vsel %vm500, %v3398, 0
      %3406 = vmatprep.subr.bf16.mxu0 0
      %3407 = vmatpush1.bf16.msra.mxu0 %v3404
      %3408 = vmatprep.subr.bf16.mxu0 0
      %3409 = vmatpush1.bf16.msra.mxu0 0
      %3410 = vmatprep.subr.bf16.mxu0 0
      %3411 = vmatpush1.bf16.msra.mxu0 0
      %3412 = vmatprep.subr.bf16.mxu0 0
      %3413 = vmatpush1.bf16.msra.mxu0 0
      %3414 = vmatprep.subr.bf16.mxu0 0
      %3415 = vmatpush1.bf16.msra.mxu0 0
      %3416 = vmatprep.subr.bf16.mxu0 0
      %3417 = vmatpush1.bf16.msra.mxu0 0
      %3418 = vmatprep.subr.bf16.mxu0 0
      %3419 = vmatpush1.bf16.msra.mxu0 0
      %3420 = vmatprep.subr.bf16.mxu0 0
      %3421 = vmatpush1.bf16.msra.mxu0 0
      %3422 = vmatprep.subr.bf16.mxu0 0
      %3423 = vmatpush1.bf16.msra.mxu0 0
      %3424 = vmatprep.subr.bf16.mxu0 0
      %3425 = vmatpush1.bf16.msra.mxu0 0
      %3426 = vmatprep.subr.bf16.mxu0 0
      %3427 = vmatpush1.bf16.msra.mxu0 0
      %3428 = vmatprep.subr.bf16.mxu0 0
      %3429 = vmatpush1.bf16.msra.mxu0 0
      %3430 = vmatprep.subr.bf16.mxu0 0
      %3431 = vmatpush1.bf16.msra.mxu0 0
      %3432 = vmatprep.subr.bf16.mxu0 0
      %3433 = vmatpush1.bf16.msra.mxu0 0
      %3434 = vmatprep.subr.bf16.mxu0 0
      %3435 = vmatpush1.bf16.msra.mxu0 0
      %3436 = vmatprep.subr.bf16.mxu0 0
      %3437 = vmatpush1.bf16.msra.mxu0 0
      %3438 = vmatprep.mubr.bf16.mxu0 0
      %3439 = vmatmul.mubr.bf16.gmra.mrb[0].mxu0 %v3401
      %v3440 = vpop.f32.mrb[0].mxu0
      %v3441 = vadd.f32 0.0, %v3440
      %v3442 = vpop.f32.mrb[0].mxu0
      %v3443 = vpop.f32.mrb[0].mxu0
      %v3444 = vpop.f32.mrb[0].mxu0
      %3445 = vdwg.mxu0
      %v3446 = vld [vmem:[%s14] sm:$0xf]
      %v3447 = vld [vmem:[%s14 + $0x4] sm:$0xf]
      %v3448 = vpack.c.bf16 %v3441, %v3441
      %v3451 = vunpack.c.l.b16 %v3446
      %v3452 = vunpack.c.l.b16 %v3447
      %v3453 = vpack.c.b16 %v3452, %v3451
      %v3456 = vsel %vm1760, %v3448, 0
      %3458 = vmatprep.subr.bf16.mxu0 0
      %3459 = vmatpush1.bf16.msra.mxu0 %v3453
      %3460 = vmatprep.subr.bf16.mxu0 0
      %3461 = vmatpush1.bf16.msra.mxu0 0
      %3462 = vmatprep.subr.bf16.mxu0 0
      %3463 = vmatpush1.bf16.msra.mxu0 0
      %3464 = vmatprep.subr.bf16.mxu0 0
      %3465 = vmatpush1.bf16.msra.mxu0 0
      %3466 = vmatprep.subr.bf16.mxu0 0
      %3467 = vmatpush1.bf16.msra.mxu0 0
      %3468 = vmatprep.subr.bf16.mxu0 0
      %3469 = vmatpush1.bf16.msra.mxu0 0
      %3470 = vmatprep.subr.bf16.mxu0 0
      %3471 = vmatpush1.bf16.msra.mxu0 0
      %3472 = vmatprep.subr.bf16.mxu0 0
      %3473 = vmatpush1.bf16.msra.mxu0 0
      %3474 = vmatprep.subr.bf16.mxu0 0
      %3475 = vmatpush1.bf16.msra.mxu0 0
      %3476 = vmatprep.subr.bf16.mxu0 0
      %3477 = vmatpush1.bf16.msra.mxu0 0
      %3478 = vmatprep.subr.bf16.mxu0 0
      %3479 = vmatpush1.bf16.msra.mxu0 0
      %3480 = vmatprep.subr.bf16.mxu0 0
      %3481 = vmatpush1.bf16.msra.mxu0 0
      %3482 = vmatprep.subr.bf16.mxu0 0
      %3483 = vmatpush1.bf16.msra.mxu0 0
      %3484 = vmatprep.subr.bf16.mxu0 0
      %3485 = vmatpush1.bf16.msra.mxu0 0
      %3486 = vmatprep.subr.bf16.mxu0 0
      %3487 = vmatpush1.bf16.msra.mxu0 0
      %3488 = vmatprep.subr.bf16.mxu0 0
      %3489 = vmatpush1.bf16.msra.mxu0 0
      %3490 = vmatprep.mubr.bf16.mxu0 0
      %3491 = vmatmul.mubr.bf16.gmra.mrb[0].mxu0 %v3456
      %v3492 = vpop.f32.mrb[0].mxu0
      %v3493 = vadd.f32 %v2781, %v3492
      %v3494 = vpop.f32.mrb[0].mxu0
      %v3495 = vpop.f32.mrb[0].mxu0
      %v3496 = vpop.f32.mrb[0].mxu0
      %3497 = vdwg.mxu0
      %v3498 = vadd.f32 %v3493, %v2965
      %v3500 = vrot.slane %v3498, 7
      %v3502 = vsel %vm500, 0.0, %v3500
      %v3503 = vrot.slane %v3498, 1
      %v3505 = vsel %vm2603, %v3503, 0.0
      %3506 = vrot.lane.b32.xlu0 %v3498, 32
      %v3507 = vpop.permute.xlu0 %3506
      %3510 = vrot.lane.b32.xlu0 %v3505, 64
      %v3511 = vpop.permute.xlu0 %3510
      %v3513 = vsel %vm2612, %v3502, %v3507
      %v3514 = vsel %vm1971, %v3513, %v3511
      %s3515 = scalar_lea.vmem %s5, 96
      %v3516 = vld [vmem:[%s3515] sm:$0xf]
      %v3517 = vld [vmem:[%s3515 + $0x4] sm:$0xf]
      %v3518 = vld [vmem:[%s3515 + $0x8] sm:$0xf]
      %v3519 = vld [vmem:[%s3515 + $0xc] sm:$0xf]
      %v3520 = vld [vmem:[%s3515 + $0x10] sm:$0xf]
      %v3521 = vld [vmem:[%s3515 + $0x14] sm:$0xf]
      %v3522 = vld [vmem:[%s3515 + $0x18] sm:$0xf]
      %v3523 = vld [vmem:[%s3515 + $0x1c] sm:$0xf]
      %v3524 = vld [vmem:[%s3515 + $0x20] sm:$0xf]
      %v3525 = vld [vmem:[%s3515 + $0x24] sm:$0xf]
      %v3526 = vld [vmem:[%s3515 + $0x28] sm:$0xf]
      %v3527 = vld [vmem:[%s3515 + $0x2c] sm:$0xf]
      %v3528 = vpack.c.bf16 %v3514, %v3514
      %v3529 = vld [vmem:[%s10 + $0x12] sm:$0x1]
      %v3530 = vlaneseq
      %v3531 = vshrl.u32 %v3530, 7
      %v3532 = vsub.s32 0, %v3531
      %v3533 = vrot.slane %v3529, %v3532
      %v3546 = vunpack.c.l.b16 %v3516
      %v3547 = vunpack.c.l.b16 %v3517
      %v3548 = vunpack.c.l.b16 %v3518
      %v3549 = vunpack.c.l.b16 %v3519
      %v3550 = vunpack.c.l.b16 %v3520
      %v3551 = vunpack.c.l.b16 %v3521
      %v3552 = vunpack.c.l.b16 %v3522
      %v3553 = vunpack.c.l.b16 %v3523
      %v3554 = vunpack.c.l.b16 %v3524
      %v3555 = vunpack.c.l.b16 %v3525
      %v3556 = vunpack.c.l.b16 %v3526
      %v3557 = vunpack.c.l.b16 %v3527
      %v3558 = vpack.c.b16 %v3547, %v3546
      %v3559 = vpack.c.b16 %v3549, %v3548
      %v3560 = vpack.c.b16 %v3551, %v3550
      %v3561 = vpack.c.b16 %v3553, %v3552
      %v3562 = vpack.c.b16 %v3555, %v3554
      %v3563 = vpack.c.b16 %v3557, %v3556
      %v3571 = vsel %vm2669, %v3528, 0
      %3573 = vmatprep.subr.bf16.mxu0 0
      %3574 = vmatpush1.bf16.msra.mxu0 %v3558
      %3575 = vmatprep.subr.bf16.mxu0 0
      %3576 = vmatpush1.bf16.msra.mxu0 %v3559
      %3577 = vmatprep.subr.bf16.mxu0 0
      %3578 = vmatpush1.bf16.msra.mxu0 %v3560
      %3579 = vmatprep.subr.bf16.mxu0 0
      %3580 = vmatpush1.bf16.msra.mxu0 %v3561
      %3581 = vmatprep.subr.bf16.mxu0 0
      %3582 = vmatpush1.bf16.msra.mxu0 %v3562
      %3583 = vmatprep.subr.bf16.mxu0 0
      %3584 = vmatpush1.bf16.msra.mxu0 %v3563
      %3585 = vmatprep.subr.bf16.mxu0 0
      %3586 = vmatpush1.bf16.msra.mxu0 0
      %3587 = vmatprep.subr.bf16.mxu0 0
      %3588 = vmatpush1.bf16.msra.mxu0 0
      %3589 = vmatprep.subr.bf16.mxu0 0
      %3590 = vmatpush1.bf16.msra.mxu0 0
      %3591 = vmatprep.subr.bf16.mxu0 0
      %3592 = vmatpush1.bf16.msra.mxu0 0
      %3593 = vmatprep.subr.bf16.mxu0 0
      %3594 = vmatpush1.bf16.msra.mxu0 0
      %3595 = vmatprep.subr.bf16.mxu0 0
      %3596 = vmatpush1.bf16.msra.mxu0 0
      %3597 = vmatprep.subr.bf16.mxu0 0
      %3598 = vmatpush1.bf16.msra.mxu0 0
      %3599 = vmatprep.subr.bf16.mxu0 0
      %3600 = vmatpush1.bf16.msra.mxu0 0
      %3601 = vmatprep.subr.bf16.mxu0 0
      %3602 = vmatpush1.bf16.msra.mxu0 0
      %3603 = vmatprep.subr.bf16.mxu0 0
      %3604 = vmatpush1.bf16.msra.mxu0 0
      %3605 = vmatprep.mubr.bf16.mxu0 0
      %3606 = vmatmul.mubr.bf16.gmra.mrb[0].mxu0 %v3571
      %v3607 = vpop.f32.mrb[0].mxu0
      %v3608 = vadd.f32 %v3533, %v3607
      %v3609 = vpop.f32.mrb[0].mxu0
      %v3610 = vpop.f32.mrb[0].mxu0
      %v3611 = vpop.f32.mrb[0].mxu0
      %3612 = vdwg.mxu0
      %v3613 = vmax.f32 %v3608, 0.0
      %v3614 = vmin.f32 %v3613, 6.0
      %s3615 = scalar_lea.vmem %s6, 32
      %v3616 = vld [vmem:[%s3615] sm:$0xf]
      %v3617 = vld [vmem:[%s3615 + $0x4] sm:$0xf]
      %v3618 = vld [vmem:[%s3615 + $0x8] sm:$0xf]
      %v3619 = vld [vmem:[%s3615 + $0xc] sm:$0xf]
      %v3620 = vpack.c.bf16 %v3614, %v3614
      %v3621 = vld [vmem:[%s10 + $0x13] sm:$0x1]
      %v3622 = vlaneseq
      %v3623 = vshrl.u32 %v3622, 7
      %v3624 = vsub.s32 0, %v3623
      %v3625 = vrot.slane %v3621, %v3624
      %v3630 = vunpack.c.l.b16 %v3616
      %v3631 = vunpack.c.l.b16 %v3617
      %v3632 = vunpack.c.l.b16 %v3618
      %v3633 = vunpack.c.l.b16 %v3619
      %v3634 = vpack.c.b16 %v3631, %v3630
      %v3635 = vpack.c.b16 %v3633, %v3632
      %v3639 = vsel %vm2612, %v3620, 0
      %3641 = vmatprep.subr.bf16.mxu0 0
      %3642 = vmatpush1.bf16.msra.mxu0 %v3634
      %3643 = vmatprep.subr.bf16.mxu0 0
      %3644 = vmatpush1.bf16.msra.mxu0 %v3635
      %3645 = vmatprep.subr.bf16.mxu0 0
      %3646 = vmatpush1.bf16.msra.mxu0 0
      %3647 = vmatprep.subr.bf16.mxu0 0
      %3648 = vmatpush1.bf16.msra.mxu0 0
      %3649 = vmatprep.subr.bf16.mxu0 0
      %3650 = vmatpush1.bf16.msra.mxu0 0
      %3651 = vmatprep.subr.bf16.mxu0 0
      %3652 = vmatpush1.bf16.msra.mxu0 0
      %3653 = vmatprep.subr.bf16.mxu0 0
      %3654 = vmatpush1.bf16.msra.mxu0 0
      %3655 = vmatprep.subr.bf16.mxu0 0
      %3656 = vmatpush1.bf16.msra.mxu0 0
      %3657 = vmatprep.subr.bf16.mxu0 0
      %3658 = vmatpush1.bf16.msra.mxu0 0
      %3659 = vmatprep.subr.bf16.mxu0 0
      %3660 = vmatpush1.bf16.msra.mxu0 0
      %3661 = vmatprep.subr.bf16.mxu0 0
      %3662 = vmatpush1.bf16.msra.mxu0 0
      %3663 = vmatprep.subr.bf16.mxu0 0
      %3664 = vmatpush1.bf16.msra.mxu0 0
      %3665 = vmatprep.subr.bf16.mxu0 0
      %3666 = vmatpush1.bf16.msra.mxu0 0
      %3667 = vmatprep.subr.bf16.mxu0 0
      %3668 = vmatpush1.bf16.msra.mxu0 0
      %3669 = vmatprep.subr.bf16.mxu0 0
      %3670 = vmatpush1.bf16.msra.mxu0 0
      %3671 = vmatprep.subr.bf16.mxu0 0
      %3672 = vmatpush1.bf16.msra.mxu0 0
      %3673 = vmatprep.mubr.bf16.mxu0 0
      %3674 = vmatmul.mubr.bf16.gmra.mrb[0].mxu0 %v3639
      %v3675 = vpop.f32.mrb[0].mxu0
      %v3676 = vadd.f32 %v3625, %v3675
      %v3677 = vpop.f32.mrb[0].mxu0
      %v3678 = vpop.f32.mrb[0].mxu0
      %v3679 = vpop.f32.mrb[0].mxu0
      %3680 = vdwg.mxu0
      %v3681 = vmax.f32 %v3676, 0.0
      %v3682 = vmin.f32 %v3681, 6.0
      %s3683 = scalar_lea.vmem %s13, 8
      %v3684 = vld [vmem:[%s3683] sm:$0xf]
      %v3685 = vpack.c.bf16 %v3682, %v3682
      %v3687 = vsel %vm2969, %v3684, 0
      %v3690 = vsel %vm2973, %v3685, 0
      %3692 = vmatprep.subr.bf16.mxu0 0
      %3693 = vmatpush1.bf16.msra.mxu0 %v3690
      %3694 = vmatprep.subr.bf16.mxu0 0
      %3695 = vmatpush1.bf16.msra.mxu0 0
      %3696 = vmatprep.subr.bf16.mxu0 0
      %3697 = vmatpush1.bf16.msra.mxu0 0
      %3698 = vmatprep.subr.bf16.mxu0 0
      %3699 = vmatpush1.bf16.msra.mxu0 0
      %3700 = vmatprep.subr.bf16.mxu0 0
      %3701 = vmatpush1.bf16.msra.mxu0 0
      %3702 = vmatprep.subr.bf16.mxu0 0
      %3703 = vmatpush1.bf16.msra.mxu0 0
      %3704 = vmatprep.subr.bf16.mxu0 0
      %3705 = vmatpush1.bf16.msra.mxu0 0
      %3706 = vmatprep.subr.bf16.mxu0 0
      %3707 = vmatpush1.bf16.msra.mxu0 0
      %3708 = vmatprep.subr.bf16.mxu0 0
      %3709 = vmatpush1.bf16.msra.mxu0 0
      %3710 = vmatprep.subr.bf16.mxu0 0
      %3711 = vmatpush1.bf16.msra.mxu0 0
      %3712 = vmatprep.subr.bf16.mxu0 0
      %3713 = vmatpush1.bf16.msra.mxu0 0
      %3714 = vmatprep.subr.bf16.mxu0 0
      %3715 = vmatpush1.bf16.msra.mxu0 0
      %3716 = vmatprep.subr.bf16.mxu0 0
      %3717 = vmatpush1.bf16.msra.mxu0 0
      %3718 = vmatprep.subr.bf16.mxu0 0
      %3719 = vmatpush1.bf16.msra.mxu0 0
      %3720 = vmatprep.subr.bf16.mxu0 0
      %3721 = vmatpush1.bf16.msra.mxu0 0
      %3722 = vmatprep.subr.bf16.mxu0 0
      %3723 = vmatpush1.bf16.msra.mxu0 0
      %3724 = vmatprep.mubr.bf16.mxu0 0
      %3725 = vmatmul.mubr.bf16.gmra.mrb[0].mxu0 %v3687
      %v3726 = vpop.f32.mrb[0].mxu0
      %v3727 = vadd.f32 0.0, %v3726
      %v3728 = vpop.f32.mrb[0].mxu0
      %v3729 = vpop.f32.mrb[0].mxu0
      %v3730 = vpop.f32.mrb[0].mxu0
      %3731 = vdwg.mxu0
      %s3732 = scalar_lea.vmem %s14, 32
      %v3733 = vld [vmem:[%s3732] sm:$0xf]
      %v3734 = vld [vmem:[%s3732 + $0x4] sm:$0xf]
      %v3735 = vld [vmem:[%s3732 + $0x8] sm:$0xf]
      %v3736 = vld [vmem:[%s3732 + $0xc] sm:$0xf]
      %v3737 = vpack.c.bf16 %v3727, %v3727
      %v3742 = vunpack.c.l.b16 %v3733
      %v3743 = vunpack.c.l.b16 %v3734
      %v3744 = vunpack.c.l.b16 %v3735
      %v3745 = vunpack.c.l.b16 %v3736
      %v3746 = vpack.c.b16 %v3743, %v3742
      %v3747 = vpack.c.b16 %v3745, %v3744
      %v3751 = vsel %vm2612, %v3737, 0
      %3753 = vmatprep.subr.bf16.mxu0 0
      %3754 = vmatpush1.bf16.msra.mxu0 %v3746
      %3755 = vmatprep.subr.bf16.mxu0 0
      %3756 = vmatpush1.bf16.msra.mxu0 %v3747
      %3757 = vmatprep.subr.bf16.mxu0 0
      %3758 = vmatpush1.bf16.msra.mxu0 0
      %3759 = vmatprep.subr.bf16.mxu0 0
      %3760 = vmatpush1.bf16.msra.mxu0 0
      %3761 = vmatprep.subr.bf16.mxu0 0
      %3762 = vmatpush1.bf16.msra.mxu0 0
      %3763 = vmatprep.subr.bf16.mxu0 0
      %3764 = vmatpush1.bf16.msra.mxu0 0
      %3765 = vmatprep.subr.bf16.mxu0 0
      %3766 = vmatpush1.bf16.msra.mxu0 0
      %3767 = vmatprep.subr.bf16.mxu0 0
      %3768 = vmatpush1.bf16.msra.mxu0 0
      %3769 = vmatprep.subr.bf16.mxu0 0
      %3770 = vmatpush1.bf16.msra.mxu0 0
      %3771 = vmatprep.subr.bf16.mxu0 0
      %3772 = vmatpush1.bf16.msra.mxu0 0
      %3773 = vmatprep.subr.bf16.mxu0 0
      %3774 = vmatpush1.bf16.msra.mxu0 0
      %3775 = vmatprep.subr.bf16.mxu0 0
      %3776 = vmatpush1.bf16.msra.mxu0 0
      %3777 = vmatprep.subr.bf16.mxu0 0
      %3778 = vmatpush1.bf16.msra.mxu0 0
      %3779 = vmatprep.subr.bf16.mxu0 0
      %3780 = vmatpush1.bf16.msra.mxu0 0
      %3781 = vmatprep.subr.bf16.mxu0 0
      %3782 = vmatpush1.bf16.msra.mxu0 0
      %3783 = vmatprep.subr.bf16.mxu0 0
      %3784 = vmatpush1.bf16.msra.mxu0 0
      %3785 = vmatprep.mubr.bf16.mxu0 0
      %3786 = vmatmul.mubr.bf16.gmra.mrb[0].mxu0 %v3751
      %v3787 = vpop.f32.mrb[0].mxu0
      %v3788 = vadd.f32 %v2203, %v3787
      %v3789 = vpop.f32.mrb[0].mxu0
      %v3790 = vpop.f32.mrb[0].mxu0
      %v3791 = vpop.f32.mrb[0].mxu0
      %3792 = vdwg.mxu0
      %v3793 = vadd.f32 %v3788, %v2447
      %v3795 = vrot.slane %v3793, 7
      %v3797 = vsel %vm500, 0.0, %v3795
      %v3798 = vrot.slane %v3793, 1
      %v3800 = vsel %vm507, %v3798, 0.0
      %3801 = vrot.lane.b32.xlu0 %v3793, 64
      %v3802 = vpop.permute.xlu0 %3801
      %v3804 = vsel %vm1971, %v3797, %v3802
      %s3805 = scalar_lea.vmem %s3, 192
      %v3806 = vld [vmem:[%s3805] sm:$0xf]
      %v3807 = vld [vmem:[%s3805 + $0x4] sm:$0xf]
      %v3808 = vld [vmem:[%s3805 + $0x8] sm:$0xf]
      %v3809 = vld [vmem:[%s3805 + $0xc] sm:$0xf]
      %v3810 = vld [vmem:[%s3805 + $0x10] sm:$0xf]
      %v3811 = vld [vmem:[%s3805 + $0x14] sm:$0xf]
      %v3812 = vld [vmem:[%s3805 + $0x18] sm:$0xf]
      %v3813 = vld [vmem:[%s3805 + $0x1c] sm:$0xf]
      %v3814 = vld [vmem:[%s3805 + $0x20] sm:$0xf]
      %v3815 = vld [vmem:[%s3805 + $0x24] sm:$0xf]
      %v3816 = vld [vmem:[%s3805 + $0x28] sm:$0xf]
      %v3817 = vld [vmem:[%s3805 + $0x2c] sm:$0xf]
      %v3818 = vld [vmem:[%s3805 + $0x30] sm:$0xf]
      %v3819 = vld [vmem:[%s3805 + $0x34] sm:$0xf]
      %v3820 = vld [vmem:[%s3805 + $0x38] sm:$0xf]
      %v3821 = vld [vmem:[%s3805 + $0x3c] sm:$0xf]
      %v3822 = vld [vmem:[%s3805 + $0x40] sm:$0xf]
      %v3823 = vld [vmem:[%s3805 + $0x44] sm:$0xf]
      %v3824 = vld [vmem:[%s3805 + $0x48] sm:$0xf]
      %v3825 = vld [vmem:[%s3805 + $0x4c] sm:$0xf]
      %v3826 = vld [vmem:[%s3805 + $0x50] sm:$0xf]
      %v3827 = vld [vmem:[%s3805 + $0x54] sm:$0xf]
      %v3828 = vld [vmem:[%s3805 + $0x58] sm:$0xf]
      %v3829 = vld [vmem:[%s3805 + $0x5c] sm:$0xf]
      %v3830 = vpack.c.bf16 %v3804, %v3804
      %v3831 = vpack.c.bf16 %v3800, %v3800
      %v3832 = vld [vmem:[%s10 + $0xc] sm:$0x1]
      %v3833 = vlaneseq
      %v3834 = vshrl.u32 %v3833, 7
      %v3835 = vsub.s32 0, %v3834
      %v3836 = vrot.slane %v3832, %v3835
      %v3861 = vunpack.c.l.b16 %v3806
      %v3862 = vunpack.c.l.b16 %v3807
      %v3863 = vunpack.c.l.b16 %v3808
      %v3864 = vunpack.c.l.b16 %v3809
      %v3865 = vunpack.c.l.b16 %v3810
      %v3866 = vunpack.c.l.b16 %v3811
      %v3867 = vunpack.c.l.b16 %v3812
      %v3868 = vunpack.c.l.b16 %v3813
      %v3869 = vunpack.c.l.b16 %v3814
      %v3870 = vunpack.c.l.b16 %v3815
      %v3871 = vunpack.c.l.b16 %v3816
      %v3872 = vunpack.c.l.b16 %v3817
      %v3873 = vunpack.c.l.b16 %v3818
      %v3874 = vunpack.c.l.b16 %v3819
      %v3875 = vunpack.c.l.b16 %v3820
      %v3876 = vunpack.c.l.b16 %v3821
      %v3877 = vunpack.c.l.b16 %v3822
      %v3878 = vunpack.c.l.b16 %v3823
      %v3879 = vunpack.c.l.b16 %v3824
      %v3880 = vunpack.c.l.b16 %v3825
      %v3881 = vunpack.c.l.b16 %v3826
      %v3882 = vunpack.c.l.b16 %v3827
      %v3883 = vunpack.c.l.b16 %v3828
      %v3884 = vunpack.c.l.b16 %v3829
      %v3885 = vpack.c.b16 %v3862, %v3861
      %v3886 = vpack.c.b16 %v3864, %v3863
      %v3887 = vpack.c.b16 %v3866, %v3865
      %v3888 = vpack.c.b16 %v3868, %v3867
      %v3889 = vpack.c.b16 %v3870, %v3869
      %v3890 = vpack.c.b16 %v3872, %v3871
      %v3891 = vpack.c.b16 %v3874, %v3873
      %v3892 = vpack.c.b16 %v3876, %v3875
      %v3893 = vpack.c.b16 %v3878, %v3877
      %v3894 = vpack.c.b16 %v3880, %v3879
      %v3895 = vpack.c.b16 %v3882, %v3881
      %v3896 = vpack.c.b16 %v3884, %v3883
      %v3910 = vsel %vm1971, %v3831, 0
      %3912 = vmatprep.subr.bf16.mxu0 0
      %3913 = vmatpush1.bf16.msra.mxu0 %v3885
      %3914 = vmatprep.subr.bf16.mxu0 0
      %3915 = vmatpush1.bf16.msra.mxu0 %v3886
      %3916 = vmatprep.subr.bf16.mxu0 0
      %3917 = vmatpush1.bf16.msra.mxu0 %v3887
      %3918 = vmatprep.subr.bf16.mxu0 0
      %3919 = vmatpush1.bf16.msra.mxu0 %v3888
      %3920 = vmatprep.subr.bf16.mxu0 0
      %3921 = vmatpush1.bf16.msra.mxu0 %v3889
      %3922 = vmatprep.subr.bf16.mxu0 0
      %3923 = vmatpush1.bf16.msra.mxu0 %v3890
      %3924 = vmatprep.subr.bf16.mxu0 0
      %3925 = vmatpush1.bf16.msra.mxu0 %v3891
      %3926 = vmatprep.subr.bf16.mxu0 0
      %3927 = vmatpush1.bf16.msra.mxu0 %v3892
      %3928 = vmatprep.subr.bf16.mxu0 0
      %3929 = vmatpush1.bf16.msra.mxu0 %v3893
      %3930 = vmatprep.subr.bf16.mxu0 0
      %3931 = vmatpush1.bf16.msra.mxu0 %v3894
      %3932 = vmatprep.subr.bf16.mxu0 0
      %3933 = vmatpush1.bf16.msra.mxu0 %v3895
      %3934 = vmatprep.subr.bf16.mxu0 0
      %3935 = vmatpush1.bf16.msra.mxu0 %v3896
      %3936 = vmatprep.subr.bf16.mxu0 0
      %3937 = vmatpush1.bf16.msra.mxu0 0
      %3938 = vmatprep.subr.bf16.mxu0 0
      %3939 = vmatpush1.bf16.msra.mxu0 0
      %3940 = vmatprep.subr.bf16.mxu0 0
      %3941 = vmatpush1.bf16.msra.mxu0 0
      %3942 = vmatprep.subr.bf16.mxu0 0
      %3943 = vmatpush1.bf16.msra.mxu0 0
      %3944 = vmatprep.mubr.bf16.mxu0 %v3910
      %3945 = vmatmul.mubr.bf16.gmra.mrb[0].mxu0 %v3830
      %v3946 = vpop.f32.mrb[0].mxu0
      %v3947 = vadd.f32 %v3836, %v3946
      %v3948 = vpop.f32.mrb[0].mxu0
      %v3949 = vpop.f32.mrb[0].mxu0
      %v3950 = vpop.f32.mrb[0].mxu0
      %3951 = vdwg.mxu0
      %v3952 = vmax.f32 %v3947, 0.0
      %v3953 = vmin.f32 %v3952, 6.0
      %s3954 = scalar_lea.vmem %s4, 64
      %v3955 = vld [vmem:[%s3954] sm:$0xf]
      %v3956 = vld [vmem:[%s3954 + $0x4] sm:$0xf]
      %v3957 = vld [vmem:[%s3954 + $0x8] sm:$0xf]
      %v3958 = vld [vmem:[%s3954 + $0xc] sm:$0xf]
      %v3959 = vld [vmem:[%s3954 + $0x10] sm:$0xf]
      %v3960 = vld [vmem:[%s3954 + $0x14] sm:$0xf]
      %v3961 = vld [vmem:[%s3954 + $0x18] sm:$0xf]
      %v3962 = vld [vmem:[%s3954 + $0x1c] sm:$0xf]
      %v3963 = vpack.c.bf16 %v3953, %v3953
      %v3964 = vld [vmem:[%s10 + $0xd] sm:$0x1]
      %v3965 = vlaneseq
      %v3966 = vshrl.u32 %v3965, 7
      %v3967 = vsub.s32 0, %v3966
      %v3968 = vrot.slane %v3964, %v3967
      %v3977 = vunpack.c.l.b16 %v3955
      %v3978 = vunpack.c.l.b16 %v3956
      %v3979 = vunpack.c.l.b16 %v3957
      %v3980 = vunpack.c.l.b16 %v3958
      %v3981 = vunpack.c.l.b16 %v3959
      %v3982 = vunpack.c.l.b16 %v3960
      %v3983 = vunpack.c.l.b16 %v3961
      %v3984 = vunpack.c.l.b16 %v3962
      %v3985 = vpack.c.b16 %v3978, %v3977
      %v3986 = vpack.c.b16 %v3980, %v3979
      %v3987 = vpack.c.b16 %v3982, %v3981
      %v3988 = vpack.c.b16 %v3984, %v3983
      %v3994 = vsel %vm1971, %v3963, 0
      %3996 = vmatprep.subr.bf16.mxu0 0
      %3997 = vmatpush1.bf16.msra.mxu0 %v3985
      %3998 = vmatprep.subr.bf16.mxu0 0
      %3999 = vmatpush1.bf16.msra.mxu0 %v3986
      %4000 = vmatprep.subr.bf16.mxu0 0
      %4001 = vmatpush1.bf16.msra.mxu0 %v3987
      %4002 = vmatprep.subr.bf16.mxu0 0
      %4003 = vmatpush1.bf16.msra.mxu0 %v3988
      %4004 = vmatprep.subr.bf16.mxu0 0
      %4005 = vmatpush1.bf16.msra.mxu0 0
      %4006 = vmatprep.subr.bf16.mxu0 0
      %4007 = vmatpush1.bf16.msra.mxu0 0
      %4008 = vmatprep.subr.bf16.mxu0 0
      %4009 = vmatpush1.bf16.msra.mxu0 0
      %4010 = vmatprep.subr.bf16.mxu0 0
      %4011 = vmatpush1.bf16.msra.mxu0 0
      %4012 = vmatprep.subr.bf16.mxu0 0
      %4013 = vmatpush1.bf16.msra.mxu0 0
      %4014 = vmatprep.subr.bf16.mxu0 0
      %4015 = vmatpush1.bf16.msra.mxu0 0
      %4016 = vmatprep.subr.bf16.mxu0 0
      %4017 = vmatpush1.bf16.msra.mxu0 0
      %4018 = vmatprep.subr.bf16.mxu0 0
      %4019 = vmatpush1.bf16.msra.mxu0 0
      %4020 = vmatprep.subr.bf16.mxu0 0
      %4021 = vmatpush1.bf16.msra.mxu0 0
      %4022 = vmatprep.subr.bf16.mxu0 0
      %4023 = vmatpush1.bf16.msra.mxu0 0
      %4024 = vmatprep.subr.bf16.mxu0 0
      %4025 = vmatpush1.bf16.msra.mxu0 0
      %4026 = vmatprep.subr.bf16.mxu0 0
      %4027 = vmatpush1.bf16.msra.mxu0 0
      %4028 = vmatprep.mubr.bf16.mxu0 0
      %4029 = vmatmul.mubr.bf16.gmra.mrb[0].mxu0 %v3994
      %v4030 = vpop.f32.mrb[0].mxu0
      %v4031 = vadd.f32 %v3968, %v4030
      %v4032 = vpop.f32.mrb[0].mxu0
      %v4033 = vpop.f32.mrb[0].mxu0
      %v4034 = vpop.f32.mrb[0].mxu0
      %4035 = vdwg.mxu0
      %v4036 = vmax.f32 %v4031, 0.0
      %v4037 = vmin.f32 %v4036, 6.0
      %s4038 = scalar_lea.vmem %s13, 16
      %v4039 = vld [vmem:[%s4038] sm:$0xf]
      %v4040 = vld [vmem:[%s4038 + $0x4] sm:$0xf]
      %v4041 = vpack.c.bf16 %v4037, %v4037
      %v4044 = vunpack.c.l.b16 %v4039
      %v4045 = vunpack.c.l.b16 %v4040
      %v4046 = vpack.c.b16 %v4045, %v4044
      %v4048 = vsel %vm2457, %v4046, 0
      %v4051 = vsel %vm2461, %v4041, 0
      %4053 = vmatprep.subr.bf16.mxu0 0
      %4054 = vmatpush1.bf16.msra.mxu0 %v4051
      %4055 = vmatprep.subr.bf16.mxu0 0
      %4056 = vmatpush1.bf16.msra.mxu0 0
      %4057 = vmatprep.subr.bf16.mxu0 0
      %4058 = vmatpush1.bf16.msra.mxu0 0
      %4059 = vmatprep.subr.bf16.mxu0 0
      %4060 = vmatpush1.bf16.msra.mxu0 0
      %4061 = vmatprep.subr.bf16.mxu0 0
      %4062 = vmatpush1.bf16.msra.mxu0 0
      %4063 = vmatprep.subr.bf16.mxu0 0
      %4064 = vmatpush1.bf16.msra.mxu0 0
      %4065 = vmatprep.subr.bf16.mxu0 0
      %4066 = vmatpush1.bf16.msra.mxu0 0
      %4067 = vmatprep.subr.bf16.mxu0 0
      %4068 = vmatpush1.bf16.msra.mxu0 0
      %4069 = vmatprep.subr.bf16.mxu0 0
      %4070 = vmatpush1.bf16.msra.mxu0 0
      %4071 = vmatprep.subr.bf16.mxu0 0
      %4072 = vmatpush1.bf16.msra.mxu0 0
      %4073 = vmatprep.subr.bf16.mxu0 0
      %4074 = vmatpush1.bf16.msra.mxu0 0
      %4075 = vmatprep.subr.bf16.mxu0 0
      %4076 = vmatpush1.bf16.msra.mxu0 0
      %4077 = vmatprep.subr.bf16.mxu0 0
      %4078 = vmatpush1.bf16.msra.mxu0 0
      %4079 = vmatprep.subr.bf16.mxu0 0
      %4080 = vmatpush1.bf16.msra.mxu0 0
      %4081 = vmatprep.subr.bf16.mxu0 0
      %4082 = vmatpush1.bf16.msra.mxu0 0
      %4083 = vmatprep.subr.bf16.mxu0 0
      %4084 = vmatpush1.bf16.msra.mxu0 0
      %4085 = vmatprep.mubr.bf16.mxu0 0
      %4086 = vmatmul.mubr.bf16.gmra.mrb[0].mxu0 %v4048
      %v4087 = vpop.f32.mrb[0].mxu0
      %v4088 = vadd.f32 0.0, %v4087
      %v4089 = vpop.f32.mrb[0].mxu0
      %v4090 = vpop.f32.mrb[0].mxu0
      %v4091 = vadd.f32 0.0, %v4090
      %v4092 = vpop.f32.mrb[0].mxu0
      %4093 = vdwg.mxu0
      %s4094 = scalar_lea.vmem %s14, 64
      %v4095 = vld [vmem:[%s4094] sm:$0xf]
      %v4096 = vld [vmem:[%s4094 + $0x4] sm:$0xf]
      %v4097 = vld [vmem:[%s4094 + $0x8] sm:$0xf]
      %v4098 = vld [vmem:[%s4094 + $0xc] sm:$0xf]
      %v4099 = vld [vmem:[%s4094 + $0x10] sm:$0xf]
      %v4100 = vld [vmem:[%s4094 + $0x14] sm:$0xf]
      %v4101 = vld [vmem:[%s4094 + $0x18] sm:$0xf]
      %v4102 = vld [vmem:[%s4094 + $0x1c] sm:$0xf]
      %v4103 = vpack.c.bf16 %v4091, %v4088
      %v4112 = vunpack.c.l.b16 %v4095
      %v4113 = vunpack.c.l.b16 %v4096
      %v4114 = vunpack.c.l.b16 %v4097
      %v4115 = vunpack.c.l.b16 %v4098
      %v4116 = vunpack.c.l.b16 %v4099
      %v4117 = vunpack.c.l.b16 %v4100
      %v4118 = vunpack.c.l.b16 %v4101
      %v4119 = vunpack.c.l.b16 %v4102
      %v4120 = vpack.c.b16 %v4113, %v4112
      %v4121 = vpack.c.b16 %v4115, %v4114
      %v4122 = vpack.c.b16 %v4117, %v4116
      %v4123 = vpack.c.b16 %v4119, %v4118
      %v4129 = vsel %vm1971, %v4103, 0
      %4131 = vmatprep.subr.bf16.mxu0 0
      %4132 = vmatpush1.bf16.msra.mxu0 %v4120
      %4133 = vmatprep.subr.bf16.mxu0 0
      %4134 = vmatpush1.bf16.msra.mxu0 %v4121
      %4135 = vmatprep.subr.bf16.mxu0 0
      %4136 = vmatpush1.bf16.msra.mxu0 %v4122
      %4137 = vmatprep.subr.bf16.mxu0 0
      %4138 = vmatpush1.bf16.msra.mxu0 %v4123
      %4139 = vmatprep.subr.bf16.mxu0 0
      %4140 = vmatpush1.bf16.msra.mxu0 0
      %4141 = vmatprep.subr.bf16.mxu0 0
      %4142 = vmatpush1.bf16.msra.mxu0 0
      %4143 = vmatprep.subr.bf16.mxu0 0
      %4144 = vmatpush1.bf16.msra.mxu0 0
      %4145 = vmatprep.subr.bf16.mxu0 0
      %4146 = vmatpush1.bf16.msra.mxu0 0
      %4147 = vmatprep.subr.bf16.mxu0 0
      %4148 = vmatpush1.bf16.msra.mxu0 0
      %4149 = vmatprep.subr.bf16.mxu0 0
      %4150 = vmatpush1.bf16.msra.mxu0 0
      %4151 = vmatprep.subr.bf16.mxu0 0
      %4152 = vmatpush1.bf16.msra.mxu0 0
      %4153 = vmatprep.subr.bf16.mxu0 0
      %4154 = vmatpush1.bf16.msra.mxu0 0
      %4155 = vmatprep.subr.bf16.mxu0 0
      %4156 = vmatpush1.bf16.msra.mxu0 0
      %4157 = vmatprep.subr.bf16.mxu0 0
      %4158 = vmatpush1.bf16.msra.mxu0 0
      %4159 = vmatprep.subr.bf16.mxu0 0
      %4160 = vmatpush1.bf16.msra.mxu0 0
      %4161 = vmatprep.subr.bf16.mxu0 0
      %4162 = vmatpush1.bf16.msra.mxu0 0
      %4163 = vmatprep.mubr.bf16.mxu0 0
      %4164 = vmatmul.mubr.bf16.gmra.mrb[0].mxu0 %v4129
      %v4165 = vpop.f32.mrb[0].mxu0
      %v4166 = vadd.f32 %v1747, %v4165
      %v4167 = vpop.f32.mrb[0].mxu0
      %v4168 = vpop.f32.mrb[0].mxu0
      %v4169 = vadd.f32 %v1748, %v4168
      %v4170 = vpop.f32.mrb[0].mxu0
      %4171 = vdwg.mxu0
      %v4172 = vld [vmem:[%s10 + $0x18] sm:$0x1]
      %v4173 = vlaneseq
      %v4174 = vshrl.u32 %v4173, 7
      %v4175 = vsub.s32 0, %v4174
      %v4176 = vrot.slane %v4172, %v4175
      %v4177 = vmul.f32 %v4166, %v4176
      %v4178 = vmul.f32 %v4169, %v4176
      %v4179 = vld [vmem:[%s10 + $0x19] sm:$0x1]
      %v4180 = vlaneseq
      %v4181 = vshrl.u32 %v4180, 7
      %v4182 = vsub.s32 0, %v4181
      %v4183 = vrot.slane %v4179, %v4182
      %v4184 = vadd.f32 %v4177, %v4183
      %v4185 = vadd.f32 %v4178, %v4183
      %v4186 = vmax.f32 %v4184, 0.0
      %v4187 = vmax.f32 %v4185, 0.0
      %v4188 = vld [vmem:[%s9] sm:$0xf]
      %v4189 = vld [vmem:[%s9 + $0x4] sm:$0xf]
      %v4190 = vld [vmem:[%s9 + $0x8] sm:$0xf]
      %v4191 = vld [vmem:[%s9 + $0xc] sm:$0xf]
      %v4192 = vld [vmem:[%s9 + $0x10] sm:$0xf]
      %v4193 = vld [vmem:[%s9 + $0x14] sm:$0xf]
      %v4194 = vld [vmem:[%s9 + $0x18] sm:$0xf]
      %v4195 = vld [vmem:[%s9 + $0x1c] sm:$0xf]
      %v4196 = vld [vmem:[%s9 + $0x20] sm:$0xf]
      %v4197 = vld [vmem:[%s9 + $0x24] sm:$0xf]
      %v4198 = vld [vmem:[%s9 + $0x28] sm:$0xf]
      %v4199 = vld [vmem:[%s9 + $0x2c] sm:$0xf]
      %v4200 = vld [vmem:[%s9 + $0x30] sm:$0xf]
      %v4201 = vld [vmem:[%s9 + $0x34] sm:$0xf]
      %v4202 = vld [vmem:[%s9 + $0x38] sm:$0xf]
      %v4203 = vld [vmem:[%s9 + $0x3c] sm:$0xf]
      %v4204 = vpack.c.bf16 %v4187, %v4186
      %v4205 = vld [vmem:[%s10 + $0x1a] sm:$0x1]
      %v4206 = vlaneseq
      %v4207 = vshrl.u32 %v4206, 7
      %v4208 = vsub.s32 0, %v4207
      %v4209 = vrot.slane %v4205, %v4208
      %v4226 = vunpack.c.l.b16 %v4188
      %v4227 = vunpack.c.l.b16 %v4189
      %v4228 = vunpack.c.l.b16 %v4190
      %v4229 = vunpack.c.l.b16 %v4191
      %v4230 = vunpack.c.l.b16 %v4192
      %v4231 = vunpack.c.l.b16 %v4193
      %v4232 = vunpack.c.l.b16 %v4194
      %v4233 = vunpack.c.l.b16 %v4195
      %v4234 = vunpack.c.l.b16 %v4196
      %v4235 = vunpack.c.l.b16 %v4197
      %v4236 = vunpack.c.l.b16 %v4198
      %v4237 = vunpack.c.l.b16 %v4199
      %v4238 = vunpack.c.l.b16 %v4200
      %v4239 = vunpack.c.l.b16 %v4201
      %v4240 = vunpack.c.l.b16 %v4202
      %v4241 = vunpack.c.l.b16 %v4203
      %v4242 = vpack.c.b16 %v4227, %v4226
      %v4243 = vpack.c.b16 %v4229, %v4228
      %v4244 = vpack.c.b16 %v4231, %v4230
      %v4245 = vpack.c.b16 %v4233, %v4232
      %v4246 = vpack.c.b16 %v4235, %v4234
      %v4247 = vpack.c.b16 %v4237, %v4236
      %v4248 = vpack.c.b16 %v4239, %v4238
      %v4249 = vpack.c.b16 %v4241, %v4240
      %4258 = vmatprep.subr.bf16.mxu0 0
      %4259 = vmatpush1.bf16.msra.mxu0 %v4242
      %4260 = vmatprep.subr.bf16.mxu0 0
      %4261 = vmatpush1.bf16.msra.mxu0 %v4243
      %4262 = vmatprep.subr.bf16.mxu0 0
      %4263 = vmatpush1.bf16.msra.mxu0 %v4244
      %4264 = vmatprep.subr.bf16.mxu0 0
      %4265 = vmatpush1.bf16.msra.mxu0 %v4245
      %4266 = vmatprep.subr.bf16.mxu0 0
      %4267 = vmatpush1.bf16.msra.mxu0 %v4246
      %4268 = vmatprep.subr.bf16.mxu0 0
      %4269 = vmatpush1.bf16.msra.mxu0 %v4247
      %4270 = vmatprep.subr.bf16.mxu0 0
      %4271 = vmatpush1.bf16.msra.mxu0 %v4248
      %4272 = vmatprep.subr.bf16.mxu0 0
      %4273 = vmatpush1.bf16.msra.mxu0 %v4249
      %4274 = vmatprep.subr.bf16.mxu0 0
      %4275 = vmatpush1.bf16.msra.mxu0 0
      %4276 = vmatprep.subr.bf16.mxu0 0
      %4277 = vmatpush1.bf16.msra.mxu0 0
      %4278 = vmatprep.subr.bf16.mxu0 0
      %4279 = vmatpush1.bf16.msra.mxu0 0
      %4280 = vmatprep.subr.bf16.mxu0 0
      %4281 = vmatpush1.bf16.msra.mxu0 0
      %4282 = vmatprep.subr.bf16.mxu0 0
      %4283 = vmatpush1.bf16.msra.mxu0 0
      %4284 = vmatprep.subr.bf16.mxu0 0
      %4285 = vmatpush1.bf16.msra.mxu0 0
      %4286 = vmatprep.subr.bf16.mxu0 0
      %4287 = vmatpush1.bf16.msra.mxu0 0
      %4288 = vmatprep.subr.bf16.mxu0 0
      %4289 = vmatpush1.bf16.msra.mxu0 0
      %4290 = vmatprep.mubr.bf16.mxu0 0
      %4291 = vmatmul.mubr.bf16.gmra.mrb[0].mxu0 %v4204
      %v4292 = vpop.f32.mrb[0].mxu0
      %v4293 = vadd.f32 %v4209, %v4292
      %v4294 = vpop.f32.mrb[0].mxu0
      %v4295 = vpop.f32.mrb[0].mxu0
      %v4296 = vadd.f32 %v4209, %v4295
      %v4297 = vpop.f32.mrb[0].mxu0
      %4298 = vdwg.mxu0
      %v4299 = vmax.f32 %v4293, 0.0
      %v4300 = vmax.f32 %v4296, 0.0
      %s4301 = scalar_lea.vmem %s9, 64
      %v4302 = vld [vmem:[%s4301] sm:$0xf]
      %v4303 = vld [vmem:[%s4301 + $0x4] sm:$0xf]
      %v4304 = vld [vmem:[%s4301 + $0x8] sm:$0xf]
      %v4305 = vld [vmem:[%s4301 + $0xc] sm:$0xf]
      %v4306 = vld [vmem:[%s4301 + $0x10] sm:$0xf]
      %v4307 = vld [vmem:[%s4301 + $0x14] sm:$0xf]
      %v4308 = vld [vmem:[%s4301 + $0x18] sm:$0xf]
      %v4309 = vld [vmem:[%s4301 + $0x1c] sm:$0xf]
      %v4310 = vld [vmem:[%s4301 + $0x20] sm:$0xf]
      %v4311 = vld [vmem:[%s4301 + $0x24] sm:$0xf]
      %v4312 = vld [vmem:[%s4301 + $0x28] sm:$0xf]
      %v4313 = vld [vmem:[%s4301 + $0x2c] sm:$0xf]
      %v4314 = vld [vmem:[%s4301 + $0x30] sm:$0xf]
      %v4315 = vld [vmem:[%s4301 + $0x34] sm:$0xf]
      %v4316 = vld [vmem:[%s4301 + $0x38] sm:$0xf]
      %v4317 = vld [vmem:[%s4301 + $0x3c] sm:$0xf]
      %v4318 = vpack.c.bf16 %v4300, %v4299
      %v4335 = vunpack.c.l.b16 %v4302
      %v4336 = vunpack.c.l.b16 %v4303
      %v4337 = vunpack.c.l.b16 %v4304
      %v4338 = vunpack.c.l.b16 %v4305
      %v4339 = vunpack.c.l.b16 %v4306
      %v4340 = vunpack.c.l.b16 %v4307
      %v4341 = vunpack.c.l.b16 %v4308
      %v4342 = vunpack.c.l.b16 %v4309
      %v4343 = vunpack.c.l.b16 %v4310
      %v4344 = vunpack.c.l.b16 %v4311
      %v4345 = vunpack.c.l.b16 %v4312
      %v4346 = vunpack.c.l.b16 %v4313
      %v4347 = vunpack.c.l.b16 %v4314
      %v4348 = vunpack.c.l.b16 %v4315
      %v4349 = vunpack.c.l.b16 %v4316
      %v4350 = vunpack.c.l.b16 %v4317
      %v4351 = vpack.c.b16 %v4336, %v4335
      %v4352 = vpack.c.b16 %v4338, %v4337
      %v4353 = vpack.c.b16 %v4340, %v4339
      %v4354 = vpack.c.b16 %v4342, %v4341
      %v4355 = vpack.c.b16 %v4344, %v4343
      %v4356 = vpack.c.b16 %v4346, %v4345
      %v4357 = vpack.c.b16 %v4348, %v4347
      %v4358 = vpack.c.b16 %v4350, %v4349
      %4367 = vmatprep.subr.bf16.mxu0 0
      %4368 = vmatpush1.bf16.msra.mxu0 %v4351
      %4369 = vmatprep.subr.bf16.mxu0 0
      %4370 = vmatpush1.bf16.msra.mxu0 %v4352
      %4371 = vmatprep.subr.bf16.mxu0 0
      %4372 = vmatpush1.bf16.msra.mxu0 %v4353
      %4373 = vmatprep.subr.bf16.mxu0 0
      %4374 = vmatpush1.bf16.msra.mxu0 %v4354
      %4375 = vmatprep.subr.bf16.mxu0 0
      %4376 = vmatpush1.bf16.msra.mxu0 %v4355
      %4377 = vmatprep.subr.bf16.mxu0 0
      %4378 = vmatpush1.bf16.msra.mxu0 %v4356
      %4379 = vmatprep.subr.bf16.mxu0 0
      %4380 = vmatpush1.bf16.msra.mxu0 %v4357
      %4381 = vmatprep.subr.bf16.mxu0 0
      %4382 = vmatpush1.bf16.msra.mxu0 %v4358
      %4383 = vmatprep.subr.bf16.mxu0 0
      %4384 = vmatpush1.bf16.msra.mxu0 0
      %4385 = vmatprep.subr.bf16.mxu0 0
      %4386 = vmatpush1.bf16.msra.mxu0 0
      %4387 = vmatprep.subr.bf16.mxu0 0
      %4388 = vmatpush1.bf16.msra.mxu0 0
      %4389 = vmatprep.subr.bf16.mxu0 0
      %4390 = vmatpush1.bf16.msra.mxu0 0
      %4391 = vmatprep.subr.bf16.mxu0 0
      %4392 = vmatpush1.bf16.msra.mxu0 0
      %4393 = vmatprep.subr.bf16.mxu0 0
      %4394 = vmatpush1.bf16.msra.mxu0 0
      %4395 = vmatprep.subr.bf16.mxu0 0
      %4396 = vmatpush1.bf16.msra.mxu0 0
      %4397 = vmatprep.subr.bf16.mxu0 0
      %4398 = vmatpush1.bf16.msra.mxu0 0
      %4399 = vmatprep.mubr.bf16.mxu0 0
      %4400 = vmatmul.mubr.bf16.gmra.mrb[0].mxu0 %v4318
      %v4401 = vpop.f32.mrb[0].mxu0
      %v4402 = vadd.f32 0.0, %v4401
      %v4403 = vpop.f32.mrb[0].mxu0
      %v4404 = vpop.f32.mrb[0].mxu0
      %v4405 = vadd.f32 0.0, %v4404
      %v4406 = vpop.f32.mrb[0].mxu0
      %4407 = vdwg.mxu0
      %v4408 = vsub.f32 0.0, %v4402
      %v4409 = vsub.f32 0.0, %v4405
      %v4410 = vmul.f32 %v4408, 1.442695
      %v4411 = vpow.pop %v4410
      %v4412 = vmul.f32 %v4409, 1.442695
      %v4413 = vpow.pop %v4412
      %v4414 = vadd.f32 %v4411, 1.0
      %v4415 = vadd.f32 %v4413, 1.0
      %v4416 = vrcp.pop %v4414
      %v4417 = vrcp.pop %v4415
      %v4418 = vadd.f32 %v4416, 1.0
      %v4419 = vadd.f32 %v4417, 1.0
      %v4420 = vmul.f32 %v4418, %v1747
      %v4421 = vmul.f32 %v4419, %v1748
      %v4424 = vrot.slane %v4420, 7
      %v4425 = vrot.slane %v4421, 7
      %v4426 = vsel %vm500, %v4424, %v4425
      %v4429 = vsel %vm500, 0.0, %v4424
      %v4430 = vrot.slane %v4420, 1
      %v4431 = vrot.slane %v4421, 1
      %v4432 = vsel %vm507, %v4430, %v4431
      %v4435 = vsel %vm507, %v4431, 0.0
      %s4436 = scalar_lea.vmem %s1, 576
      %v4437 = vld [vmem:[%s4436] sm:$0xf]
      %v4438 = vld [vmem:[%s4436 + $0x4] sm:$0xf]
      %v4439 = vld [vmem:[%s4436 + $0x8] sm:$0xf]
      %v4440 = vld [vmem:[%s4436 + $0xc] sm:$0xf]
      %v4441 = vld [vmem:[%s4436 + $0x10] sm:$0xf]
      %v4442 = vld [vmem:[%s4436 + $0x14] sm:$0xf]
      %v4443 = vld [vmem:[%s4436 + $0x18] sm:$0xf]
      %v4444 = vld [vmem:[%s4436 + $0x1c] sm:$0xf]
      %v4445 = vld [vmem:[%s4436 + $0x20] sm:$0xf]
      %v4446 = vld [vmem:[%s4436 + $0x24] sm:$0xf]
      %v4447 = vld [vmem:[%s4436 + $0x28] sm:$0xf]
      %v4448 = vld [vmem:[%s4436 + $0x2c] sm:$0xf]
      %v4449 = vld [vmem:[%s4436 + $0x30] sm:$0xf]
      %v4450 = vld [vmem:[%s4436 + $0x34] sm:$0xf]
      %v4451 = vld [vmem:[%s4436 + $0x38] sm:$0xf]
      %v4452 = vld [vmem:[%s4436 + $0x3c] sm:$0xf]
      %v4453 = vld [vmem:[%s4436 + $0x40] sm:$0xf]
      %v4454 = vld [vmem:[%s4436 + $0x44] sm:$0xf]
      %v4455 = vld [vmem:[%s4436 + $0x48] sm:$0xf]
      %v4456 = vld [vmem:[%s4436 + $0x4c] sm:$0xf]
      %v4457 = vld [vmem:[%s4436 + $0x50] sm:$0xf]
      %v4458 = vld [vmem:[%s4436 + $0x54] sm:$0xf]
      %v4459 = vld [vmem:[%s4436 + $0x58] sm:$0xf]
      %v4460 = vld [vmem:[%s4436 + $0x5c] sm:$0xf]
      %v4461 = vld [vmem:[%s4436 + $0x60] sm:$0xf]
      %v4462 = vld [vmem:[%s4436 + $0x64] sm:$0xf]
      %v4463 = vld [vmem:[%s4436 + $0x68] sm:$0xf]
      %v4464 = vld [vmem:[%s4436 + $0x6c] sm:$0xf]
      %v4465 = vld [vmem:[%s4436 + $0x70] sm:$0xf]
      %v4466 = vld [vmem:[%s4436 + $0x74] sm:$0xf]
      %v4467 = vld [vmem:[%s4436 + $0x78] sm:$0xf]
      %v4468 = vld [vmem:[%s4436 + $0x7c] sm:$0xf]
      %v4469 = vld [vmem:[%s4436 + $0x80] sm:$0xf]
      %v4470 = vld [vmem:[%s4436 + $0x84] sm:$0xf]
      %v4471 = vld [vmem:[%s4436 + $0x88] sm:$0xf]
      %v4472 = vld [vmem:[%s4436 + $0x8c] sm:$0xf]
      %v4473 = vld [vmem:[%s4436 + $0x90] sm:$0xf]
      %v4474 = vld [vmem:[%s4436 + $0x94] sm:$0xf]
      %v4475 = vld [vmem:[%s4436 + $0x98] sm:$0xf]
      %v4476 = vld [vmem:[%s4436 + $0x9c] sm:$0xf]
      %v4477 = vld [vmem:[%s4436 + $0xa0] sm:$0xf]
      %v4478 = vld [vmem:[%s4436 + $0xa4] sm:$0xf]
      %v4479 = vld [vmem:[%s4436 + $0xa8] sm:$0xf]
      %v4480 = vld [vmem:[%s4436 + $0xac] sm:$0xf]
      %v4481 = vld [vmem:[%s4436 + $0xb0] sm:$0xf]
      %v4482 = vld [vmem:[%s4436 + $0xb4] sm:$0xf]
      %v4483 = vld [vmem:[%s4436 + $0xb8] sm:$0xf]
      %v4484 = vld [vmem:[%s4436 + $0xbc] sm:$0xf]
      %v4485 = vpack.c.bf16 %v4426, %v4429
      %v4486 = vpack.c.bf16 %v4421, %v4420
      %v4487 = vpack.c.bf16 %v4435, %v4432
      %v4488 = vld [vmem:[%s10 + $0x6] sm:$0x1]
      %v4489 = vlaneseq
      %v4490 = vshrl.u32 %v4489, 7
      %v4491 = vsub.s32 0, %v4490
      %v4492 = vrot.slane %v4488, %v4491
      %v4541 = vunpack.c.l.b16 %v4437
      %v4542 = vunpack.c.l.b16 %v4438
      %v4543 = vunpack.c.l.b16 %v4439
      %v4544 = vunpack.c.l.b16 %v4440
      %v4545 = vunpack.c.l.b16 %v4441
      %v4546 = vunpack.c.l.b16 %v4442
      %v4547 = vunpack.c.l.b16 %v4443
      %v4548 = vunpack.c.l.b16 %v4444
      %v4549 = vunpack.c.l.b16 %v4445
      %v4550 = vunpack.c.l.b16 %v4446
      %v4551 = vunpack.c.l.b16 %v4447
      %v4552 = vunpack.c.l.b16 %v4448
      %v4553 = vunpack.c.l.b16 %v4449
      %v4554 = vunpack.c.l.b16 %v4450
      %v4555 = vunpack.c.l.b16 %v4451
      %v4556 = vunpack.c.l.b16 %v4452
      %v4557 = vunpack.c.l.b16 %v4453
      %v4558 = vunpack.c.l.b16 %v4454
      %v4559 = vunpack.c.l.b16 %v4455
      %v4560 = vunpack.c.l.b16 %v4456
      %v4561 = vunpack.c.l.b16 %v4457
      %v4562 = vunpack.c.l.b16 %v4458
      %v4563 = vunpack.c.l.b16 %v4459
      %v4564 = vunpack.c.l.b16 %v4460
      %v4565 = vunpack.c.l.b16 %v4461
      %v4566 = vunpack.c.l.b16 %v4462
      %v4567 = vunpack.c.l.b16 %v4463
      %v4568 = vunpack.c.l.b16 %v4464
      %v4569 = vunpack.c.l.b16 %v4465
      %v4570 = vunpack.c.l.b16 %v4466
      %v4571 = vunpack.c.l.b16 %v4467
      %v4572 = vunpack.c.l.b16 %v4468
      %v4573 = vunpack.c.l.b16 %v4469
      %v4574 = vunpack.c.l.b16 %v4470
      %v4575 = vunpack.c.l.b16 %v4471
      %v4576 = vunpack.c.l.b16 %v4472
      %v4577 = vunpack.c.l.b16 %v4473
      %v4578 = vunpack.c.l.b16 %v4474
      %v4579 = vunpack.c.l.b16 %v4475
      %v4580 = vunpack.c.l.b16 %v4476
      %v4581 = vunpack.c.l.b16 %v4477
      %v4582 = vunpack.c.l.b16 %v4478
      %v4583 = vunpack.c.l.b16 %v4479
      %v4584 = vunpack.c.l.b16 %v4480
      %v4585 = vunpack.c.l.b16 %v4481
      %v4586 = vunpack.c.l.b16 %v4482
      %v4587 = vunpack.c.l.b16 %v4483
      %v4588 = vunpack.c.l.b16 %v4484
      %v4589 = vpack.c.b16 %v4542, %v4541
      %v4590 = vpack.c.b16 %v4544, %v4543
      %v4591 = vpack.c.b16 %v4546, %v4545
      %v4592 = vpack.c.b16 %v4548, %v4547
      %v4593 = vpack.c.b16 %v4550, %v4549
      %v4594 = vpack.c.b16 %v4552, %v4551
      %v4595 = vpack.c.b16 %v4554, %v4553
      %v4596 = vpack.c.b16 %v4556, %v4555
      %v4597 = vpack.c.b16 %v4558, %v4557
      %v4598 = vpack.c.b16 %v4560, %v4559
      %v4599 = vpack.c.b16 %v4562, %v4561
      %v4600 = vpack.c.b16 %v4564, %v4563
      %v4601 = vpack.c.b16 %v4566, %v4565
      %v4602 = vpack.c.b16 %v4568, %v4567
      %v4603 = vpack.c.b16 %v4570, %v4569
      %v4604 = vpack.c.b16 %v4572, %v4571
      %v4605 = vpack.c.b16 %v4574, %v4573
      %v4606 = vpack.c.b16 %v4576, %v4575
      %v4607 = vpack.c.b16 %v4578, %v4577
      %v4608 = vpack.c.b16 %v4580, %v4579
      %v4609 = vpack.c.b16 %v4582, %v4581
      %v4610 = vpack.c.b16 %v4584, %v4583
      %v4611 = vpack.c.b16 %v4586, %v4585
      %v4612 = vpack.c.b16 %v4588, %v4587
      %4637 = vmatprep.subr.bf16.mxu0 0
      %4638 = vmatpush1.bf16.msra.mxu0 %v4589
      %4639 = vmatprep.subr.bf16.mxu0 0
      %4640 = vmatpush1.bf16.msra.mxu0 %v4590
      %4641 = vmatprep.subr.bf16.mxu0 0
      %4642 = vmatpush1.bf16.msra.mxu0 %v4591
      %4643 = vmatprep.subr.bf16.mxu0 0
      %4644 = vmatpush1.bf16.msra.mxu0 %v4592
      %4645 = vmatprep.subr.bf16.mxu0 0
      %4646 = vmatpush1.bf16.msra.mxu0 %v4593
      %4647 = vmatprep.subr.bf16.mxu0 0
      %4648 = vmatpush1.bf16.msra.mxu0 %v4594
      %4649 = vmatprep.subr.bf16.mxu0 0
      %4650 = vmatpush1.bf16.msra.mxu0 %v4595
      %4651 = vmatprep.subr.bf16.mxu0 0
      %4652 = vmatpush1.bf16.msra.mxu0 %v4596
      %4653 = vmatprep.subr.bf16.mxu0 0
      %4654 = vmatpush1.bf16.msra.mxu0 %v4597
      %4655 = vmatprep.subr.bf16.mxu0 0
      %4656 = vmatpush1.bf16.msra.mxu0 %v4598
      %4657 = vmatprep.subr.bf16.mxu0 0
      %4658 = vmatpush1.bf16.msra.mxu0 %v4599
      %4659 = vmatprep.subr.bf16.mxu0 0
      %4660 = vmatpush1.bf16.msra.mxu0 %v4600
      %4661 = vmatprep.subr.bf16.mxu0 0
      %4662 = vmatpush1.bf16.msra.mxu0 %v4601
      %4663 = vmatprep.subr.bf16.mxu0 0
      %4664 = vmatpush1.bf16.msra.mxu0 %v4602
      %4665 = vmatprep.subr.bf16.mxu0 0
      %4666 = vmatpush1.bf16.msra.mxu0 %v4603
      %4667 = vmatprep.subr.bf16.mxu0 0
      %4668 = vmatpush1.bf16.msra.mxu0 %v4604
      %4669 = vmatprep.mubr.bf16.mxu0 %v4486
      %4670 = vmatmul.mubr.bf16.gmra.mrb[0].mxu0 %v4485
      %v4671 = vpop.f32.mrb[0].mxu0
      %v4672 = vadd.f32 %v4492, %v4671
      %v4673 = vpop.f32.mrb[0].mxu0
      %v4674 = vpop.f32.mrb[0].mxu0
      %v4675 = vadd.f32 %v4492, %v4674
      %v4676 = vpop.f32.mrb[0].mxu0
      %4677 = vdwg.mxu0
      %4678 = vmatprep.subr.bf16.mxu0 0
      %4679 = vmatpush1.bf16.msra.mxu0 %v4605
      %4680 = vmatprep.subr.bf16.mxu0 0
      %4681 = vmatpush1.bf16.msra.mxu0 %v4606
      %4682 = vmatprep.subr.bf16.mxu0 0
      %4683 = vmatpush1.bf16.msra.mxu0 %v4607
      %4684 = vmatprep.subr.bf16.mxu0 0
      %4685 = vmatpush1.bf16.msra.mxu0 %v4608
      %4686 = vmatprep.subr.bf16.mxu0 0
      %4687 = vmatpush1.bf16.msra.mxu0 %v4609
      %4688 = vmatprep.subr.bf16.mxu0 0
      %4689 = vmatpush1.bf16.msra.mxu0 %v4610
      %4690 = vmatprep.subr.bf16.mxu0 0
      %4691 = vmatpush1.bf16.msra.mxu0 %v4611
      %4692 = vmatprep.subr.bf16.mxu0 0
      %4693 = vmatpush1.bf16.msra.mxu0 %v4612
      %4694 = vmatprep.subr.bf16.mxu0 0
      %4695 = vmatpush1.bf16.msra.mxu0 0
      %4696 = vmatprep.subr.bf16.mxu0 0
      %4697 = vmatpush1.bf16.msra.mxu0 0
      %4698 = vmatprep.subr.bf16.mxu0 0
      %4699 = vmatpush1.bf16.msra.mxu0 0
      %4700 = vmatprep.subr.bf16.mxu0 0
      %4701 = vmatpush1.bf16.msra.mxu0 0
      %4702 = vmatprep.subr.bf16.mxu0 0
      %4703 = vmatpush1.bf16.msra.mxu0 0
      %4704 = vmatprep.subr.bf16.mxu0 0
      %4705 = vmatpush1.bf16.msra.mxu0 0
      %4706 = vmatprep.subr.bf16.mxu0 0
      %4707 = vmatpush1.bf16.msra.mxu0 0
      %4708 = vmatprep.subr.bf16.mxu0 0
      %4709 = vmatpush1.bf16.msra.mxu0 0
      %4710 = vmatprep.mubr.bf16.mxu0 0
      %4711 = vmatmul.mubr.bf16.gmra.mrb[0].mxu0 %v4487
      %v4712 = vpop.f32.mrb[0].mxu0
      %v4713 = vadd.f32 %v4672, %v4712
      %v4714 = vpop.f32.mrb[0].mxu0
      %v4715 = vpop.f32.mrb[0].mxu0
      %v4716 = vadd.f32 %v4675, %v4715
      %v4717 = vpop.f32.mrb[0].mxu0
      %4718 = vdwg.mxu0
      %v4719 = vmax.f32 %v4713, 0.0
      %v4720 = vmax.f32 %v4716, 0.0
      %v4721 = vmin.f32 %v4719, 6.0
      %v4722 = vmin.f32 %v4720, 6.0
      %s4723 = scalar_lea.vmem %s2, 192
      %v4724 = vld [vmem:[%s4723] sm:$0xf]
      %v4725 = vld [vmem:[%s4723 + $0x4] sm:$0xf]
      %v4726 = vld [vmem:[%s4723 + $0x8] sm:$0xf]
      %v4727 = vld [vmem:[%s4723 + $0xc] sm:$0xf]
      %v4728 = vld [vmem:[%s4723 + $0x10] sm:$0xf]
      %v4729 = vld [vmem:[%s4723 + $0x14] sm:$0xf]
      %v4730 = vld [vmem:[%s4723 + $0x18] sm:$0xf]
      %v4731 = vld [vmem:[%s4723 + $0x1c] sm:$0xf]
      %v4732 = vld [vmem:[%s4723 + $0x20] sm:$0xf]
      %v4733 = vld [vmem:[%s4723 + $0x24] sm:$0xf]
      %v4734 = vld [vmem:[%s4723 + $0x28] sm:$0xf]
      %v4735 = vld [vmem:[%s4723 + $0x2c] sm:$0xf]
      %v4736 = vld [vmem:[%s4723 + $0x30] sm:$0xf]
      %v4737 = vld [vmem:[%s4723 + $0x34] sm:$0xf]
      %v4738 = vld [vmem:[%s4723 + $0x38] sm:$0xf]
      %v4739 = vld [vmem:[%s4723 + $0x3c] sm:$0xf]
      %v4740 = vpack.c.bf16 %v4722, %v4721
      %v4741 = vld [vmem:[%s10 + $0x7] sm:$0x1]
      %v4742 = vlaneseq
      %v4743 = vshrl.u32 %v4742, 7
      %v4744 = vsub.s32 0, %v4743
      %v4745 = vrot.slane %v4741, %v4744
      %v4762 = vunpack.c.l.b16 %v4724
      %v4763 = vunpack.c.l.b16 %v4725
      %v4764 = vunpack.c.l.b16 %v4726
      %v4765 = vunpack.c.l.b16 %v4727
      %v4766 = vunpack.c.l.b16 %v4728
      %v4767 = vunpack.c.l.b16 %v4729
      %v4768 = vunpack.c.l.b16 %v4730
      %v4769 = vunpack.c.l.b16 %v4731
      %v4770 = vunpack.c.l.b16 %v4732
      %v4771 = vunpack.c.l.b16 %v4733
      %v4772 = vunpack.c.l.b16 %v4734
      %v4773 = vunpack.c.l.b16 %v4735
      %v4774 = vunpack.c.l.b16 %v4736
      %v4775 = vunpack.c.l.b16 %v4737
      %v4776 = vunpack.c.l.b16 %v4738
      %v4777 = vunpack.c.l.b16 %v4739
      %v4778 = vpack.c.b16 %v4763, %v4762
      %v4779 = vpack.c.b16 %v4765, %v4764
      %v4780 = vpack.c.b16 %v4767, %v4766
      %v4781 = vpack.c.b16 %v4769, %v4768
      %v4782 = vpack.c.b16 %v4771, %v4770
      %v4783 = vpack.c.b16 %v4773, %v4772
      %v4784 = vpack.c.b16 %v4775, %v4774
      %v4785 = vpack.c.b16 %v4777, %v4776
      %4794 = vmatprep.subr.bf16.mxu0 0
      %4795 = vmatpush1.bf16.msra.mxu0 %v4778
      %4796 = vmatprep.subr.bf16.mxu0 0
      %4797 = vmatpush1.bf16.msra.mxu0 %v4779
      %4798 = vmatprep.subr.bf16.mxu0 0
      %4799 = vmatpush1.bf16.msra.mxu0 %v4780
      %4800 = vmatprep.subr.bf16.mxu0 0
      %4801 = vmatpush1.bf16.msra.mxu0 %v4781
      %4802 = vmatprep.subr.bf16.mxu0 0
      %4803 = vmatpush1.bf16.msra.mxu0 %v4782
      %4804 = vmatprep.subr.bf16.mxu0 0
      %4805 = vmatpush1.bf16.msra.mxu0 %v4783
      %4806 = vmatprep.subr.bf16.mxu0 0
      %4807 = vmatpush1.bf16.msra.mxu0 %v4784
      %4808 = vmatprep.subr.bf16.mxu0 0
      %4809 = vmatpush1.bf16.msra.mxu0 %v4785
      %4810 = vmatprep.subr.bf16.mxu0 0
      %4811 = vmatpush1.bf16.msra.mxu0 0
      %4812 = vmatprep.subr.bf16.mxu0 0
      %4813 = vmatpush1.bf16.msra.mxu0 0
      %4814 = vmatprep.subr.bf16.mxu0 0
      %4815 = vmatpush1.bf16.msra.mxu0 0
      %4816 = vmatprep.subr.bf16.mxu0 0
      %4817 = vmatpush1.bf16.msra.mxu0 0
      %4818 = vmatprep.subr.bf16.mxu0 0
      %4819 = vmatpush1.bf16.msra.mxu0 0
      %4820 = vmatprep.subr.bf16.mxu0 0
      %4821 = vmatpush1.bf16.msra.mxu0 0
      %4822 = vmatprep.subr.bf16.mxu0 0
      %4823 = vmatpush1.bf16.msra.mxu0 0
      %4824 = vmatprep.subr.bf16.mxu0 0
      %4825 = vmatpush1.bf16.msra.mxu0 0
      %4826 = vmatprep.mubr.bf16.mxu0 0
      %4827 = vmatmul.mubr.bf16.gmra.mrb[0].mxu0 %v4740
      %v4828 = vpop.f32.mrb[0].mxu0
      %v4829 = vadd.f32 %v4745, %v4828
      %v4830 = vpop.f32.mrb[0].mxu0
      %v4831 = vpop.f32.mrb[0].mxu0
      %v4832 = vadd.f32 %v4745, %v4831
      %v4833 = vpop.f32.mrb[0].mxu0
      %4834 = vdwg.mxu0
      %v4835 = vmax.f32 %v4829, 0.0
      %v4836 = vmax.f32 %v4832, 0.0
      %v4837 = vmin.f32 %v4835, 6.0
      %v4838 = vmin.f32 %v4836, 6.0
      %4839 = vst [vmem:[%s494] sm:$0xff] %v4837
      %4840 = vst [vmem:[%s494 + $0x8] sm:$0xff] %v4838
      %p4841 = scmp.lt.s32.totalorder %s26, 1
      %s4842 = scalar_select %p4841, %s26, 1
      %s4843 = smul.addr %s4842, 2
      %s4844 = smul.addr %s4843, 8
      %s4845 = scalar_lea.vmem %s15, %s4844
      // Predicated region
      $region81: #{attention_module_stage1.1} parent=79 // pred_check
        %p4846 = pneg %p364
      $region82: #{attention_module_stage1.1} parent=79 // pred_check_branch
        %4848 = sbr.rel (%p4846) target = $region84
      $region83: #{attention_module_stage1.1} parent=79 // pred_region
        _
      $region84: #{attention_module_stage1.1} parent=79 // pred_fallthru
        _
    $region80: #{attention_module_stage1.1} parent=5 // pred_fallthru
      _
    %p4849 = scmp.le.s32.totalorder 2, %s21
    // Predicated region
    $region85: #{attention_module_stage1.1} parent=5 // pred_check
      %p4850 = pneg %p4849
    $region86: #{attention_module_stage1.1} parent=5 // pred_check_branch
      %4852 = sbr.rel (%p4850) target = $region88
    $region87: #{attention_module_stage1.1} parent=5 // pred_region
      %s4853 = ssub.s32 %s21, 2
      // Predicated region
      $region89: #{attention_module_stage1.1} parent=87 // pred_check
        %p4854 = pneg %p370
      $region90: #{attention_module_stage1.1} parent=87 // pred_check_branch
        %4856 = sbr.rel (%p4854) target = $region92
      $region91: #{attention_module_stage1.1} parent=87 // pred_region
        %p4857 = scmp.lt.s32.totalorder %s27, 1
        %s4858 = scalar_select %p4857, %s27, 1
        %s4859 = smul.addr %s4858, 2
        %s4860 = smul.addr %s4859, 8
        %s4861 = scalar_lea.vmem %s15, %s4860
      $region92: #{attention_module_stage1.1} parent=87 // pred_fallthru
        _
    $region88: #{attention_module_stage1.1} parent=5 // pred_fallthru
      _
  $region6: #{attention_module_stage1.1} parent=0 // loop_footer
    %s25 = sadd.s32 1, %s21
  $region7: #{attention_module_stage1.1} parent=0 // loop_footer_branch
    %20 = sbr.rel target = $region3
  $region8: #{attention_module_stage1.1} parent=0 // loop_exit
    _

</llo_original>
